<compile_context>
chip_gen: v5e
topology: v5e:2x2
jax: 0.10.0
libtpu: 0.0.40
codegen_flags: <defaults>
</compile_context>

<pallas_src>
import jax
import jax.numpy as jnp
from jax import lax
from jax.experimental import pallas as pl
from jax.experimental.pallas import tpu as pltpu

# ---------------- sizes (small, consistent with the module) ----------------
N        = 2            # batch
IMG      = 32           # input image spatial size
C_IN_IMG = 3            # RGB
C_FEAT   = 16           # stand-in resnet.fc.in_features
FH = FW  = 4            # spatial size of resnet.layer4 output
HW       = FH * FW
IDFCN    = 4            # fcn  (number of basis filters)
ID_DIM   = 1024         # real module: 459558 (shrunk for the synthetic test)
COUT     = 512          # ConvBasis2d out_channels (as in the module)
NCLS     = 5            # fc_output out_features
KDIM     = C_FEAT * 9   # im2col depth for a 3x3 kernel

# K tile along ID_DIM (the lane-dense LAST axis of both id_fc operands).
# 128K keeps the real-size grid at ~4 steps (DMA-bound, not step-overhead
# bound) while the per-step double-buffered footprint stays well under the
# raised VMEM limit on v5e/v6e/v7x.
TK         = min(ID_DIM, 128 * 1024)
ID_DIM_PAD = pl.cdiv(ID_DIM, TK) * TK       # zero-pad so the grid divides exactly
PAD_K      = ID_DIM_PAD - ID_DIM
NK         = ID_DIM_PAD // TK


# ============================ fused Pallas kernel ============================
# Grid axis 0 tiles ID_DIM (reduction):
#   every step : idw_acc += x2_tile (N,TK) . W_idT_tile (IDFCN,TK)   (lane-dense)
#   last step  : idw = tanh(acc + b); per-sample bf16 fold of the basis weights;
#                conv matmul; ReLU; global avg pool; fc_output -> logits.
def _fused_kernel(x2_ref, wid_ref, bid_ref, patches_ref, wb_ref, fcw_ref,
                  fcb_ref, o_ref, idw_acc, pooled_sc):
    k = pl.program_id(0)

    @pl.when(k == 0)
    def _():
        idw_acc[...] = jnp.zeros_like(idw_acc)

    # id_fc partial sum: contract the last (lane-dense) axis of both tiles.
    x_tile = x2_ref[...].astype(jnp.bfloat16)                      # (N, TK)
    idw_acc[...] += lax.dot_general(
        x_tile, wid_ref[...],
        dimension_numbers=(((1,), (1,)), ((), ())),
        preferred_element_type=jnp.float32)                        # (N, IDFCN)

    @pl.when(k == pl.num_programs(0) - 1)
    def _():
        idw = jnp.tanh(idw_acc[...] + bid_ref[...])                # (N, IDFCN) f32
        idw_b = idw.astype(jnp.bfloat16)

        for n in range(N):                                         # static unroll (N=2)
            # Fold idw into the basis weights (bf16 VPU; (KDIM,COUT) bf16 temp
            # fits the vreg file).  Mathematically equal to the post-conv
            # combine in the PyTorch module (linearity).
            w_comb = wb_ref[0] * idw_b[n:n + 1, 0:1]
            for f in range(1, IDFCN):
                w_comb = w_comb + wb_ref[f] * idw_b[n:n + 1, f:f + 1]
            conv = jnp.dot(patches_ref[n], w_comb,
                           preferred_element_type=jnp.float32)     # (HW, COUT)
            act = jnp.maximum(conv, 0.0)                           # ReLU
            pooled_sc[pl.ds(n, 1), :] = jnp.mean(act, axis=0,
                                                 keepdims=True)    # AdaptiveAvgPool2d((1,1))

        # fc_output: (N, COUT) . (NCLS, COUT) contracted over the last axes.
        logits = lax.dot_general(
            pooled_sc[...].astype(jnp.bfloat16), fcw_ref[...],
            dimension_numbers=(((1,), (1,)), ((), ())),
            preferred_element_type=jnp.float32) + fcb_ref[...]
        o_ref[...] = logits


def fused_head(x2, w_id_t, b_id, patches, wb, fcw_t, fc_b):
    return pl.pallas_call(
        _fused_kernel,
        out_shape=jax.ShapeDtypeStruct((N, NCLS), jnp.float32),
        grid=(NK,),
        in_specs=[
            pl.BlockSpec((N, TK), lambda k: (0, k)),               # x2 (f32, cast in-kernel)
            pl.BlockSpec((IDFCN, TK), lambda k: (0, k)),           # W_id^T (bf16)
            pl.BlockSpec((1, IDFCN), lambda k: (0, 0)),            # id_fc bias
            pl.BlockSpec((N, HW, KDIM), lambda k: (0, 0, 0)),      # im2col patches (bf16)
            pl.BlockSpec((IDFCN, KDIM, COUT), lambda k: (0, 0, 0)),# basis weights (bf16)
            pl.BlockSpec((NCLS, COUT), lambda k: (0, 0)),          # fc_output W^T (bf16)
            pl.BlockSpec((1, NCLS), lambda k: (0, 0)),             # fc_output bias
        ],
        out_specs=pl.BlockSpec((N, NCLS), lambda k: (0, 0)),
        scratch_shapes=[pltpu.VMEM((N, IDFCN), jnp.float32),       # idw accumulator
                        pltpu.VMEM((N, COUT), jnp.float32)],       # pooled features
        compiler_params=pltpu.CompilerParams(
            dimension_semantics=("arbitrary",),                    # K reduction
            vmem_limit_bytes=32 * 1024 * 1024),
    )(x2, w_id_t, b_id, patches, wb, fcw_t, fc_b)


# ============================ JAX glue ======================================
def im2col_3x3(x):
    """x: (N, C, H, W) -> (N, H*W, C*9) with last axis ordered (c, kh, kw)."""
    n, c, h, w = x.shape
    xp = jnp.pad(x, ((0, 0), (0, 0), (1, 1), (1, 1)))
    cols = [xp[:, :, kh:kh + h, kw:kw + w] for kh in range(3) for kw in range(3)]
    patches = jnp.stack(cols, axis=2)                   # (N, C, 9, H, W)
    return patches.transpose(0, 3, 4, 1, 2).reshape(n, h * w, c * 9)


def conv2d(x, w, stride=1, padding=0):
    return lax.conv_general_dilated(
        x, w, window_strides=(stride, stride),
        padding=((padding, padding), (padding, padding)),
        dimension_numbers=("NCHW", "OIHW", "NCHW"))


def batchnorm(x, c, eps=1e-5):
    # eval-mode BN with identity running stats (deterministic stand-in)
    gamma = jnp.ones((c,), jnp.float32)
    var = jnp.ones((c,), jnp.float32)
    inv = gamma / jnp.sqrt(var + eps)
    return x * inv[None, :, None, None]


def maxpool_3x3_s2(x):
    return lax.reduce_window(
        x, -jnp.inf, lax.max,
        window_dimensions=(1, 1, 3, 3), window_strides=(1, 1, 2, 2),
        padding=((0, 0), (0, 0), (1, 1), (1, 1)))


def basic_block(x, p, stride):
    cout = p["w1"].shape[0]
    out = jax.nn.relu(batchnorm(conv2d(x, p["w1"], stride, 1), cout))
    out = batchnorm(conv2d(out, p["w2"], 1, 1), cout)
    if "wd" in p:
        identity = batchnorm(conv2d(x, p["wd"], stride, 0), cout)
    else:
        identity = x
    return jax.nn.relu(out + identity)


def resnet_backbone(x, p):
    x = jax.nn.relu(batchnorm(conv2d(x, p["conv1"], 2, 3), p["conv1"].shape[0]))
    x = maxpool_3x3_s2(x)
    x = basic_block(x, p["layer1"], 1)
    x = basic_block(x, p["layer2"], 2)
    x = basic_block(x, p["layer3"], 1)
    x = basic_block(x, p["layer4"], 1)
    return x                                            # (N, C_FEAT, FH, FW)


def prepare_kernel_params(head):
    """One-time (init-time) re-layout of the head parameters for the kernel:
    pre-transpose, pre-cast to bf16, pre-pad ID_DIM to a TK multiple."""
    w_id_t = jnp.transpose(head["w_id"])                           # (IDFCN, ID_DIM)
    if PAD_K:
        w_id_t = jnp.pad(w_id_t, ((0, 0), (0, PAD_K)))             # zero tail -> no-op in the sum
    # (IDFCN*COUT, C_FEAT, 3, 3) -> (IDFCN, KDIM, COUT); idfcn-major ordering
    # matches output.view(N, idfcn, out_channels, H, W) in the PyTorch module.
    wb = jnp.transpose(head["weight_basis"].reshape(IDFCN, COUT, KDIM), (0, 2, 1))
    return {
        "w_id_t": w_id_t.astype(jnp.bfloat16),
        "b_id": head["b_id"],
        "wb": wb.astype(jnp.bfloat16),
        "fcw_t": jnp.transpose(head["fc_w"]).astype(jnp.bfloat16), # (NCLS, COUT)
        "fc_b": head["fc_b"],
    }


def forward(feat, x2, kp):
    if PAD_K:
        x2 = jnp.pad(x2, ((0, 0), (0, PAD_K)))
    patches = im2col_3x3(feat).astype(jnp.bfloat16)                # (N, HW, KDIM), ~9 KB
    return fused_head(x2, kp["w_id_t"], kp["b_id"], patches, kp["wb"],
                      kp["fcw_t"], kp["fc_b"])


def reference_forward(feat, x2, p):
    # Full-precision f32 reference (independent path: real conv, no folding).
    hp = lax.Precision.HIGHEST
    idw = jnp.tanh(jnp.dot(x2, p["w_id"], precision=hp) + p["b_id"])
    conv = lax.conv_general_dilated(
        feat, p["weight_basis"], window_strides=(1, 1),
        padding=((1, 1), (1, 1)),
        dimension_numbers=("NCHW", "OIHW", "NCHW"),
        precision=hp)                                             # (N, IDFCN*COUT, FH, FW)
    conv = conv.reshape(N, IDFCN, COUT, FH, FW)
    comb = (conv * idw[:, :, None, None, None]).sum(axis=1)       # (N, COUT, FH, FW)
    comb = jnp.maximum(comb, 0.0)
    pooled = comb.mean(axis=(2, 3))                               # (N, COUT)
    return jnp.dot(pooled, p["fc_w"], precision=hp) + p["fc_b"]


# ============================ parameter init ================================
def init_params():
    keys = iter(jax.random.split(jax.random.PRNGKey(0), 64))

    def conv_w(cout, cin, k):
        return 0.05 * jax.random.normal(next(keys), (cout, cin, k, k), jnp.float32)

    def block(cin, cout, downsample):
        p = {"w1": conv_w(cout, cin, 3), "w2": conv_w(cout, cout, 3)}
        if downsample:
            p["wd"] = conv_w(cout, cin, 1)
        return p

    resnet = {
        "conv1": conv_w(8, C_IN_IMG, 7),
        "layer1": block(8, 8, False),
        "layer2": block(8, 16, True),
        "layer3": block(16, 16, False),
        "layer4": block(16, C_FEAT, False),
    }

    def uniform(k, shape, stdv):
        return jax.random.uniform(k, shape, jnp.float32, -stdv, stdv)

    s_id = 1.0 / (ID_DIM ** 0.5)
    s_cb = 1.0 / ((C_FEAT * 9) ** 0.5)
    s_fc = 1.0 / (COUT ** 0.5)
    head = {
        "w_id": uniform(next(keys), (ID_DIM, IDFCN), s_id),
        "b_id": uniform(next(keys), (1, IDFCN), s_id),
        "weight_basis": uniform(next(keys), (IDFCN * COUT, C_FEAT, 3, 3), s_cb),
        "fc_w": uniform(next(keys), (COUT, NCLS), s_fc),
        "fc_b": uniform(next(keys), (1, NCLS), s_fc),
    }
    return resnet, head


# ============================ main ==========================================
if __name__ == "__main__":
    resnet_params, head_params = init_params()
    kernel_params = prepare_kernel_params(head_params)   # once, outside forward

    keys = jax.random.split(jax.random.PRNGKey(0), 2)
    x1 = jax.random.normal(keys[0], (N, C_IN_IMG, IMG, IMG), jnp.float32)
    x2 = jax.random.normal(keys[1], (N, ID_DIM), jnp.float32)

    feat = resnet_backbone(x1, resnet_params)          # (N, C_FEAT, FH, FW)
    assert feat.shape == (N, C_FEAT, FH, FW)

    out = forward(feat, x2, kernel_params)
    out = jax.block_until_ready(out)
    assert out.shape == (N, NCLS)

    ref = reference_forward(feat, x2, head_params)
    # Kernel uses bf16 MXU/VPU inputs with f32 accumulation; reference is full f32.
    assert jnp.allclose(out, ref, rtol=2e-2, atol=1e-2), (out, ref)

    print("KERNEL_OK")
</pallas_src>

<mosaic_0001>
module attributes {stable_mosaic.version = 11 : i64} {
  func.func @_fused_kernel(%arg0: i32, %arg1: memref<2x1024xf32, #tpu.memory_space<vmem>>, %arg2: memref<4x1024xbf16, #tpu.memory_space<vmem>>, %arg3: memref<1x4xf32, #tpu.memory_space<vmem>>, %arg4: memref<2x16x144xbf16, #tpu.memory_space<vmem>>, %arg5: memref<4x144x512xbf16, #tpu.memory_space<vmem>>, %arg6: memref<5x512xbf16, #tpu.memory_space<vmem>>, %arg7: memref<1x5xf32, #tpu.memory_space<vmem>>, %arg8: memref<2x5xf32, #tpu.memory_space<vmem>>, %arg9: memref<2x4xf32, #tpu.memory_space<vmem>>, %arg10: memref<2x512xf32, #tpu.memory_space<vmem>>) attributes {dimension_semantics = [#tpu.dimension_semantics<arbitrary>], iteration_bounds = array<i64: 1>, scalar_prefetch = 0 : i64, scratch_operands = 2 : i64, tpu.core_type = #tpu.core_type<tc>, window_params = [{transform_indices = @transform_0, window_bounds = array<i64: 2, 1024>}, {transform_indices = @transform_1, window_bounds = array<i64: 4, 1024>}, {pipeline_mode = #tpu.pipeline_mode<synchronous>, transform_indices = @transform_2, window_bounds = array<i64: 1, 4>}, {pipeline_mode = #tpu.pipeline_mode<synchronous>, transform_indices = @transform_3, window_bounds = array<i64: 2, 16, 144>}, {pipeline_mode = #tpu.pipeline_mode<synchronous>, transform_indices = @transform_4, window_bounds = array<i64: 4, 144, 512>}, {pipeline_mode = #tpu.pipeline_mode<synchronous>, transform_indices = @transform_5, window_bounds = array<i64: 5, 512>}, {pipeline_mode = #tpu.pipeline_mode<synchronous>, transform_indices = @transform_6, window_bounds = array<i64: 1, 5>}, {pipeline_mode = #tpu.pipeline_mode<synchronous>, transform_indices = @transform_7, window_bounds = array<i64: 2, 5>}]} {
    %c0_i32 = arith.constant 0 : i32
    %0 = arith.cmpi eq, %arg0, %c0_i32 : i32
    %1 = arith.extui %0 : i1 to i32
    %c0_i32_0 = arith.constant 0 : i32
    %2 = arith.cmpi ne, %1, %c0_i32_0 : i32
    scf.if %2 {
      %cst_10 = arith.constant 0.000000e+00 : f32
      %13 = vector.broadcast %cst_10 : f32 to vector<2x4xf32>
      %c0_11 = arith.constant 0 : index
      %c0_12 = arith.constant 0 : index
      %14 = vector.load %arg9[%c0_11, %c0_12] : memref<2x4xf32, #tpu.memory_space<vmem>>, vector<2x4xf32>
      tpu.vector_store %arg9[%c0_11, %c0_12], %13 {strides = array<i32>} : memref<2x4xf32, #tpu.memory_space<vmem>>, vector<2x4xf32>,
    } else {
    }
    %c0 = arith.constant 0 : index
    %c0_1 = arith.constant 0 : index
    %3 = vector.load %arg1[%c0, %c0_1] : memref<2x1024xf32, #tpu.memory_space<vmem>>, vector<2x1024xf32>
    %4 = arith.truncf %3 : vector<2x1024xf32> to vector<2x1024xbf16>
    %c0_2 = arith.constant 0 : index
    %c0_3 = arith.constant 0 : index
    %5 = vector.load %arg9[%c0_2, %c0_3] : memref<2x4xf32, #tpu.memory_space<vmem>>, vector<2x4xf32>
    %c0_4 = arith.constant 0 : index
    %c0_5 = arith.constant 0 : index
    %6 = vector.load %arg2[%c0_4, %c0_5] : memref<4x1024xbf16, #tpu.memory_space<vmem>>, vector<4x1024xbf16>
    %cst = arith.constant dense<0.000000e+00> : vector<2x4xf32>
    %7 = tpu.matmul %4, %6, %cst {dimension_numbers = #tpu.dot_dimension_numbers<[1], [1], [0], [0], [0, 0, 1, 0], [], []>} : vector<2x1024xbf16>, vector<4x1024xbf16>, vector<2x4xf32> -> vector<2x4xf32>
    %8 = arith.addf %5, %7 : vector<2x4xf32>
    %c0_6 = arith.constant 0 : index
    %c0_7 = arith.constant 0 : index
    %9 = vector.load %arg9[%c0_6, %c0_7] : memref<2x4xf32, #tpu.memory_space<vmem>>, vector<2x4xf32>
    tpu.vector_store %arg9[%c0_6, %c0_7], %8 {strides = array<i32>} : memref<2x4xf32, #tpu.memory_space<vmem>>, vector<2x4xf32>,
    %c0_i32_8 = arith.constant 0 : i32
    %10 = arith.cmpi eq, %arg0, %c0_i32_8 : i32
    %11 = arith.extui %10 : i1 to i32
    %c0_i32_9 = arith.constant 0 : i32
    %12 = arith.cmpi ne, %11, %c0_i32_9 : i32
    scf.if %12 {
      %c0_10 = arith.constant 0 : index
      %c0_11 = arith.constant 0 : index
      %13 = vector.load %arg9[%c0_10, %c0_11] : memref<2x4xf32, #tpu.memory_space<vmem>>, vector<2x4xf32>
      %c0_12 = arith.constant 0 : index
      %c0_13 = arith.constant 0 : index
      %14 = vector.load %arg3[%c0_12, %c0_13] : memref<1x4xf32, #tpu.memory_space<vmem>>, vector<1x4xf32>
      %15 = vector.broadcast %14 : vector<1x4xf32> to vector<2x4xf32>
      %16 = arith.addf %13, %15 : vector<2x4xf32>
      %17 = math.tanh %16 : vector<2x4xf32>
      %18 = arith.truncf %17 : vector<2x4xf32> to vector<2x4xbf16>
      %c0_14 = arith.constant 0 : index
      %c0_15 = arith.constant 0 : index
      %c0_16 = arith.constant 0 : index
      %19 = vector.load %arg5[%c0_14, %c0_15, %c0_16] : memref<4x144x512xbf16, #tpu.memory_space<vmem>>, vector<1x144x512xbf16>
      %20 = vector.shape_cast %19 : vector<1x144x512xbf16> to vector<144x512xbf16>
      %21 = vector.extract_strided_slice %18 {offsets = [0, 0], sizes = [1, 1], strides = [1, 1]} : vector<2x4xbf16> to vector<1x1xbf16>
      %22 = vector.broadcast %21 : vector<1x1xbf16> to vector<144x512xbf16>
      %23 = arith.mulf %20, %22 : vector<144x512xbf16>
      %c1 = arith.constant 1 : index
      %c0_17 = arith.constant 0 : index
      %c0_18 = arith.constant 0 : index
      %24 = vector.load %arg5[%c1, %c0_17, %c0_18] : memref<4x144x512xbf16, #tpu.memory_space<vmem>>, vector<1x144x512xbf16>
      %25 = vector.shape_cast %24 : vector<1x144x512xbf16> to vector<144x512xbf16>
      %26 = vector.extract_strided_slice %18 {offsets = [0, 1], sizes = [1, 1], strides = [1, 1]} : vector<2x4xbf16> to vector<1x1xbf16>
      %27 = vector.broadcast %26 : vector<1x1xbf16> to vector<144x512xbf16>
      %28 = arith.mulf %25, %27 : vector<144x512xbf16>
      %29 = arith.addf %23, %28 : vector<144x512xbf16>
      %c2 = arith.constant 2 : index
      %c0_19 = arith.constant 0 : index
      %c0_20 = arith.constant 0 : index
      %30 = vector.load %arg5[%c2, %c0_19, %c0_20] : memref<4x144x512xbf16, #tpu.memory_space<vmem>>, vector<1x144x512xbf16>
      %31 = vector.shape_cast %30 : vector<1x144x512xbf16> to vector<144x512xbf16>
      %32 = vector.extract_strided_slice %18 {offsets = [0, 2], sizes = [1, 1], strides = [1, 1]} : vector<2x4xbf16> to vector<1x1xbf16>
      %33 = vector.broadcast %32 : vector<1x1xbf16> to vector<144x512xbf16>
      %34 = arith.mulf %31, %33 : vector<144x512xbf16>
      %35 = arith.addf %29, %34 : vector<144x512xbf16>
      %c3 = arith.constant 3 : index
      %c0_21 = arith.constant 0 : index
      %c0_22 = arith.constant 0 : index
      %36 = vector.load %arg5[%c3, %c0_21, %c0_22] : memref<4x144x512xbf16, #tpu.memory_space<vmem>>, vector<1x144x512xbf16>
      %37 = vector.shape_cast %36 : vector<1x144x512xbf16> to vector<144x512xbf16>
      %38 = vector.extract_strided_slice %18 {offsets = [0, 3], sizes = [1, 1], strides = [1, 1]} : vector<2x4xbf16> to vector<1x1xbf16>
      %39 = vector.broadcast %38 : vector<1x1xbf16> to vector<144x512xbf16>
      %40 = arith.mulf %37, %39 : vector<144x512xbf16>
      %41 = arith.addf %35, %40 : vector<144x512xbf16>
      %c0_23 = arith.constant 0 : index
      %c0_24 = arith.constant 0 : index
      %c0_25 = arith.constant 0 : index
      %42 = vector.load %arg4[%c0_23, %c0_24, %c0_25] : memref<2x16x144xbf16, #tpu.memory_space<vmem>>, vector<1x16x144xbf16>
      %43 = vector.shape_cast %42 : vector<1x16x144xbf16> to vector<16x144xbf16>
      %cst_26 = arith.constant dense<0.000000e+00> : vector<16x512xf32>
      %44 = tpu.matmul %43, %41, %cst_26 {dimension_numbers = #tpu.dot_dimension_numbers<[1], [0], [0], [1], [0, 0, 1, 1], [], []>} : vector<16x144xbf16>, vector<144x512xbf16>, vector<16x512xf32> -> vector<16x512xf32>
      %cst_27 = arith.constant 0.000000e+00 : f32
      %45 = vector.broadcast %cst_27 : f32 to vector<16x512xf32>
      %46 = arith.maximumf %44, %45 : vector<16x512xf32>
      %cst_28 = arith.constant dense<0.000000e+00> : vector<512xf32>
      %47 = vector.multi_reduction <add>, %46, %cst_28 [0] : vector<16x512xf32> to vector<512xf32>
      %48 = vector.shape_cast %47 : vector<512xf32> to vector<1x512xf32>
      %cst_29 = arith.constant 1.600000e+01 : f32
      %49 = vector.broadcast %cst_29 : f32 to vector<1x512xf32>
      %50 = arith.divf %48, %49 : vector<1x512xf32>
      %c0_30 = arith.constant 0 : index
      %c0_31 = arith.constant 0 : index
      %51 = vector.load %arg10[%c0_30, %c0_31] : memref<2x512xf32, #tpu.memory_space<vmem>>, vector<1x512xf32>
      tpu.vector_store %arg10[%c0_30, %c0_31], %50 {strides = array<i32>} : memref<2x512xf32, #tpu.memory_space<vmem>>, vector<1x512xf32>,
      %c0_32 = arith.constant 0 : index
      %c0_33 = arith.constant 0 : index
      %c0_34 = arith.constant 0 : index
      %52 = vector.load %arg5[%c0_32, %c0_33, %c0_34] : memref<4x144x512xbf16, #tpu.memory_space<vmem>>, vector<1x144x512xbf16>
      %53 = vector.shape_cast %52 : vector<1x144x512xbf16> to vector<144x512xbf16>
      %54 = vector.extract_strided_slice %18 {offsets = [1, 0], sizes = [1, 1], strides = [1, 1]} : vector<2x4xbf16> to vector<1x1xbf16>
      %55 = vector.broadcast %54 : vector<1x1xbf16> to vector<144x512xbf16>
      %56 = arith.mulf %53, %55 : vector<144x512xbf16>
      %c1_35 = arith.constant 1 : index
      %c0_36 = arith.constant 0 : index
      %c0_37 = arith.constant 0 : index
      %57 = vector.load %arg5[%c1_35, %c0_36, %c0_37] : memref<4x144x512xbf16, #tpu.memory_space<vmem>>, vector<1x144x512xbf16>
      %58 = vector.shape_cast %57 : vector<1x144x512xbf16> to vector<144x512xbf16>
      %59 = vector.extract_strided_slice %18 {offsets = [1, 1], sizes = [1, 1], strides = [1, 1]} : vector<2x4xbf16> to vector<1x1xbf16>
      %60 = vector.broadcast %59 : vector<1x1xbf16> to vector<144x512xbf16>
      %61 = arith.mulf %58, %60 : vector<144x512xbf16>
      %62 = arith.addf %56, %61 : vector<144x512xbf16>
      %c2_38 = arith.constant 2 : index
      %c0_39 = arith.constant 0 : index
      %c0_40 = arith.constant 0 : index
      %63 = vector.load %arg5[%c2_38, %c0_39, %c0_40] : memref<4x144x512xbf16, #tpu.memory_space<vmem>>, vector<1x144x512xbf16>
      %64 = vector.shape_cast %63 : vector<1x144x512xbf16> to vector<144x512xbf16>
      %65 = vector.extract_strided_slice %18 {offsets = [1, 2], sizes = [1, 1], strides = [1, 1]} : vector<2x4xbf16> to vector<1x1xbf16>
      %66 = vector.broadcast %65 : vector<1x1xbf16> to vector<144x512xbf16>
      %67 = arith.mulf %64, %66 : vector<144x512xbf16>
      %68 = arith.addf %62, %67 : vector<144x512xbf16>
      %c3_41 = arith.constant 3 : index
      %c0_42 = arith.constant 0 : index
      %c0_43 = arith.constant 0 : index
      %69 = vector.load %arg5[%c3_41, %c0_42, %c0_43] : memref<4x144x512xbf16, #tpu.memory_space<vmem>>, vector<1x144x512xbf16>
      %70 = vector.shape_cast %69 : vector<1x144x512xbf16> to vector<144x512xbf16>
      %71 = vector.extract_strided_slice %18 {offsets = [1, 3], sizes = [1, 1], strides = [1, 1]} : vector<2x4xbf16> to vector<1x1xbf16>
      %72 = vector.broadcast %71 : vector<1x1xbf16> to vector<144x512xbf16>
      %73 = arith.mulf %70, %72 : vector<144x512xbf16>
      %74 = arith.addf %68, %73 : vector<144x512xbf16>
      %c1_44 = arith.constant 1 : index
      %c0_45 = arith.constant 0 : index
      %c0_46 = arith.constant 0 : index
      %75 = vector.load %arg4[%c1_44, %c0_45, %c0_46] : memref<2x16x144xbf16, #tpu.memory_space<vmem>>, vector<1x16x144xbf16>
      %76 = vector.shape_cast %75 : vector<1x16x144xbf16> to vector<16x144xbf16>
      %cst_47 = arith.constant dense<0.000000e+00> : vector<16x512xf32>
      %77 = tpu.matmul %76, %74, %cst_47 {dimension_numbers = #tpu.dot_dimension_numbers<[1], [0], [0], [1], [0, 0, 1, 1], [], []>} : vector<16x144xbf16>, vector<144x512xbf16>, vector<16x512xf32> -> vector<16x512xf32>
      %cst_48 = arith.constant 0.000000e+00 : f32
      %78 = vector.broadcast %cst_48 : f32 to vector<16x512xf32>
      %79 = arith.maximumf %77, %78 : vector<16x512xf32>
      %cst_49 = arith.constant dense<0.000000e+00> : vector<512xf32>
      %80 = vector.multi_reduction <add>, %79, %cst_49 [0] : vector<16x512xf32> to vector<512xf32>
      %81 = vector.shape_cast %80 : vector<512xf32> to vector<1x512xf32>
      %cst_50 = arith.constant 1.600000e+01 : f32
      %82 = vector.broadcast %cst_50 : f32 to vector<1x512xf32>
      %83 = arith.divf %81, %82 : vector<1x512xf32>
      %c1_51 = arith.constant 1 : index
      %c0_52 = arith.constant 0 : index
      %84 = vector.load %arg10[%c1_51, %c0_52] : memref<2x512xf32, #tpu.memory_space<vmem>>, vector<1x512xf32>
      tpu.vector_store %arg10[%c1_51, %c0_52], %83 {strides = array<i32>} : memref<2x512xf32, #tpu.memory_space<vmem>>, vector<1x512xf32>,
      %c0_53 = arith.constant 0 : index
      %c0_54 = arith.constant 0 : index
      %85 = vector.load %arg10[%c0_53, %c0_54] : memref<2x512xf32, #tpu.memory_space<vmem>>, vector<2x512xf32>
      %86 = arith.truncf %85 : vector<2x512xf32> to vector<2x512xbf16>
      %c0_55 = arith.constant 0 : index
      %c0_56 = arith.constant 0 : index
      %87 = vector.load %arg6[%c0_55, %c0_56] : memref<5x512xbf16, #tpu.memory_space<vmem>>, vector<5x512xbf16>
      %cst_57 = arith.constant dense<0.000000e+00> : vector<2x5xf32>
      %88 = tpu.matmul %86, %87, %cst_57 {dimension_numbers = #tpu.dot_dimension_numbers<[1], [1], [0], [0], [0, 0, 1, 0], [], []>} : vector<2x512xbf16>, vector<5x512xbf16>, vector<2x5xf32> -> vector<2x5xf32>
      %c0_58 = arith.constant 0 : index
      %c0_59 = arith.constant 0 : index
      %89 = vector.load %arg7[%c0_58, %c0_59] : memref<1x5xf32, #tpu.memory_space<vmem>>, vector<1x5xf32>
      %90 = vector.broadcast %89 : vector<1x5xf32> to vector<2x5xf32>
      %91 = arith.addf %88, %90 : vector<2x5xf32>
      %c0_60 = arith.constant 0 : index
      %c0_61 = arith.constant 0 : index
      %92 = vector.load %arg8[%c0_60, %c0_61] : memref<2x5xf32, #tpu.memory_space<vmem>>, vector<2x5xf32>
      tpu.vector_store %arg8[%c0_60, %c0_61], %91 {strides = array<i32>} : memref<2x5xf32, #tpu.memory_space<vmem>>, vector<2x5xf32>,
    } else {
    }
    return
  }
  func.func @transform_0(%arg0: i32) -> (i32, i32) {
    %c0_i32 = arith.constant 0 : i32
    %c0_i32_0 = arith.constant 0 : i32
    return %c0_i32, %arg0 : i32, i32
  }
  func.func @transform_1(%arg0: i32) -> (i32, i32) {
    %c0_i32 = arith.constant 0 : i32
    %c0_i32_0 = arith.constant 0 : i32
    return %c0_i32, %arg0 : i32, i32
  }
  func.func @transform_2(%arg0: i32) -> (i32, i32) {
    %c0_i32 = arith.constant 0 : i32
    %c0_i32_0 = arith.constant 0 : i32
    %c0_i32_1 = arith.constant 0 : i32
    return %c0_i32, %c0_i32_0 : i32, i32
  }
  func.func @transform_3(%arg0: i32) -> (i32, i32, i32) {
    %c0_i32 = arith.constant 0 : i32
    %c0_i32_0 = arith.constant 0 : i32
    %c0_i32_1 = arith.constant 0 : i32
    %c0_i32_2 = arith.constant 0 : i32
    return %c0_i32, %c0_i32_0, %c0_i32_1 : i32, i32, i32
  }
  func.func @transform_4(%arg0: i32) -> (i32, i32, i32) {
    %c0_i32 = arith.constant 0 : i32
    %c0_i32_0 = arith.constant 0 : i32
    %c0_i32_1 = arith.constant 0 : i32
    %c0_i32_2 = arith.constant 0 : i32
    return %c0_i32, %c0_i32_0, %c0_i32_1 : i32, i32, i32
  }
  func.func @transform_5(%arg0: i32) -> (i32, i32) {
    %c0_i32 = arith.constant 0 : i32
    %c0_i32_0 = arith.constant 0 : i32
    %c0_i32_1 = arith.constant 0 : i32
    return %c0_i32, %c0_i32_0 : i32, i32
  }
  func.func @transform_6(%arg0: i32) -> (i32, i32) {
    %c0_i32 = arith.constant 0 : i32
    %c0_i32_0 = arith.constant 0 : i32
    %c0_i32_1 = arith.constant 0 : i32
    return %c0_i32, %c0_i32_0 : i32, i32
  }
  func.func @transform_7(%arg0: i32) -> (i32, i32) {
    %c0_i32 = arith.constant 0 : i32
    %c0_i32_0 = arith.constant 0 : i32
    %c0_i32_1 = arith.constant 0 : i32
    return %c0_i32, %c0_i32_0 : i32, i32
  }
}

</mosaic_0001>

<llo_original>
// kernel: tpu_custom_call.1
$region0: #{tpu_custom_call.1}
  #allocation0 [shape = 'u32[]', space=smem, size = 0x4, offset = 0x4, fixed_abs, tag = 'smem constant byte address 0x4 - core index']
  #allocation1 [shape = 'u32[72,128]{1,0:T(1,128)}', space=vmem, size = 0x9000, scoped, tag = 'internal scratch']
  #allocation2 [shape = 'f32[2,4]{1,0:T(2,128)}', space=vmem, size = 0x400, scoped, tag = 'scratch operand']
  #allocation3 [shape = 'f32[2,512]{1,0:T(2,128)}', space=vmem, size = 0x1000, scoped, tag = 'scratch operand']
  %s0 = inlined_call_operand.hbm [shape: f32[2,1024], index: 0, kind: input, shape index: {}]
  %s1 = inlined_call_operand.hbm [shape: bf16[4,1024], index: 1, kind: input, shape index: {}]
  %s2 = inlined_call_operand.vmem [shape: f32[1,4], index: 2, kind: input, shape index: {}]
  %s3 = inlined_call_operand.hbm [shape: bf16[2,16,144], index: 3, kind: input, shape index: {}]
  %s4 = inlined_call_operand.hbm [shape: bf16[4,144,512], index: 4, kind: input, shape index: {}]
  %s5 = inlined_call_operand.hbm [shape: bf16[5,512], index: 5, kind: input, shape index: {}]
  %s6 = inlined_call_operand.vmem [shape: f32[1,5], index: 6, kind: input, shape index: {}]
  %s7 = inlined_call_operand.hbm [shape: f32[2,5], index: 7, kind: output, shape index: {}]
  %s8 = sld [smem:[#allocation0]]
  $region66: #{tpu_custom_call.1} parent=0
    _
  %s10 = ssub.s32 1, %s8
  %s11 = scalar_select 0, %s10, %s8
  $region1: #{tpu_custom_call.1} parent=0
    #allocation4 [shape = 'u8[8192]{0}', space=vmem, size = 0x2000, scoped, tag = 'input window, operand 0, single buffered']
    #allocation5 [shape = 's32[1]{0}', space=sflag, size = 0x4, scoped, tag = 'scoped memory for tpu_custom_call.1']
    #allocation6 [shape = 's32[1]{0}', space=sflag, size = 0x4, scoped, tag = 'scoped memory for tpu_custom_call.1']
    #allocation7 [shape = 'u8[8192]{0}', space=vmem, size = 0x2000, scoped, tag = 'input window, operand 1, single buffered']
    #allocation8 [shape = 's32[1]{0}', space=sflag, size = 0x4, scoped, tag = 'scoped memory for tpu_custom_call.1']
    #allocation9 [shape = 'u8[16384]{0}', space=vmem, size = 0x4000, scoped, tag = 'input window, operand 3, single buffered']
    #allocation10 [shape = 'u8[589824]{0}', space=vmem, size = 0x90000, scoped, tag = 'input window, operand 4, single buffered']
    #allocation11 [shape = 's32[1]{0}', space=sflag, size = 0x4, scoped, tag = 'scoped memory for tpu_custom_call.1']
    #allocation12 [shape = 'u8[8192]{0}', space=vmem, size = 0x2000, scoped, tag = 'input window, operand 5, single buffered']
    #allocation13 [shape = 'u8[1024]{0}', space=vmem, size = 0x400, scoped, tag = 'output window, operand 0, single buffered']
    %12 = vsyncpa [#allocation5], 0
    %13 = vsyncpa [#allocation8], 0
    %14 = vsyncpa [#allocation11], 0
    %15 = vsyncpa [#allocation6], 0
    // Predicated region
    $region2: #{tpu_custom_call.1} parent=1 // pred_check
      _
    $region3: #{tpu_custom_call.1} parent=1 // pred_check_branch
      %17 = sbr.rel (0) target = $region5
    $region4: #{tpu_custom_call.1} parent=1 // pred_region
      %19 = vsyncadd [#allocation5], 0
      %s21 = sshll.u32 %s0, 4
      %s22 = int_to_ptr.hbm [resolvable:$true] %s21
      %s23 = sshll.u32 [#allocation4], 4
      %s24 = int_to_ptr.vmem [resolvable:$true] %s23
      %26 = dma.hbm_to_vmem [thread:$0]  %s22, 256, %s24, [#allocation5]
    $region5: #{tpu_custom_call.1} parent=1 // pred_fallthru
      _
    // Predicated region
    $region6: #{tpu_custom_call.1} parent=1 // pred_check
      _
    $region7: #{tpu_custom_call.1} parent=1 // pred_check_branch
      %28 = sbr.rel (0) target = $region9
    $region8: #{tpu_custom_call.1} parent=1 // pred_region
      %30 = vsyncadd [#allocation8], 0
      %s32 = sshll.u32 %s1, 4
      %s33 = int_to_ptr.hbm [resolvable:$true] %s32
      %s34 = sshll.u32 [#allocation7], 4
      %s35 = int_to_ptr.vmem [resolvable:$true] %s34
      %37 = dma.hbm_to_vmem [thread:$0]  %s33, 256, %s35, [#allocation8]
    $region9: #{tpu_custom_call.1} parent=1 // pred_fallthru
      _
    // Predicated region
    $region10: #{tpu_custom_call.1} parent=1 // pred_check
      _
    $region11: #{tpu_custom_call.1} parent=1 // pred_check_branch
      %39 = sbr.rel (0) target = $region13
    $region12: #{tpu_custom_call.1} parent=1 // pred_region
      _
    $region13: #{tpu_custom_call.1} parent=1 // pred_fallthru
      _
    // Predicated region
    $region14: #{tpu_custom_call.1} parent=1 // pred_check
      _
    $region15: #{tpu_custom_call.1} parent=1 // pred_check_branch
      %41 = sbr.rel (0) target = $region17
    $region16: #{tpu_custom_call.1} parent=1 // pred_region
      %43 = vsyncadd [#allocation8], 0
      %s44 = sshll.u32 %s3, 4
      %s45 = int_to_ptr.hbm [resolvable:$true] %s44
      %s46 = sshll.u32 [#allocation9], 4
      %s47 = int_to_ptr.vmem [resolvable:$true] %s46
      %52 = dma.hbm_to_vmem [thread:$0]  %s45, 512, %s47, [#allocation8], 128, 128, 8
    $region17: #{tpu_custom_call.1} parent=1 // pred_fallthru
      _
    // Predicated region
    $region18: #{tpu_custom_call.1} parent=1 // pred_check
      _
    $region19: #{tpu_custom_call.1} parent=1 // pred_check_branch
      %54 = sbr.rel (0) target = $region21
    $region20: #{tpu_custom_call.1} parent=1 // pred_region
      %56 = vsyncadd [#allocation11], 0
      %s57 = sshll.u32 %s4, 4
      %s58 = int_to_ptr.hbm [resolvable:$true] %s57
      %s59 = sshll.u32 [#allocation10], 4
      %s60 = int_to_ptr.vmem [resolvable:$true] %s59
      %65 = dma.hbm_to_vmem [thread:$0]  %s58, 18432, %s60, [#allocation11], 256, 256, 16
    $region21: #{tpu_custom_call.1} parent=1 // pred_fallthru
      _
    // Predicated region
    $region22: #{tpu_custom_call.1} parent=1 // pred_check
      _
    $region23: #{tpu_custom_call.1} parent=1 // pred_check_branch
      %67 = sbr.rel (0) target = $region25
    $region24: #{tpu_custom_call.1} parent=1 // pred_region
      %69 = vsyncadd [#allocation11], 0
      %s71 = sshll.u32 %s5, 4
      %s72 = int_to_ptr.hbm [resolvable:$true] %s71
      %s73 = sshll.u32 [#allocation12], 4
      %s74 = int_to_ptr.vmem [resolvable:$true] %s73
      %76 = dma.hbm_to_vmem [thread:$0]  %s72, 256, %s74, [#allocation11]
    $region25: #{tpu_custom_call.1} parent=1 // pred_fallthru
      _
    // Predicated region
    $region26: #{tpu_custom_call.1} parent=1 // pred_check
      _
    $region27: #{tpu_custom_call.1} parent=1 // pred_check_branch
      %78 = sbr.rel (0) target = $region29
    $region28: #{tpu_custom_call.1} parent=1 // pred_region
      _
    $region29: #{tpu_custom_call.1} parent=1 // pred_fallthru
      _
    // Predicated region
    $region30: #{tpu_custom_call.1} parent=1 // pred_check
      _
    $region31: #{tpu_custom_call.1} parent=1 // pred_check_branch
      %80 = sbr.rel (0) target = $region33
    $region32: #{tpu_custom_call.1} parent=1 // pred_region
      %82 = dma.done [#allocation5], 256
    $region33: #{tpu_custom_call.1} parent=1 // pred_fallthru
      _
    // Predicated region
    $region34: #{tpu_custom_call.1} parent=1 // pred_check
      _
    $region35: #{tpu_custom_call.1} parent=1 // pred_check_branch
      %84 = sbr.rel (0) target = $region37
    $region36: #{tpu_custom_call.1} parent=1 // pred_region
      %86 = dma.done [#allocation8], 256
    $region37: #{tpu_custom_call.1} parent=1 // pred_fallthru
      _
    // Predicated region
    $region38: #{tpu_custom_call.1} parent=1 // pred_check
      _
    $region39: #{tpu_custom_call.1} parent=1 // pred_check_branch
      %88 = sbr.rel (0) target = $region41
    $region40: #{tpu_custom_call.1} parent=1 // pred_region
      %90 = dma.done [#allocation8], 512
    $region41: #{tpu_custom_call.1} parent=1 // pred_fallthru
      _
    // Predicated region
    $region42: #{tpu_custom_call.1} parent=1 // pred_check
      _
    $region43: #{tpu_custom_call.1} parent=1 // pred_check_branch
      %92 = sbr.rel (0) target = $region45
    $region44: #{tpu_custom_call.1} parent=1 // pred_region
      %94 = dma.done [#allocation11], 18432
    $region45: #{tpu_custom_call.1} parent=1 // pred_fallthru
      _
    // Predicated region
    $region46: #{tpu_custom_call.1} parent=1 // pred_check
      _
    $region47: #{tpu_custom_call.1} parent=1 // pred_check_branch
      %96 = sbr.rel (0) target = $region49
    $region48: #{tpu_custom_call.1} parent=1 // pred_region
      %98 = dma.done [#allocation11], 256
    $region49: #{tpu_custom_call.1} parent=1 // pred_fallthru
      _
    %p100 = scmp.eq.s32.totalorder 0, 0
    // Predicated region
    $region50: #{tpu_custom_call.1} parent=1 // pred_check
      %p101 = pneg %p100
    $region51: #{tpu_custom_call.1} parent=1 // pred_check_branch
      %103 = sbr.rel (%p101) target = $region53
    $region52: #{tpu_custom_call.1} parent=1 // pred_region
      %vm104 = vcmask 25600
      %105 = vst.msk [vmem:[#allocation2] sm:$0x3] %vm104, 0.0
    $region53: #{tpu_custom_call.1} parent=1 // pred_fallthru
      _
    %v106 = vld [vmem:[#allocation4] sm:$0xff]
    %v107 = vld [vmem:[#allocation4 + $0x8] sm:$0xff]
    %110 = vst [vmem:[#allocation1] ss:$4 sm:$0xff] %v106
    %s111 = scalar_lea.vmem [#allocation1], 32
    %112 = vst [vmem:[%s111] ss:$4 sm:$0xff] %v107
    %v113 = vld.sshfl [vmem:[#allocation1] sm:$0xff pattern:$0x73625140]
    %v114 = vld.sshfl [vmem:[#allocation1 + $0x8] sm:$0xff pattern:$0x73625140]
    %v115 = vld.sshfl [vmem:[#allocation1 + $0x10] sm:$0xff pattern:$0x73625140]
    %v116 = vld.sshfl [vmem:[#allocation1 + $0x18] sm:$0xff pattern:$0x73625140]
    %v117 = vld.sshfl [vmem:[#allocation1 + $0x20] sm:$0xff pattern:$0x73625140]
    %v118 = vld.sshfl [vmem:[#allocation1 + $0x28] sm:$0xff pattern:$0x73625140]
    %v119 = vld.sshfl [vmem:[#allocation1 + $0x30] sm:$0xff pattern:$0x73625140]
    %v120 = vld.sshfl [vmem:[#allocation1 + $0x38] sm:$0xff pattern:$0x73625140]
    %v129 = vpack.c.bf16 %v113, %v113
    %v130 = vpack.c.bf16 %v114, %v114
    %v131 = vpack.c.bf16 %v115, %v115
    %v132 = vpack.c.bf16 %v116, %v116
    %v133 = vpack.c.bf16 %v117, %v117
    %v134 = vpack.c.bf16 %v118, %v118
    %v135 = vpack.c.bf16 %v119, %v119
    %v136 = vpack.c.bf16 %v120, %v120
    %v137 = vld [vmem:[#allocation2] sm:$0x3]
    %v138 = vld [vmem:[#allocation7] sm:$0xff]
    %v139 = vld [vmem:[#allocation7 + $0x8] sm:$0xff]
    %141 = vst [vmem:[#allocation1] ss:$4 sm:$0xff] %v138
    %s143 = scalar_lea.vmem [#allocation1], 32
    %144 = vst [vmem:[%s143] ss:$4 sm:$0xff] %v139
    %v145 = vld.sshfl [vmem:[#allocation1] sm:$0xff pattern:$0x73625140]
    %v146 = vld.sshfl [vmem:[#allocation1 + $0x8] sm:$0xff pattern:$0x73625140]
    %v147 = vld.sshfl [vmem:[#allocation1 + $0x10] sm:$0xff pattern:$0x73625140]
    %v148 = vld.sshfl [vmem:[#allocation1 + $0x18] sm:$0xff pattern:$0x73625140]
    %v149 = vld.sshfl [vmem:[#allocation1 + $0x20] sm:$0xff pattern:$0x73625140]
    %v150 = vld.sshfl [vmem:[#allocation1 + $0x28] sm:$0xff pattern:$0x73625140]
    %v151 = vld.sshfl [vmem:[#allocation1 + $0x30] sm:$0xff pattern:$0x73625140]
    %v152 = vld.sshfl [vmem:[#allocation1 + $0x38] sm:$0xff pattern:$0x73625140]
    %161 = vmatpush.bf16.xpose.msra.mxu0 0
    %162 = vmatpush.bf16.xpose.msra.mxu0 0
    %163 = vmatpush.bf16.xpose.msra.mxu0 0
    %164 = vmatpush.bf16.xpose.msra.mxu0 0
    %165 = vmatpush.bf16.xpose.msra.mxu0 0
    %166 = vmatpush.bf16.xpose.msra.mxu0 0
    %167 = vmatpush.bf16.xpose.msra.mxu0 0
    %168 = vmatpush.bf16.xpose.msra.mxu0 %v145
    %169 = vmatmul.bf16.gmra.mxu0 %v129
    %v170 = vpop.f32.mrf.mxu0
    %v171 = vadd.f32 0.0, %v170
    %v172 = vpop.f32.mrf.mxu0
    %173 = vdwg.mxu0
    %174 = vmatpush.bf16.xpose.msra.mxu0 0
    %175 = vmatpush.bf16.xpose.msra.mxu0 0
    %176 = vmatpush.bf16.xpose.msra.mxu0 0
    %177 = vmatpush.bf16.xpose.msra.mxu0 0
    %178 = vmatpush.bf16.xpose.msra.mxu0 0
    %179 = vmatpush.bf16.xpose.msra.mxu0 0
    %180 = vmatpush.bf16.xpose.msra.mxu0 0
    %181 = vmatpush.bf16.xpose.msra.mxu0 %v146
    %182 = vmatmul.bf16.gmra.mxu0 %v130
    %v183 = vpop.f32.mrf.mxu0
    %v184 = vadd.f32 %v171, %v183
    %v185 = vpop.f32.mrf.mxu0
    %186 = vdwg.mxu0
    %187 = vmatpush.bf16.xpose.msra.mxu0 0
    %188 = vmatpush.bf16.xpose.msra.mxu0 0
    %189 = vmatpush.bf16.xpose.msra.mxu0 0
    %190 = vmatpush.bf16.xpose.msra.mxu0 0
    %191 = vmatpush.bf16.xpose.msra.mxu0 0
    %192 = vmatpush.bf16.xpose.msra.mxu0 0
    %193 = vmatpush.bf16.xpose.msra.mxu0 0
    %194 = vmatpush.bf16.xpose.msra.mxu0 %v147
    %195 = vmatmul.bf16.gmra.mxu0 %v131
    %v196 = vpop.f32.mrf.mxu0
    %v197 = vadd.f32 %v184, %v196
    %v198 = vpop.f32.mrf.mxu0
    %199 = vdwg.mxu0
    %200 = vmatpush.bf16.xpose.msra.mxu0 0
    %201 = vmatpush.bf16.xpose.msra.mxu0 0
    %202 = vmatpush.bf16.xpose.msra.mxu0 0
    %203 = vmatpush.bf16.xpose.msra.mxu0 0
    %204 = vmatpush.bf16.xpose.msra.mxu0 0
    %205 = vmatpush.bf16.xpose.msra.mxu0 0
    %206 = vmatpush.bf16.xpose.msra.mxu0 0
    %207 = vmatpush.bf16.xpose.msra.mxu0 %v148
    %208 = vmatmul.bf16.gmra.mxu0 %v132
    %v209 = vpop.f32.mrf.mxu0
    %v210 = vadd.f32 %v197, %v209
    %v211 = vpop.f32.mrf.mxu0
    %212 = vdwg.mxu0
    %213 = vmatpush.bf16.xpose.msra.mxu0 0
    %214 = vmatpush.bf16.xpose.msra.mxu0 0
    %215 = vmatpush.bf16.xpose.msra.mxu0 0
    %216 = vmatpush.bf16.xpose.msra.mxu0 0
    %217 = vmatpush.bf16.xpose.msra.mxu0 0
    %218 = vmatpush.bf16.xpose.msra.mxu0 0
    %219 = vmatpush.bf16.xpose.msra.mxu0 0
    %220 = vmatpush.bf16.xpose.msra.mxu0 %v149
    %221 = vmatmul.bf16.gmra.mxu0 %v133
    %v222 = vpop.f32.mrf.mxu0
    %v223 = vadd.f32 %v210, %v222
    %v224 = vpop.f32.mrf.mxu0
    %225 = vdwg.mxu0
    %226 = vmatpush.bf16.xpose.msra.mxu0 0
    %227 = vmatpush.bf16.xpose.msra.mxu0 0
    %228 = vmatpush.bf16.xpose.msra.mxu0 0
    %229 = vmatpush.bf16.xpose.msra.mxu0 0
    %230 = vmatpush.bf16.xpose.msra.mxu0 0
    %231 = vmatpush.bf16.xpose.msra.mxu0 0
    %232 = vmatpush.bf16.xpose.msra.mxu0 0
    %233 = vmatpush.bf16.xpose.msra.mxu0 %v150
    %234 = vmatmul.bf16.gmra.mxu0 %v134
    %v235 = vpop.f32.mrf.mxu0
    %v236 = vadd.f32 %v223, %v235
    %v237 = vpop.f32.mrf.mxu0
    %238 = vdwg.mxu0
    %239 = vmatpush.bf16.xpose.msra.mxu0 0
    %240 = vmatpush.bf16.xpose.msra.mxu0 0
    %241 = vmatpush.bf16.xpose.msra.mxu0 0
    %242 = vmatpush.bf16.xpose.msra.mxu0 0
    %243 = vmatpush.bf16.xpose.msra.mxu0 0
    %244 = vmatpush.bf16.xpose.msra.mxu0 0
    %245 = vmatpush.bf16.xpose.msra.mxu0 0
    %246 = vmatpush.bf16.xpose.msra.mxu0 %v151
    %247 = vmatmul.bf16.gmra.mxu0 %v135
    %v248 = vpop.f32.mrf.mxu0
    %v249 = vadd.f32 %v236, %v248
    %v250 = vpop.f32.mrf.mxu0
    %251 = vdwg.mxu0
    %252 = vmatpush.bf16.xpose.msra.mxu0 0
    %253 = vmatpush.bf16.xpose.msra.mxu0 0
    %254 = vmatpush.bf16.xpose.msra.mxu0 0
    %255 = vmatpush.bf16.xpose.msra.mxu0 0
    %256 = vmatpush.bf16.xpose.msra.mxu0 0
    %257 = vmatpush.bf16.xpose.msra.mxu0 0
    %258 = vmatpush.bf16.xpose.msra.mxu0 0
    %259 = vmatpush.bf16.xpose.msra.mxu0 %v152
    %260 = vmatmul.bf16.gmra.mxu0 %v136
    %v261 = vpop.f32.mrf.mxu0
    %v262 = vadd.f32 %v249, %v261
    %v263 = vpop.f32.mrf.mxu0
    %264 = vdwg.mxu0
    %v265 = vadd.f32 %v137, %v262
    %vm266 = vcmask 25600
    %267 = vst.msk [vmem:[#allocation2] sm:$0x3] %vm266, %v265
    // Predicated region
    $region54: #{tpu_custom_call.1} parent=1 // pred_check
      %p268 = pneg %p100
    $region55: #{tpu_custom_call.1} parent=1 // pred_check_branch
      %270 = sbr.rel (%p268) target = $region57
    $region56: #{tpu_custom_call.1} parent=1 // pred_region
      %v271 = vld [vmem:[#allocation2] sm:$0x3]
      %v272 = vld [vmem:[%s2] sm:$0x1]
      %v274 = vperm.slane %v272, 0
      %v276 = vadd.f32 %v271, %v274
      %v277 = vtanh.pop %v276
      %v278 = vpack.c.bf16 %v277, %v277
      %v279 = vld [vmem:[#allocation10] sm:$0xff]
      %v280 = vld [vmem:[#allocation10 + $0x8] sm:$0xff]
      %v281 = vld [vmem:[#allocation10 + $0x10] sm:$0xff]
      %v282 = vld [vmem:[#allocation10 + $0x18] sm:$0xff]
      %v283 = vld [vmem:[#allocation10 + $0x20] sm:$0xff]
      %v284 = vld [vmem:[#allocation10 + $0x28] sm:$0xff]
      %v285 = vld [vmem:[#allocation10 + $0x30] sm:$0xff]
      %v286 = vld [vmem:[#allocation10 + $0x38] sm:$0xff]
      %v287 = vld [vmem:[#allocation10 + $0x40] sm:$0xff]
      %v288 = vld [vmem:[#allocation10 + $0x48] sm:$0xff]
      %v289 = vld [vmem:[#allocation10 + $0x50] sm:$0xff]
      %v290 = vld [vmem:[#allocation10 + $0x58] sm:$0xff]
      %v291 = vld [vmem:[#allocation10 + $0x60] sm:$0xff]
      %v292 = vld [vmem:[#allocation10 + $0x68] sm:$0xff]
      %v293 = vld [vmem:[#allocation10 + $0x70] sm:$0xff]
      %v294 = vld [vmem:[#allocation10 + $0x78] sm:$0xff]
      %v295 = vld [vmem:[#allocation10 + $0x80] sm:$0xff]
      %v296 = vld [vmem:[#allocation10 + $0x88] sm:$0xff]
      %v297 = vld [vmem:[#allocation10 + $0x90] sm:$0xff]
      %v298 = vld [vmem:[#allocation10 + $0x98] sm:$0xff]
      %v299 = vld [vmem:[#allocation10 + $0xa0] sm:$0xff]
      %v300 = vld [vmem:[#allocation10 + $0xa8] sm:$0xff]
      %v301 = vld [vmem:[#allocation10 + $0xb0] sm:$0xff]
      %v302 = vld [vmem:[#allocation10 + $0xb8] sm:$0xff]
      %v303 = vld [vmem:[#allocation10 + $0xc0] sm:$0xff]
      %v304 = vld [vmem:[#allocation10 + $0xc8] sm:$0xff]
      %v305 = vld [vmem:[#allocation10 + $0xd0] sm:$0xff]
      %v306 = vld [vmem:[#allocation10 + $0xd8] sm:$0xff]
      %v307 = vld [vmem:[#allocation10 + $0xe0] sm:$0xff]
      %v308 = vld [vmem:[#allocation10 + $0xe8] sm:$0xff]
      %v309 = vld [vmem:[#allocation10 + $0xf0] sm:$0xff]
      %v310 = vld [vmem:[#allocation10 + $0xf8] sm:$0xff]
      %v311 = vld [vmem:[#allocation10 + $0x100] sm:$0xff]
      %v312 = vld [vmem:[#allocation10 + $0x108] sm:$0xff]
      %v313 = vld [vmem:[#allocation10 + $0x110] sm:$0xff]
      %v314 = vld [vmem:[#allocation10 + $0x118] sm:$0xff]
      %s316 = vtos %v278
      %v317 = vstv %s316
      %v318 = vpack.i.b16 %v317, %v317
      %v320 = vunpack.c.l.bf16 %v279
      %v321 = vunpack.c.h.bf16 %v279
      %v322 = vunpack.c.l.bf16 %v280
      %v323 = vunpack.c.h.bf16 %v280
      %v324 = vunpack.c.l.bf16 %v281
      %v325 = vunpack.c.h.bf16 %v281
      %v326 = vunpack.c.l.bf16 %v282
      %v327 = vunpack.c.h.bf16 %v282
      %v328 = vunpack.c.l.bf16 %v283
      %v329 = vunpack.c.h.bf16 %v283
      %v330 = vunpack.c.l.bf16 %v284
      %v331 = vunpack.c.h.bf16 %v284
      %v332 = vunpack.c.l.bf16 %v285
      %v333 = vunpack.c.h.bf16 %v285
      %v334 = vunpack.c.l.bf16 %v286
      %v335 = vunpack.c.h.bf16 %v286
      %v336 = vunpack.c.l.bf16 %v287
      %v337 = vunpack.c.h.bf16 %v287
      %v338 = vunpack.c.l.bf16 %v288
      %v339 = vunpack.c.h.bf16 %v288
      %v340 = vunpack.c.l.bf16 %v289
      %v341 = vunpack.c.h.bf16 %v289
      %v342 = vunpack.c.l.bf16 %v290
      %v343 = vunpack.c.h.bf16 %v290
      %v344 = vunpack.c.l.bf16 %v291
      %v345 = vunpack.c.h.bf16 %v291
      %v346 = vunpack.c.l.bf16 %v292
      %v347 = vunpack.c.h.bf16 %v292
      %v348 = vunpack.c.l.bf16 %v293
      %v349 = vunpack.c.h.bf16 %v293
      %v350 = vunpack.c.l.bf16 %v294
      %v351 = vunpack.c.h.bf16 %v294
      %v352 = vunpack.c.l.bf16 %v295
      %v353 = vunpack.c.h.bf16 %v295
      %v354 = vunpack.c.l.bf16 %v296
      %v355 = vunpack.c.h.bf16 %v296
      %v356 = vunpack.c.l.bf16 %v297
      %v357 = vunpack.c.h.bf16 %v297
      %v358 = vunpack.c.l.bf16 %v298
      %v359 = vunpack.c.h.bf16 %v298
      %v360 = vunpack.c.l.bf16 %v299
      %v361 = vunpack.c.h.bf16 %v299
      %v362 = vunpack.c.l.bf16 %v300
      %v363 = vunpack.c.h.bf16 %v300
      %v364 = vunpack.c.l.bf16 %v301
      %v365 = vunpack.c.h.bf16 %v301
      %v366 = vunpack.c.l.bf16 %v302
      %v367 = vunpack.c.h.bf16 %v302
      %v368 = vunpack.c.l.bf16 %v303
      %v369 = vunpack.c.h.bf16 %v303
      %v370 = vunpack.c.l.bf16 %v304
      %v371 = vunpack.c.h.bf16 %v304
      %v372 = vunpack.c.l.bf16 %v305
      %v373 = vunpack.c.h.bf16 %v305
      %v374 = vunpack.c.l.bf16 %v306
      %v375 = vunpack.c.h.bf16 %v306
      %v376 = vunpack.c.l.bf16 %v307
      %v377 = vunpack.c.h.bf16 %v307
      %v378 = vunpack.c.l.bf16 %v308
      %v379 = vunpack.c.h.bf16 %v308
      %v380 = vunpack.c.l.bf16 %v309
      %v381 = vunpack.c.h.bf16 %v309
      %v382 = vunpack.c.l.bf16 %v310
      %v383 = vunpack.c.h.bf16 %v310
      %v384 = vunpack.c.l.bf16 %v311
      %v385 = vunpack.c.h.bf16 %v311
      %v386 = vunpack.c.l.bf16 %v312
      %v387 = vunpack.c.h.bf16 %v312
      %v388 = vunpack.c.l.bf16 %v313
      %v389 = vunpack.c.h.bf16 %v313
      %v390 = vunpack.c.l.bf16 %v314
      %v391 = vunpack.c.h.bf16 %v314
      %v392 = vunpack.c.l.bf16 %v318
      %v393 = vmul.f32 %v320, %v392
      %v394 = vmul.f32 %v321, %v392
      %v395 = vmul.f32 %v322, %v392
      %v396 = vmul.f32 %v323, %v392
      %v397 = vmul.f32 %v324, %v392
      %v398 = vmul.f32 %v325, %v392
      %v399 = vmul.f32 %v326, %v392
      %v400 = vmul.f32 %v327, %v392
      %v401 = vmul.f32 %v328, %v392
      %v402 = vmul.f32 %v329, %v392
      %v403 = vmul.f32 %v330, %v392
      %v404 = vmul.f32 %v331, %v392
      %v405 = vmul.f32 %v332, %v392
      %v406 = vmul.f32 %v333, %v392
      %v407 = vmul.f32 %v334, %v392
      %v408 = vmul.f32 %v335, %v392
      %v409 = vmul.f32 %v336, %v392
      %v410 = vmul.f32 %v337, %v392
      %v411 = vmul.f32 %v338, %v392
      %v412 = vmul.f32 %v339, %v392
      %v413 = vmul.f32 %v340, %v392
      %v414 = vmul.f32 %v341, %v392
      %v415 = vmul.f32 %v342, %v392
      %v416 = vmul.f32 %v343, %v392
      %v417 = vmul.f32 %v344, %v392
      %v418 = vmul.f32 %v345, %v392
      %v419 = vmul.f32 %v346, %v392
      %v420 = vmul.f32 %v347, %v392
      %v421 = vmul.f32 %v348, %v392
      %v422 = vmul.f32 %v349, %v392
      %v423 = vmul.f32 %v350, %v392
      %v424 = vmul.f32 %v351, %v392
      %v425 = vmul.f32 %v352, %v392
      %v426 = vmul.f32 %v353, %v392
      %v427 = vmul.f32 %v354, %v392
      %v428 = vmul.f32 %v355, %v392
      %v429 = vmul.f32 %v356, %v392
      %v430 = vmul.f32 %v357, %v392
      %v431 = vmul.f32 %v358, %v392
      %v432 = vmul.f32 %v359, %v392
      %v433 = vmul.f32 %v360, %v392
      %v434 = vmul.f32 %v361, %v392
      %v435 = vmul.f32 %v362, %v392
      %v436 = vmul.f32 %v363, %v392
      %v437 = vmul.f32 %v364, %v392
      %v438 = vmul.f32 %v365, %v392
      %v439 = vmul.f32 %v366, %v392
      %v440 = vmul.f32 %v367, %v392
      %v441 = vmul.f32 %v368, %v392
      %v442 = vmul.f32 %v369, %v392
      %v443 = vmul.f32 %v370, %v392
      %v444 = vmul.f32 %v371, %v392
      %v445 = vmul.f32 %v372, %v392
      %v446 = vmul.f32 %v373, %v392
      %v447 = vmul.f32 %v374, %v392
      %v448 = vmul.f32 %v375, %v392
      %v449 = vmul.f32 %v376, %v392
      %v450 = vmul.f32 %v377, %v392
      %v451 = vmul.f32 %v378, %v392
      %v452 = vmul.f32 %v379, %v392
      %v453 = vmul.f32 %v380, %v392
      %v454 = vmul.f32 %v381, %v392
      %v455 = vmul.f32 %v382, %v392
      %v456 = vmul.f32 %v383, %v392
      %v457 = vmul.f32 %v384, %v392
      %v458 = vmul.f32 %v385, %v392
      %v459 = vmul.f32 %v386, %v392
      %v460 = vmul.f32 %v387, %v392
      %v461 = vmul.f32 %v388, %v392
      %v462 = vmul.f32 %v389, %v392
      %v463 = vmul.f32 %v390, %v392
      %v464 = vmul.f32 %v391, %v392
      %v465 = vpack.c.bf16 %v394, %v393
      %v466 = vpack.c.bf16 %v396, %v395
      %v467 = vpack.c.bf16 %v398, %v397
      %v468 = vpack.c.bf16 %v400, %v399
      %v469 = vpack.c.bf16 %v402, %v401
      %v470 = vpack.c.bf16 %v404, %v403
      %v471 = vpack.c.bf16 %v406, %v405
      %v472 = vpack.c.bf16 %v408, %v407
      %v473 = vpack.c.bf16 %v410, %v409
      %v474 = vpack.c.bf16 %v412, %v411
      %v475 = vpack.c.bf16 %v414, %v413
      %v476 = vpack.c.bf16 %v416, %v415
      %v477 = vpack.c.bf16 %v418, %v417
      %v478 = vpack.c.bf16 %v420, %v419
      %v479 = vpack.c.bf16 %v422, %v421
      %v480 = vpack.c.bf16 %v424, %v423
      %v481 = vpack.c.bf16 %v426, %v425
      %v482 = vpack.c.bf16 %v428, %v427
      %v483 = vpack.c.bf16 %v430, %v429
      %v484 = vpack.c.bf16 %v432, %v431
      %v485 = vpack.c.bf16 %v434, %v433
      %v486 = vpack.c.bf16 %v436, %v435
      %v487 = vpack.c.bf16 %v438, %v437
      %v488 = vpack.c.bf16 %v440, %v439
      %v489 = vpack.c.bf16 %v442, %v441
      %v490 = vpack.c.bf16 %v444, %v443
      %v491 = vpack.c.bf16 %v446, %v445
      %v492 = vpack.c.bf16 %v448, %v447
      %v493 = vpack.c.bf16 %v450, %v449
      %v494 = vpack.c.bf16 %v452, %v451
      %v495 = vpack.c.bf16 %v454, %v453
      %v496 = vpack.c.bf16 %v456, %v455
      %v497 = vpack.c.bf16 %v458, %v457
      %v498 = vpack.c.bf16 %v460, %v459
      %v499 = vpack.c.bf16 %v462, %v461
      %v500 = vpack.c.bf16 %v464, %v463
      %s501 = scalar_lea.vmem [#allocation10], 288
      %v502 = vld [vmem:[%s501] sm:$0xff]
      %v503 = vld [vmem:[%s501 + $0x8] sm:$0xff]
      %v504 = vld [vmem:[%s501 + $0x10] sm:$0xff]
      %v505 = vld [vmem:[%s501 + $0x18] sm:$0xff]
      %v506 = vld [vmem:[%s501 + $0x20] sm:$0xff]
      %v507 = vld [vmem:[%s501 + $0x28] sm:$0xff]
      %v508 = vld [vmem:[%s501 + $0x30] sm:$0xff]
      %v509 = vld [vmem:[%s501 + $0x38] sm:$0xff]
      %v510 = vld [vmem:[%s501 + $0x40] sm:$0xff]
      %v511 = vld [vmem:[%s501 + $0x48] sm:$0xff]
      %v512 = vld [vmem:[%s501 + $0x50] sm:$0xff]
      %v513 = vld [vmem:[%s501 + $0x58] sm:$0xff]
      %v514 = vld [vmem:[%s501 + $0x60] sm:$0xff]
      %v515 = vld [vmem:[%s501 + $0x68] sm:$0xff]
      %v516 = vld [vmem:[%s501 + $0x70] sm:$0xff]
      %v517 = vld [vmem:[%s501 + $0x78] sm:$0xff]
      %v518 = vld [vmem:[%s501 + $0x80] sm:$0xff]
      %v519 = vld [vmem:[%s501 + $0x88] sm:$0xff]
      %v520 = vld [vmem:[%s501 + $0x90] sm:$0xff]
      %v521 = vld [vmem:[%s501 + $0x98] sm:$0xff]
      %v522 = vld [vmem:[%s501 + $0xa0] sm:$0xff]
      %v523 = vld [vmem:[%s501 + $0xa8] sm:$0xff]
      %v524 = vld [vmem:[%s501 + $0xb0] sm:$0xff]
      %v525 = vld [vmem:[%s501 + $0xb8] sm:$0xff]
      %v526 = vld [vmem:[%s501 + $0xc0] sm:$0xff]
      %v527 = vld [vmem:[%s501 + $0xc8] sm:$0xff]
      %v528 = vld [vmem:[%s501 + $0xd0] sm:$0xff]
      %v529 = vld [vmem:[%s501 + $0xd8] sm:$0xff]
      %v530 = vld [vmem:[%s501 + $0xe0] sm:$0xff]
      %v531 = vld [vmem:[%s501 + $0xe8] sm:$0xff]
      %v532 = vld [vmem:[%s501 + $0xf0] sm:$0xff]
      %v533 = vld [vmem:[%s501 + $0xf8] sm:$0xff]
      %v534 = vld [vmem:[%s501 + $0x100] sm:$0xff]
      %v535 = vld [vmem:[%s501 + $0x108] sm:$0xff]
      %v536 = vld [vmem:[%s501 + $0x110] sm:$0xff]
      %v537 = vld [vmem:[%s501 + $0x118] sm:$0xff]
      %v539 = vunpack.c.l.b16 %v278
      %v540 = vpack.c.b16 %v539, %v539
      %541 = vrot.lane.b32.xlu0 %v540, 127
      %v542 = vpop.permute.xlu0 %541
      %s544 = vtos %v542
      %v545 = vstv %s544
      %v546 = vpack.i.b16 %v545, %v545
      %v548 = vunpack.c.l.bf16 %v502
      %v549 = vunpack.c.h.bf16 %v502
      %v550 = vunpack.c.l.bf16 %v503
      %v551 = vunpack.c.h.bf16 %v503
      %v552 = vunpack.c.l.bf16 %v504
      %v553 = vunpack.c.h.bf16 %v504
      %v554 = vunpack.c.l.bf16 %v505
      %v555 = vunpack.c.h.bf16 %v505
      %v556 = vunpack.c.l.bf16 %v506
      %v557 = vunpack.c.h.bf16 %v506
      %v558 = vunpack.c.l.bf16 %v507
      %v559 = vunpack.c.h.bf16 %v507
      %v560 = vunpack.c.l.bf16 %v508
      %v561 = vunpack.c.h.bf16 %v508
      %v562 = vunpack.c.l.bf16 %v509
      %v563 = vunpack.c.h.bf16 %v509
      %v564 = vunpack.c.l.bf16 %v510
      %v565 = vunpack.c.h.bf16 %v510
      %v566 = vunpack.c.l.bf16 %v511
      %v567 = vunpack.c.h.bf16 %v511
      %v568 = vunpack.c.l.bf16 %v512
      %v569 = vunpack.c.h.bf16 %v512
      %v570 = vunpack.c.l.bf16 %v513
      %v571 = vunpack.c.h.bf16 %v513
      %v572 = vunpack.c.l.bf16 %v514
      %v573 = vunpack.c.h.bf16 %v514
      %v574 = vunpack.c.l.bf16 %v515
      %v575 = vunpack.c.h.bf16 %v515
      %v576 = vunpack.c.l.bf16 %v516
      %v577 = vunpack.c.h.bf16 %v516
      %v578 = vunpack.c.l.bf16 %v517
      %v579 = vunpack.c.h.bf16 %v517
      %v580 = vunpack.c.l.bf16 %v518
      %v581 = vunpack.c.h.bf16 %v518
      %v582 = vunpack.c.l.bf16 %v519
      %v583 = vunpack.c.h.bf16 %v519
      %v584 = vunpack.c.l.bf16 %v520
      %v585 = vunpack.c.h.bf16 %v520
      %v586 = vunpack.c.l.bf16 %v521
      %v587 = vunpack.c.h.bf16 %v521
      %v588 = vunpack.c.l.bf16 %v522
      %v589 = vunpack.c.h.bf16 %v522
      %v590 = vunpack.c.l.bf16 %v523
      %v591 = vunpack.c.h.bf16 %v523
      %v592 = vunpack.c.l.bf16 %v524
      %v593 = vunpack.c.h.bf16 %v524
      %v594 = vunpack.c.l.bf16 %v525
      %v595 = vunpack.c.h.bf16 %v525
      %v596 = vunpack.c.l.bf16 %v526
      %v597 = vunpack.c.h.bf16 %v526
      %v598 = vunpack.c.l.bf16 %v527
      %v599 = vunpack.c.h.bf16 %v527
      %v600 = vunpack.c.l.bf16 %v528
      %v601 = vunpack.c.h.bf16 %v528
      %v602 = vunpack.c.l.bf16 %v529
      %v603 = vunpack.c.h.bf16 %v529
      %v604 = vunpack.c.l.bf16 %v530
      %v605 = vunpack.c.h.bf16 %v530
      %v606 = vunpack.c.l.bf16 %v531
      %v607 = vunpack.c.h.bf16 %v531
      %v608 = vunpack.c.l.bf16 %v532
      %v609 = vunpack.c.h.bf16 %v532
      %v610 = vunpack.c.l.bf16 %v533
      %v611 = vunpack.c.h.bf16 %v533
      %v612 = vunpack.c.l.bf16 %v534
      %v613 = vunpack.c.h.bf16 %v534
      %v614 = vunpack.c.l.bf16 %v535
      %v615 = vunpack.c.h.bf16 %v535
      %v616 = vunpack.c.l.bf16 %v536
      %v617 = vunpack.c.h.bf16 %v536
      %v618 = vunpack.c.l.bf16 %v537
      %v619 = vunpack.c.h.bf16 %v537
      %v620 = vunpack.c.l.bf16 %v546
      %v621 = vmul.f32 %v548, %v620
      %v622 = vmul.f32 %v549, %v620
      %v623 = vmul.f32 %v550, %v620
      %v624 = vmul.f32 %v551, %v620
      %v625 = vmul.f32 %v552, %v620
      %v626 = vmul.f32 %v553, %v620
      %v627 = vmul.f32 %v554, %v620
      %v628 = vmul.f32 %v555, %v620
      %v629 = vmul.f32 %v556, %v620
      %v630 = vmul.f32 %v557, %v620
      %v631 = vmul.f32 %v558, %v620
      %v632 = vmul.f32 %v559, %v620
      %v633 = vmul.f32 %v560, %v620
      %v634 = vmul.f32 %v561, %v620
      %v635 = vmul.f32 %v562, %v620
      %v636 = vmul.f32 %v563, %v620
      %v637 = vmul.f32 %v564, %v620
      %v638 = vmul.f32 %v565, %v620
      %v639 = vmul.f32 %v566, %v620
      %v640 = vmul.f32 %v567, %v620
      %v641 = vmul.f32 %v568, %v620
      %v642 = vmul.f32 %v569, %v620
      %v643 = vmul.f32 %v570, %v620
      %v644 = vmul.f32 %v571, %v620
      %v645 = vmul.f32 %v572, %v620
      %v646 = vmul.f32 %v573, %v620
      %v647 = vmul.f32 %v574, %v620
      %v648 = vmul.f32 %v575, %v620
      %v649 = vmul.f32 %v576, %v620
      %v650 = vmul.f32 %v577, %v620
      %v651 = vmul.f32 %v578, %v620
      %v652 = vmul.f32 %v579, %v620
      %v653 = vmul.f32 %v580, %v620
      %v654 = vmul.f32 %v581, %v620
      %v655 = vmul.f32 %v582, %v620
      %v656 = vmul.f32 %v583, %v620
      %v657 = vmul.f32 %v584, %v620
      %v658 = vmul.f32 %v585, %v620
      %v659 = vmul.f32 %v586, %v620
      %v660 = vmul.f32 %v587, %v620
      %v661 = vmul.f32 %v588, %v620
      %v662 = vmul.f32 %v589, %v620
      %v663 = vmul.f32 %v590, %v620
      %v664 = vmul.f32 %v591, %v620
      %v665 = vmul.f32 %v592, %v620
      %v666 = vmul.f32 %v593, %v620
      %v667 = vmul.f32 %v594, %v620
      %v668 = vmul.f32 %v595, %v620
      %v669 = vmul.f32 %v596, %v620
      %v670 = vmul.f32 %v597, %v620
      %v671 = vmul.f32 %v598, %v620
      %v672 = vmul.f32 %v599, %v620
      %v673 = vmul.f32 %v600, %v620
      %v674 = vmul.f32 %v601, %v620
      %v675 = vmul.f32 %v602, %v620
      %v676 = vmul.f32 %v603, %v620
      %v677 = vmul.f32 %v604, %v620
      %v678 = vmul.f32 %v605, %v620
      %v679 = vmul.f32 %v606, %v620
      %v680 = vmul.f32 %v607, %v620
      %v681 = vmul.f32 %v608, %v620
      %v682 = vmul.f32 %v609, %v620
      %v683 = vmul.f32 %v610, %v620
      %v684 = vmul.f32 %v611, %v620
      %v685 = vmul.f32 %v612, %v620
      %v686 = vmul.f32 %v613, %v620
      %v687 = vmul.f32 %v614, %v620
      %v688 = vmul.f32 %v615, %v620
      %v689 = vmul.f32 %v616, %v620
      %v690 = vmul.f32 %v617, %v620
      %v691 = vmul.f32 %v618, %v620
      %v692 = vmul.f32 %v619, %v620
      %v693 = vpack.c.bf16 %v622, %v621
      %v694 = vpack.c.bf16 %v624, %v623
      %v695 = vpack.c.bf16 %v626, %v625
      %v696 = vpack.c.bf16 %v628, %v627
      %v697 = vpack.c.bf16 %v630, %v629
      %v698 = vpack.c.bf16 %v632, %v631
      %v699 = vpack.c.bf16 %v634, %v633
      %v700 = vpack.c.bf16 %v636, %v635
      %v701 = vpack.c.bf16 %v638, %v637
      %v702 = vpack.c.bf16 %v640, %v639
      %v703 = vpack.c.bf16 %v642, %v641
      %v704 = vpack.c.bf16 %v644, %v643
      %v705 = vpack.c.bf16 %v646, %v645
      %v706 = vpack.c.bf16 %v648, %v647
      %v707 = vpack.c.bf16 %v650, %v649
      %v708 = vpack.c.bf16 %v652, %v651
      %v709 = vpack.c.bf16 %v654, %v653
      %v710 = vpack.c.bf16 %v656, %v655
      %v711 = vpack.c.bf16 %v658, %v657
      %v712 = vpack.c.bf16 %v660, %v659
      %v713 = vpack.c.bf16 %v662, %v661
      %v714 = vpack.c.bf16 %v664, %v663
      %v715 = vpack.c.bf16 %v666, %v665
      %v716 = vpack.c.bf16 %v668, %v667
      %v717 = vpack.c.bf16 %v670, %v669
      %v718 = vpack.c.bf16 %v672, %v671
      %v719 = vpack.c.bf16 %v674, %v673
      %v720 = vpack.c.bf16 %v676, %v675
      %v721 = vpack.c.bf16 %v678, %v677
      %v722 = vpack.c.bf16 %v680, %v679
      %v723 = vpack.c.bf16 %v682, %v681
      %v724 = vpack.c.bf16 %v684, %v683
      %v725 = vpack.c.bf16 %v686, %v685
      %v726 = vpack.c.bf16 %v688, %v687
      %v727 = vpack.c.bf16 %v690, %v689
      %v728 = vpack.c.bf16 %v692, %v691
      %v729 = vunpack.c.l.bf16 %v465
      %v730 = vunpack.c.h.bf16 %v465
      %v731 = vunpack.c.l.bf16 %v466
      %v732 = vunpack.c.h.bf16 %v466
      %v733 = vunpack.c.l.bf16 %v467
      %v734 = vunpack.c.h.bf16 %v467
      %v735 = vunpack.c.l.bf16 %v468
      %v736 = vunpack.c.h.bf16 %v468
      %v737 = vunpack.c.l.bf16 %v469
      %v738 = vunpack.c.h.bf16 %v469
      %v739 = vunpack.c.l.bf16 %v470
      %v740 = vunpack.c.h.bf16 %v470
      %v741 = vunpack.c.l.bf16 %v471
      %v742 = vunpack.c.h.bf16 %v471
      %v743 = vunpack.c.l.bf16 %v472
      %v744 = vunpack.c.h.bf16 %v472
      %v745 = vunpack.c.l.bf16 %v473
      %v746 = vunpack.c.h.bf16 %v473
      %v747 = vunpack.c.l.bf16 %v474
      %v748 = vunpack.c.h.bf16 %v474
      %v749 = vunpack.c.l.bf16 %v475
      %v750 = vunpack.c.h.bf16 %v475
      %v751 = vunpack.c.l.bf16 %v476
      %v752 = vunpack.c.h.bf16 %v476
      %v753 = vunpack.c.l.bf16 %v477
      %v754 = vunpack.c.h.bf16 %v477
      %v755 = vunpack.c.l.bf16 %v478
      %v756 = vunpack.c.h.bf16 %v478
      %v757 = vunpack.c.l.bf16 %v479
      %v758 = vunpack.c.h.bf16 %v479
      %v759 = vunpack.c.l.bf16 %v480
      %v760 = vunpack.c.h.bf16 %v480
      %v761 = vunpack.c.l.bf16 %v481
      %v762 = vunpack.c.h.bf16 %v481
      %v763 = vunpack.c.l.bf16 %v482
      %v764 = vunpack.c.h.bf16 %v482
      %v765 = vunpack.c.l.bf16 %v483
      %v766 = vunpack.c.h.bf16 %v483
      %v767 = vunpack.c.l.bf16 %v484
      %v768 = vunpack.c.h.bf16 %v484
      %v769 = vunpack.c.l.bf16 %v485
      %v770 = vunpack.c.h.bf16 %v485
      %v771 = vunpack.c.l.bf16 %v486
      %v772 = vunpack.c.h.bf16 %v486
      %v773 = vunpack.c.l.bf16 %v487
      %v774 = vunpack.c.h.bf16 %v487
      %v775 = vunpack.c.l.bf16 %v488
      %v776 = vunpack.c.h.bf16 %v488
      %v777 = vunpack.c.l.bf16 %v489
      %v778 = vunpack.c.h.bf16 %v489
      %v779 = vunpack.c.l.bf16 %v490
      %v780 = vunpack.c.h.bf16 %v490
      %v781 = vunpack.c.l.bf16 %v491
      %v782 = vunpack.c.h.bf16 %v491
      %v783 = vunpack.c.l.bf16 %v492
      %v784 = vunpack.c.h.bf16 %v492
      %v785 = vunpack.c.l.bf16 %v493
      %v786 = vunpack.c.h.bf16 %v493
      %v787 = vunpack.c.l.bf16 %v494
      %v788 = vunpack.c.h.bf16 %v494
      %v789 = vunpack.c.l.bf16 %v495
      %v790 = vunpack.c.h.bf16 %v495
      %v791 = vunpack.c.l.bf16 %v496
      %v792 = vunpack.c.h.bf16 %v496
      %v793 = vunpack.c.l.bf16 %v497
      %v794 = vunpack.c.h.bf16 %v497
      %v795 = vunpack.c.l.bf16 %v498
      %v796 = vunpack.c.h.bf16 %v498
      %v797 = vunpack.c.l.bf16 %v499
      %v798 = vunpack.c.h.bf16 %v499
      %v799 = vunpack.c.l.bf16 %v500
      %v800 = vunpack.c.h.bf16 %v500
      %v801 = vunpack.c.l.bf16 %v693
      %v802 = vunpack.c.h.bf16 %v693
      %v803 = vunpack.c.l.bf16 %v694
      %v804 = vunpack.c.h.bf16 %v694
      %v805 = vunpack.c.l.bf16 %v695
      %v806 = vunpack.c.h.bf16 %v695
      %v807 = vunpack.c.l.bf16 %v696
      %v808 = vunpack.c.h.bf16 %v696
      %v809 = vunpack.c.l.bf16 %v697
      %v810 = vunpack.c.h.bf16 %v697
      %v811 = vunpack.c.l.bf16 %v698
      %v812 = vunpack.c.h.bf16 %v698
      %v813 = vunpack.c.l.bf16 %v699
      %v814 = vunpack.c.h.bf16 %v699
      %v815 = vunpack.c.l.bf16 %v700
      %v816 = vunpack.c.h.bf16 %v700
      %v817 = vunpack.c.l.bf16 %v701
      %v818 = vunpack.c.h.bf16 %v701
      %v819 = vunpack.c.l.bf16 %v702
      %v820 = vunpack.c.h.bf16 %v702
      %v821 = vunpack.c.l.bf16 %v703
      %v822 = vunpack.c.h.bf16 %v703
      %v823 = vunpack.c.l.bf16 %v704
      %v824 = vunpack.c.h.bf16 %v704
      %v825 = vunpack.c.l.bf16 %v705
      %v826 = vunpack.c.h.bf16 %v705
      %v827 = vunpack.c.l.bf16 %v706
      %v828 = vunpack.c.h.bf16 %v706
      %v829 = vunpack.c.l.bf16 %v707
      %v830 = vunpack.c.h.bf16 %v707
      %v831 = vunpack.c.l.bf16 %v708
      %v832 = vunpack.c.h.bf16 %v708
      %v833 = vunpack.c.l.bf16 %v709
      %v834 = vunpack.c.h.bf16 %v709
      %v835 = vunpack.c.l.bf16 %v710
      %v836 = vunpack.c.h.bf16 %v710
      %v837 = vunpack.c.l.bf16 %v711
      %v838 = vunpack.c.h.bf16 %v711
      %v839 = vunpack.c.l.bf16 %v712
      %v840 = vunpack.c.h.bf16 %v712
      %v841 = vunpack.c.l.bf16 %v713
      %v842 = vunpack.c.h.bf16 %v713
      %v843 = vunpack.c.l.bf16 %v714
      %v844 = vunpack.c.h.bf16 %v714
      %v845 = vunpack.c.l.bf16 %v715
      %v846 = vunpack.c.h.bf16 %v715
      %v847 = vunpack.c.l.bf16 %v716
      %v848 = vunpack.c.h.bf16 %v716
      %v849 = vunpack.c.l.bf16 %v717
      %v850 = vunpack.c.h.bf16 %v717
      %v851 = vunpack.c.l.bf16 %v718
      %v852 = vunpack.c.h.bf16 %v718
      %v853 = vunpack.c.l.bf16 %v719
      %v854 = vunpack.c.h.bf16 %v719
      %v855 = vunpack.c.l.bf16 %v720
      %v856 = vunpack.c.h.bf16 %v720
      %v857 = vunpack.c.l.bf16 %v721
      %v858 = vunpack.c.h.bf16 %v721
      %v859 = vunpack.c.l.bf16 %v722
      %v860 = vunpack.c.h.bf16 %v722
      %v861 = vunpack.c.l.bf16 %v723
      %v862 = vunpack.c.h.bf16 %v723
      %v863 = vunpack.c.l.bf16 %v724
      %v864 = vunpack.c.h.bf16 %v724
      %v865 = vunpack.c.l.bf16 %v725
      %v866 = vunpack.c.h.bf16 %v725
      %v867 = vunpack.c.l.bf16 %v726
      %v868 = vunpack.c.h.bf16 %v726
      %v869 = vunpack.c.l.bf16 %v727
      %v870 = vunpack.c.h.bf16 %v727
      %v871 = vunpack.c.l.bf16 %v728
      %v872 = vunpack.c.h.bf16 %v728
      %v873 = vadd.f32 %v729, %v801
      %v874 = vadd.f32 %v730, %v802
      %v875 = vadd.f32 %v731, %v803
      %v876 = vadd.f32 %v732, %v804
      %v877 = vadd.f32 %v733, %v805
      %v878 = vadd.f32 %v734, %v806
      %v879 = vadd.f32 %v735, %v807
      %v880 = vadd.f32 %v736, %v808
      %v881 = vadd.f32 %v737, %v809
      %v882 = vadd.f32 %v738, %v810
      %v883 = vadd.f32 %v739, %v811
      %v884 = vadd.f32 %v740, %v812
      %v885 = vadd.f32 %v741, %v813
      %v886 = vadd.f32 %v742, %v814
      %v887 = vadd.f32 %v743, %v815
      %v888 = vadd.f32 %v744, %v816
      %v889 = vadd.f32 %v745, %v817
      %v890 = vadd.f32 %v746, %v818
      %v891 = vadd.f32 %v747, %v819
      %v892 = vadd.f32 %v748, %v820
      %v893 = vadd.f32 %v749, %v821
      %v894 = vadd.f32 %v750, %v822
      %v895 = vadd.f32 %v751, %v823
      %v896 = vadd.f32 %v752, %v824
      %v897 = vadd.f32 %v753, %v825
      %v898 = vadd.f32 %v754, %v826
      %v899 = vadd.f32 %v755, %v827
      %v900 = vadd.f32 %v756, %v828
      %v901 = vadd.f32 %v757, %v829
      %v902 = vadd.f32 %v758, %v830
      %v903 = vadd.f32 %v759, %v831
      %v904 = vadd.f32 %v760, %v832
      %v905 = vadd.f32 %v761, %v833
      %v906 = vadd.f32 %v762, %v834
      %v907 = vadd.f32 %v763, %v835
      %v908 = vadd.f32 %v764, %v836
      %v909 = vadd.f32 %v765, %v837
      %v910 = vadd.f32 %v766, %v838
      %v911 = vadd.f32 %v767, %v839
      %v912 = vadd.f32 %v768, %v840
      %v913 = vadd.f32 %v769, %v841
      %v914 = vadd.f32 %v770, %v842
      %v915 = vadd.f32 %v771, %v843
      %v916 = vadd.f32 %v772, %v844
      %v917 = vadd.f32 %v773, %v845
      %v918 = vadd.f32 %v774, %v846
      %v919 = vadd.f32 %v775, %v847
      %v920 = vadd.f32 %v776, %v848
      %v921 = vadd.f32 %v777, %v849
      %v922 = vadd.f32 %v778, %v850
      %v923 = vadd.f32 %v779, %v851
      %v924 = vadd.f32 %v780, %v852
      %v925 = vadd.f32 %v781, %v853
      %v926 = vadd.f32 %v782, %v854
      %v927 = vadd.f32 %v783, %v855
      %v928 = vadd.f32 %v784, %v856
      %v929 = vadd.f32 %v785, %v857
      %v930 = vadd.f32 %v786, %v858
      %v931 = vadd.f32 %v787, %v859
      %v932 = vadd.f32 %v788, %v860
      %v933 = vadd.f32 %v789, %v861
      %v934 = vadd.f32 %v790, %v862
      %v935 = vadd.f32 %v791, %v863
      %v936 = vadd.f32 %v792, %v864
      %v937 = vadd.f32 %v793, %v865
      %v938 = vadd.f32 %v794, %v866
      %v939 = vadd.f32 %v795, %v867
      %v940 = vadd.f32 %v796, %v868
      %v941 = vadd.f32 %v797, %v869
      %v942 = vadd.f32 %v798, %v870
      %v943 = vadd.f32 %v799, %v871
      %v944 = vadd.f32 %v800, %v872
      %v945 = vpack.c.bf16 %v874, %v873
      %v946 = vpack.c.bf16 %v876, %v875
      %v947 = vpack.c.bf16 %v878, %v877
      %v948 = vpack.c.bf16 %v880, %v879
      %v949 = vpack.c.bf16 %v882, %v881
      %v950 = vpack.c.bf16 %v884, %v883
      %v951 = vpack.c.bf16 %v886, %v885
      %v952 = vpack.c.bf16 %v888, %v887
      %v953 = vpack.c.bf16 %v890, %v889
      %v954 = vpack.c.bf16 %v892, %v891
      %v955 = vpack.c.bf16 %v894, %v893
      %v956 = vpack.c.bf16 %v896, %v895
      %v957 = vpack.c.bf16 %v898, %v897
      %v958 = vpack.c.bf16 %v900, %v899
      %v959 = vpack.c.bf16 %v902, %v901
      %v960 = vpack.c.bf16 %v904, %v903
      %v961 = vpack.c.bf16 %v906, %v905
      %v962 = vpack.c.bf16 %v908, %v907
      %v963 = vpack.c.bf16 %v910, %v909
      %v964 = vpack.c.bf16 %v912, %v911
      %v965 = vpack.c.bf16 %v914, %v913
      %v966 = vpack.c.bf16 %v916, %v915
      %v967 = vpack.c.bf16 %v918, %v917
      %v968 = vpack.c.bf16 %v920, %v919
      %v969 = vpack.c.bf16 %v922, %v921
      %v970 = vpack.c.bf16 %v924, %v923
      %v971 = vpack.c.bf16 %v926, %v925
      %v972 = vpack.c.bf16 %v928, %v927
      %v973 = vpack.c.bf16 %v930, %v929
      %v974 = vpack.c.bf16 %v932, %v931
      %v975 = vpack.c.bf16 %v934, %v933
      %v976 = vpack.c.bf16 %v936, %v935
      %v977 = vpack.c.bf16 %v938, %v937
      %v978 = vpack.c.bf16 %v940, %v939
      %v979 = vpack.c.bf16 %v942, %v941
      %v980 = vpack.c.bf16 %v944, %v943
      %s981 = scalar_lea.vmem [#allocation10], 576
      %v982 = vld [vmem:[%s981] sm:$0xff]
      %v983 = vld [vmem:[%s981 + $0x8] sm:$0xff]
      %v984 = vld [vmem:[%s981 + $0x10] sm:$0xff]
      %v985 = vld [vmem:[%s981 + $0x18] sm:$0xff]
      %v986 = vld [vmem:[%s981 + $0x20] sm:$0xff]
      %v987 = vld [vmem:[%s981 + $0x28] sm:$0xff]
      %v988 = vld [vmem:[%s981 + $0x30] sm:$0xff]
      %v989 = vld [vmem:[%s981 + $0x38] sm:$0xff]
      %v990 = vld [vmem:[%s981 + $0x40] sm:$0xff]
      %v991 = vld [vmem:[%s981 + $0x48] sm:$0xff]
      %v992 = vld [vmem:[%s981 + $0x50] sm:$0xff]
      %v993 = vld [vmem:[%s981 + $0x58] sm:$0xff]
      %v994 = vld [vmem:[%s981 + $0x60] sm:$0xff]
      %v995 = vld [vmem:[%s981 + $0x68] sm:$0xff]
      %v996 = vld [vmem:[%s981 + $0x70] sm:$0xff]
      %v997 = vld [vmem:[%s981 + $0x78] sm:$0xff]
      %v998 = vld [vmem:[%s981 + $0x80] sm:$0xff]
      %v999 = vld [vmem:[%s981 + $0x88] sm:$0xff]
      %v1000 = vld [vmem:[%s981 + $0x90] sm:$0xff]
      %v1001 = vld [vmem:[%s981 + $0x98] sm:$0xff]
      %v1002 = vld [vmem:[%s981 + $0xa0] sm:$0xff]
      %v1003 = vld [vmem:[%s981 + $0xa8] sm:$0xff]
      %v1004 = vld [vmem:[%s981 + $0xb0] sm:$0xff]
      %v1005 = vld [vmem:[%s981 + $0xb8] sm:$0xff]
      %v1006 = vld [vmem:[%s981 + $0xc0] sm:$0xff]
      %v1007 = vld [vmem:[%s981 + $0xc8] sm:$0xff]
      %v1008 = vld [vmem:[%s981 + $0xd0] sm:$0xff]
      %v1009 = vld [vmem:[%s981 + $0xd8] sm:$0xff]
      %v1010 = vld [vmem:[%s981 + $0xe0] sm:$0xff]
      %v1011 = vld [vmem:[%s981 + $0xe8] sm:$0xff]
      %v1012 = vld [vmem:[%s981 + $0xf0] sm:$0xff]
      %v1013 = vld [vmem:[%s981 + $0xf8] sm:$0xff]
      %v1014 = vld [vmem:[%s981 + $0x100] sm:$0xff]
      %v1015 = vld [vmem:[%s981 + $0x108] sm:$0xff]
      %v1016 = vld [vmem:[%s981 + $0x110] sm:$0xff]
      %v1017 = vld [vmem:[%s981 + $0x118] sm:$0xff]
      %1018 = vrot.lane.b32.xlu0 %v540, 126
      %v1019 = vpop.permute.xlu0 %1018
      %s1021 = vtos %v1019
      %v1022 = vstv %s1021
      %v1023 = vpack.i.b16 %v1022, %v1022
      %v1025 = vunpack.c.l.bf16 %v982
      %v1026 = vunpack.c.h.bf16 %v982
      %v1027 = vunpack.c.l.bf16 %v983
      %v1028 = vunpack.c.h.bf16 %v983
      %v1029 = vunpack.c.l.bf16 %v984
      %v1030 = vunpack.c.h.bf16 %v984
      %v1031 = vunpack.c.l.bf16 %v985
      %v1032 = vunpack.c.h.bf16 %v985
      %v1033 = vunpack.c.l.bf16 %v986
      %v1034 = vunpack.c.h.bf16 %v986
      %v1035 = vunpack.c.l.bf16 %v987
      %v1036 = vunpack.c.h.bf16 %v987
      %v1037 = vunpack.c.l.bf16 %v988
      %v1038 = vunpack.c.h.bf16 %v988
      %v1039 = vunpack.c.l.bf16 %v989
      %v1040 = vunpack.c.h.bf16 %v989
      %v1041 = vunpack.c.l.bf16 %v990
      %v1042 = vunpack.c.h.bf16 %v990
      %v1043 = vunpack.c.l.bf16 %v991
      %v1044 = vunpack.c.h.bf16 %v991
      %v1045 = vunpack.c.l.bf16 %v992
      %v1046 = vunpack.c.h.bf16 %v992
      %v1047 = vunpack.c.l.bf16 %v993
      %v1048 = vunpack.c.h.bf16 %v993
      %v1049 = vunpack.c.l.bf16 %v994
      %v1050 = vunpack.c.h.bf16 %v994
      %v1051 = vunpack.c.l.bf16 %v995
      %v1052 = vunpack.c.h.bf16 %v995
      %v1053 = vunpack.c.l.bf16 %v996
      %v1054 = vunpack.c.h.bf16 %v996
      %v1055 = vunpack.c.l.bf16 %v997
      %v1056 = vunpack.c.h.bf16 %v997
      %v1057 = vunpack.c.l.bf16 %v998
      %v1058 = vunpack.c.h.bf16 %v998
      %v1059 = vunpack.c.l.bf16 %v999
      %v1060 = vunpack.c.h.bf16 %v999
      %v1061 = vunpack.c.l.bf16 %v1000
      %v1062 = vunpack.c.h.bf16 %v1000
      %v1063 = vunpack.c.l.bf16 %v1001
      %v1064 = vunpack.c.h.bf16 %v1001
      %v1065 = vunpack.c.l.bf16 %v1002
      %v1066 = vunpack.c.h.bf16 %v1002
      %v1067 = vunpack.c.l.bf16 %v1003
      %v1068 = vunpack.c.h.bf16 %v1003
      %v1069 = vunpack.c.l.bf16 %v1004
      %v1070 = vunpack.c.h.bf16 %v1004
      %v1071 = vunpack.c.l.bf16 %v1005
      %v1072 = vunpack.c.h.bf16 %v1005
      %v1073 = vunpack.c.l.bf16 %v1006
      %v1074 = vunpack.c.h.bf16 %v1006
      %v1075 = vunpack.c.l.bf16 %v1007
      %v1076 = vunpack.c.h.bf16 %v1007
      %v1077 = vunpack.c.l.bf16 %v1008
      %v1078 = vunpack.c.h.bf16 %v1008
      %v1079 = vunpack.c.l.bf16 %v1009
      %v1080 = vunpack.c.h.bf16 %v1009
      %v1081 = vunpack.c.l.bf16 %v1010
      %v1082 = vunpack.c.h.bf16 %v1010
      %v1083 = vunpack.c.l.bf16 %v1011
      %v1084 = vunpack.c.h.bf16 %v1011
      %v1085 = vunpack.c.l.bf16 %v1012
      %v1086 = vunpack.c.h.bf16 %v1012
      %v1087 = vunpack.c.l.bf16 %v1013
      %v1088 = vunpack.c.h.bf16 %v1013
      %v1089 = vunpack.c.l.bf16 %v1014
      %v1090 = vunpack.c.h.bf16 %v1014
      %v1091 = vunpack.c.l.bf16 %v1015
      %v1092 = vunpack.c.h.bf16 %v1015
      %v1093 = vunpack.c.l.bf16 %v1016
      %v1094 = vunpack.c.h.bf16 %v1016
      %v1095 = vunpack.c.l.bf16 %v1017
      %v1096 = vunpack.c.h.bf16 %v1017
      %v1097 = vunpack.c.l.bf16 %v1023
      %v1098 = vmul.f32 %v1025, %v1097
      %v1099 = vmul.f32 %v1026, %v1097
      %v1100 = vmul.f32 %v1027, %v1097
      %v1101 = vmul.f32 %v1028, %v1097
      %v1102 = vmul.f32 %v1029, %v1097
      %v1103 = vmul.f32 %v1030, %v1097
      %v1104 = vmul.f32 %v1031, %v1097
      %v1105 = vmul.f32 %v1032, %v1097
      %v1106 = vmul.f32 %v1033, %v1097
      %v1107 = vmul.f32 %v1034, %v1097
      %v1108 = vmul.f32 %v1035, %v1097
      %v1109 = vmul.f32 %v1036, %v1097
      %v1110 = vmul.f32 %v1037, %v1097
      %v1111 = vmul.f32 %v1038, %v1097
      %v1112 = vmul.f32 %v1039, %v1097
      %v1113 = vmul.f32 %v1040, %v1097
      %v1114 = vmul.f32 %v1041, %v1097
      %v1115 = vmul.f32 %v1042, %v1097
      %v1116 = vmul.f32 %v1043, %v1097
      %v1117 = vmul.f32 %v1044, %v1097
      %v1118 = vmul.f32 %v1045, %v1097
      %v1119 = vmul.f32 %v1046, %v1097
      %v1120 = vmul.f32 %v1047, %v1097
      %v1121 = vmul.f32 %v1048, %v1097
      %v1122 = vmul.f32 %v1049, %v1097
      %v1123 = vmul.f32 %v1050, %v1097
      %v1124 = vmul.f32 %v1051, %v1097
      %v1125 = vmul.f32 %v1052, %v1097
      %v1126 = vmul.f32 %v1053, %v1097
      %v1127 = vmul.f32 %v1054, %v1097
      %v1128 = vmul.f32 %v1055, %v1097
      %v1129 = vmul.f32 %v1056, %v1097
      %v1130 = vmul.f32 %v1057, %v1097
      %v1131 = vmul.f32 %v1058, %v1097
      %v1132 = vmul.f32 %v1059, %v1097
      %v1133 = vmul.f32 %v1060, %v1097
      %v1134 = vmul.f32 %v1061, %v1097
      %v1135 = vmul.f32 %v1062, %v1097
      %v1136 = vmul.f32 %v1063, %v1097
      %v1137 = vmul.f32 %v1064, %v1097
      %v1138 = vmul.f32 %v1065, %v1097
      %v1139 = vmul.f32 %v1066, %v1097
      %v1140 = vmul.f32 %v1067, %v1097
      %v1141 = vmul.f32 %v1068, %v1097
      %v1142 = vmul.f32 %v1069, %v1097
      %v1143 = vmul.f32 %v1070, %v1097
      %v1144 = vmul.f32 %v1071, %v1097
      %v1145 = vmul.f32 %v1072, %v1097
      %v1146 = vmul.f32 %v1073, %v1097
      %v1147 = vmul.f32 %v1074, %v1097
      %v1148 = vmul.f32 %v1075, %v1097
      %v1149 = vmul.f32 %v1076, %v1097
      %v1150 = vmul.f32 %v1077, %v1097
      %v1151 = vmul.f32 %v1078, %v1097
      %v1152 = vmul.f32 %v1079, %v1097
      %v1153 = vmul.f32 %v1080, %v1097
      %v1154 = vmul.f32 %v1081, %v1097
      %v1155 = vmul.f32 %v1082, %v1097
      %v1156 = vmul.f32 %v1083, %v1097
      %v1157 = vmul.f32 %v1084, %v1097
      %v1158 = vmul.f32 %v1085, %v1097
      %v1159 = vmul.f32 %v1086, %v1097
      %v1160 = vmul.f32 %v1087, %v1097
      %v1161 = vmul.f32 %v1088, %v1097
      %v1162 = vmul.f32 %v1089, %v1097
      %v1163 = vmul.f32 %v1090, %v1097
      %v1164 = vmul.f32 %v1091, %v1097
      %v1165 = vmul.f32 %v1092, %v1097
      %v1166 = vmul.f32 %v1093, %v1097
      %v1167 = vmul.f32 %v1094, %v1097
      %v1168 = vmul.f32 %v1095, %v1097
      %v1169 = vmul.f32 %v1096, %v1097
      %v1170 = vpack.c.bf16 %v1099, %v1098
      %v1171 = vpack.c.bf16 %v1101, %v1100
      %v1172 = vpack.c.bf16 %v1103, %v1102
      %v1173 = vpack.c.bf16 %v1105, %v1104
      %v1174 = vpack.c.bf16 %v1107, %v1106
      %v1175 = vpack.c.bf16 %v1109, %v1108
      %v1176 = vpack.c.bf16 %v1111, %v1110
      %v1177 = vpack.c.bf16 %v1113, %v1112
      %v1178 = vpack.c.bf16 %v1115, %v1114
      %v1179 = vpack.c.bf16 %v1117, %v1116
      %v1180 = vpack.c.bf16 %v1119, %v1118
      %v1181 = vpack.c.bf16 %v1121, %v1120
      %v1182 = vpack.c.bf16 %v1123, %v1122
      %v1183 = vpack.c.bf16 %v1125, %v1124
      %v1184 = vpack.c.bf16 %v1127, %v1126
      %v1185 = vpack.c.bf16 %v1129, %v1128
      %v1186 = vpack.c.bf16 %v1131, %v1130
      %v1187 = vpack.c.bf16 %v1133, %v1132
      %v1188 = vpack.c.bf16 %v1135, %v1134
      %v1189 = vpack.c.bf16 %v1137, %v1136
      %v1190 = vpack.c.bf16 %v1139, %v1138
      %v1191 = vpack.c.bf16 %v1141, %v1140
      %v1192 = vpack.c.bf16 %v1143, %v1142
      %v1193 = vpack.c.bf16 %v1145, %v1144
      %v1194 = vpack.c.bf16 %v1147, %v1146
      %v1195 = vpack.c.bf16 %v1149, %v1148
      %v1196 = vpack.c.bf16 %v1151, %v1150
      %v1197 = vpack.c.bf16 %v1153, %v1152
      %v1198 = vpack.c.bf16 %v1155, %v1154
      %v1199 = vpack.c.bf16 %v1157, %v1156
      %v1200 = vpack.c.bf16 %v1159, %v1158
      %v1201 = vpack.c.bf16 %v1161, %v1160
      %v1202 = vpack.c.bf16 %v1163, %v1162
      %v1203 = vpack.c.bf16 %v1165, %v1164
      %v1204 = vpack.c.bf16 %v1167, %v1166
      %v1205 = vpack.c.bf16 %v1169, %v1168
      %v1206 = vunpack.c.l.bf16 %v945
      %v1207 = vunpack.c.h.bf16 %v945
      %v1208 = vunpack.c.l.bf16 %v946
      %v1209 = vunpack.c.h.bf16 %v946
      %v1210 = vunpack.c.l.bf16 %v947
      %v1211 = vunpack.c.h.bf16 %v947
      %v1212 = vunpack.c.l.bf16 %v948
      %v1213 = vunpack.c.h.bf16 %v948
      %v1214 = vunpack.c.l.bf16 %v949
      %v1215 = vunpack.c.h.bf16 %v949
      %v1216 = vunpack.c.l.bf16 %v950
      %v1217 = vunpack.c.h.bf16 %v950
      %v1218 = vunpack.c.l.bf16 %v951
      %v1219 = vunpack.c.h.bf16 %v951
      %v1220 = vunpack.c.l.bf16 %v952
      %v1221 = vunpack.c.h.bf16 %v952
      %v1222 = vunpack.c.l.bf16 %v953
      %v1223 = vunpack.c.h.bf16 %v953
      %v1224 = vunpack.c.l.bf16 %v954
      %v1225 = vunpack.c.h.bf16 %v954
      %v1226 = vunpack.c.l.bf16 %v955
      %v1227 = vunpack.c.h.bf16 %v955
      %v1228 = vunpack.c.l.bf16 %v956
      %v1229 = vunpack.c.h.bf16 %v956
      %v1230 = vunpack.c.l.bf16 %v957
      %v1231 = vunpack.c.h.bf16 %v957
      %v1232 = vunpack.c.l.bf16 %v958
      %v1233 = vunpack.c.h.bf16 %v958
      %v1234 = vunpack.c.l.bf16 %v959
      %v1235 = vunpack.c.h.bf16 %v959
      %v1236 = vunpack.c.l.bf16 %v960
      %v1237 = vunpack.c.h.bf16 %v960
      %v1238 = vunpack.c.l.bf16 %v961
      %v1239 = vunpack.c.h.bf16 %v961
      %v1240 = vunpack.c.l.bf16 %v962
      %v1241 = vunpack.c.h.bf16 %v962
      %v1242 = vunpack.c.l.bf16 %v963
      %v1243 = vunpack.c.h.bf16 %v963
      %v1244 = vunpack.c.l.bf16 %v964
      %v1245 = vunpack.c.h.bf16 %v964
      %v1246 = vunpack.c.l.bf16 %v965
      %v1247 = vunpack.c.h.bf16 %v965
      %v1248 = vunpack.c.l.bf16 %v966
      %v1249 = vunpack.c.h.bf16 %v966
      %v1250 = vunpack.c.l.bf16 %v967
      %v1251 = vunpack.c.h.bf16 %v967
      %v1252 = vunpack.c.l.bf16 %v968
      %v1253 = vunpack.c.h.bf16 %v968
      %v1254 = vunpack.c.l.bf16 %v969
      %v1255 = vunpack.c.h.bf16 %v969
      %v1256 = vunpack.c.l.bf16 %v970
      %v1257 = vunpack.c.h.bf16 %v970
      %v1258 = vunpack.c.l.bf16 %v971
      %v1259 = vunpack.c.h.bf16 %v971
      %v1260 = vunpack.c.l.bf16 %v972
      %v1261 = vunpack.c.h.bf16 %v972
      %v1262 = vunpack.c.l.bf16 %v973
      %v1263 = vunpack.c.h.bf16 %v973
      %v1264 = vunpack.c.l.bf16 %v974
      %v1265 = vunpack.c.h.bf16 %v974
      %v1266 = vunpack.c.l.bf16 %v975
      %v1267 = vunpack.c.h.bf16 %v975
      %v1268 = vunpack.c.l.bf16 %v976
      %v1269 = vunpack.c.h.bf16 %v976
      %v1270 = vunpack.c.l.bf16 %v977
      %v1271 = vunpack.c.h.bf16 %v977
      %v1272 = vunpack.c.l.bf16 %v978
      %v1273 = vunpack.c.h.bf16 %v978
      %v1274 = vunpack.c.l.bf16 %v979
      %v1275 = vunpack.c.h.bf16 %v979
      %v1276 = vunpack.c.l.bf16 %v980
      %v1277 = vunpack.c.h.bf16 %v980
      %v1278 = vunpack.c.l.bf16 %v1170
      %v1279 = vunpack.c.h.bf16 %v1170
      %v1280 = vunpack.c.l.bf16 %v1171
      %v1281 = vunpack.c.h.bf16 %v1171
      %v1282 = vunpack.c.l.bf16 %v1172
      %v1283 = vunpack.c.h.bf16 %v1172
      %v1284 = vunpack.c.l.bf16 %v1173
      %v1285 = vunpack.c.h.bf16 %v1173
      %v1286 = vunpack.c.l.bf16 %v1174
      %v1287 = vunpack.c.h.bf16 %v1174
      %v1288 = vunpack.c.l.bf16 %v1175
      %v1289 = vunpack.c.h.bf16 %v1175
      %v1290 = vunpack.c.l.bf16 %v1176
      %v1291 = vunpack.c.h.bf16 %v1176
      %v1292 = vunpack.c.l.bf16 %v1177
      %v1293 = vunpack.c.h.bf16 %v1177
      %v1294 = vunpack.c.l.bf16 %v1178
      %v1295 = vunpack.c.h.bf16 %v1178
      %v1296 = vunpack.c.l.bf16 %v1179
      %v1297 = vunpack.c.h.bf16 %v1179
      %v1298 = vunpack.c.l.bf16 %v1180
      %v1299 = vunpack.c.h.bf16 %v1180
      %v1300 = vunpack.c.l.bf16 %v1181
      %v1301 = vunpack.c.h.bf16 %v1181
      %v1302 = vunpack.c.l.bf16 %v1182
      %v1303 = vunpack.c.h.bf16 %v1182
      %v1304 = vunpack.c.l.bf16 %v1183
      %v1305 = vunpack.c.h.bf16 %v1183
      %v1306 = vunpack.c.l.bf16 %v1184
      %v1307 = vunpack.c.h.bf16 %v1184
      %v1308 = vunpack.c.l.bf16 %v1185
      %v1309 = vunpack.c.h.bf16 %v1185
      %v1310 = vunpack.c.l.bf16 %v1186
      %v1311 = vunpack.c.h.bf16 %v1186
      %v1312 = vunpack.c.l.bf16 %v1187
      %v1313 = vunpack.c.h.bf16 %v1187
      %v1314 = vunpack.c.l.bf16 %v1188
      %v1315 = vunpack.c.h.bf16 %v1188
      %v1316 = vunpack.c.l.bf16 %v1189
      %v1317 = vunpack.c.h.bf16 %v1189
      %v1318 = vunpack.c.l.bf16 %v1190
      %v1319 = vunpack.c.h.bf16 %v1190
      %v1320 = vunpack.c.l.bf16 %v1191
      %v1321 = vunpack.c.h.bf16 %v1191
      %v1322 = vunpack.c.l.bf16 %v1192
      %v1323 = vunpack.c.h.bf16 %v1192
      %v1324 = vunpack.c.l.bf16 %v1193
      %v1325 = vunpack.c.h.bf16 %v1193
      %v1326 = vunpack.c.l.bf16 %v1194
      %v1327 = vunpack.c.h.bf16 %v1194
      %v1328 = vunpack.c.l.bf16 %v1195
      %v1329 = vunpack.c.h.bf16 %v1195
      %v1330 = vunpack.c.l.bf16 %v1196
      %v1331 = vunpack.c.h.bf16 %v1196
      %v1332 = vunpack.c.l.bf16 %v1197
      %v1333 = vunpack.c.h.bf16 %v1197
      %v1334 = vunpack.c.l.bf16 %v1198
      %v1335 = vunpack.c.h.bf16 %v1198
      %v1336 = vunpack.c.l.bf16 %v1199
      %v1337 = vunpack.c.h.bf16 %v1199
      %v1338 = vunpack.c.l.bf16 %v1200
      %v1339 = vunpack.c.h.bf16 %v1200
      %v1340 = vunpack.c.l.bf16 %v1201
      %v1341 = vunpack.c.h.bf16 %v1201
      %v1342 = vunpack.c.l.bf16 %v1202
      %v1343 = vunpack.c.h.bf16 %v1202
      %v1344 = vunpack.c.l.bf16 %v1203
      %v1345 = vunpack.c.h.bf16 %v1203
      %v1346 = vunpack.c.l.bf16 %v1204
      %v1347 = vunpack.c.h.bf16 %v1204
      %v1348 = vunpack.c.l.bf16 %v1205
      %v1349 = vunpack.c.h.bf16 %v1205
      %v1350 = vadd.f32 %v1206, %v1278
      %v1351 = vadd.f32 %v1207, %v1279
      %v1352 = vadd.f32 %v1208, %v1280
      %v1353 = vadd.f32 %v1209, %v1281
      %v1354 = vadd.f32 %v1210, %v1282
      %v1355 = vadd.f32 %v1211, %v1283
      %v1356 = vadd.f32 %v1212, %v1284
      %v1357 = vadd.f32 %v1213, %v1285
      %v1358 = vadd.f32 %v1214, %v1286
      %v1359 = vadd.f32 %v1215, %v1287
      %v1360 = vadd.f32 %v1216, %v1288
      %v1361 = vadd.f32 %v1217, %v1289
      %v1362 = vadd.f32 %v1218, %v1290
      %v1363 = vadd.f32 %v1219, %v1291
      %v1364 = vadd.f32 %v1220, %v1292
      %v1365 = vadd.f32 %v1221, %v1293
      %v1366 = vadd.f32 %v1222, %v1294
      %v1367 = vadd.f32 %v1223, %v1295
      %v1368 = vadd.f32 %v1224, %v1296
      %v1369 = vadd.f32 %v1225, %v1297
      %v1370 = vadd.f32 %v1226, %v1298
      %v1371 = vadd.f32 %v1227, %v1299
      %v1372 = vadd.f32 %v1228, %v1300
      %v1373 = vadd.f32 %v1229, %v1301
      %v1374 = vadd.f32 %v1230, %v1302
      %v1375 = vadd.f32 %v1231, %v1303
      %v1376 = vadd.f32 %v1232, %v1304
      %v1377 = vadd.f32 %v1233, %v1305
      %v1378 = vadd.f32 %v1234, %v1306
      %v1379 = vadd.f32 %v1235, %v1307
      %v1380 = vadd.f32 %v1236, %v1308
      %v1381 = vadd.f32 %v1237, %v1309
      %v1382 = vadd.f32 %v1238, %v1310
      %v1383 = vadd.f32 %v1239, %v1311
      %v1384 = vadd.f32 %v1240, %v1312
      %v1385 = vadd.f32 %v1241, %v1313
      %v1386 = vadd.f32 %v1242, %v1314
      %v1387 = vadd.f32 %v1243, %v1315
      %v1388 = vadd.f32 %v1244, %v1316
      %v1389 = vadd.f32 %v1245, %v1317
      %v1390 = vadd.f32 %v1246, %v1318
      %v1391 = vadd.f32 %v1247, %v1319
      %v1392 = vadd.f32 %v1248, %v1320
      %v1393 = vadd.f32 %v1249, %v1321
      %v1394 = vadd.f32 %v1250, %v1322
      %v1395 = vadd.f32 %v1251, %v1323
      %v1396 = vadd.f32 %v1252, %v1324
      %v1397 = vadd.f32 %v1253, %v1325
      %v1398 = vadd.f32 %v1254, %v1326
      %v1399 = vadd.f32 %v1255, %v1327
      %v1400 = vadd.f32 %v1256, %v1328
      %v1401 = vadd.f32 %v1257, %v1329
      %v1402 = vadd.f32 %v1258, %v1330
      %v1403 = vadd.f32 %v1259, %v1331
      %v1404 = vadd.f32 %v1260, %v1332
      %v1405 = vadd.f32 %v1261, %v1333
      %v1406 = vadd.f32 %v1262, %v1334
      %v1407 = vadd.f32 %v1263, %v1335
      %v1408 = vadd.f32 %v1264, %v1336
      %v1409 = vadd.f32 %v1265, %v1337
      %v1410 = vadd.f32 %v1266, %v1338
      %v1411 = vadd.f32 %v1267, %v1339
      %v1412 = vadd.f32 %v1268, %v1340
      %v1413 = vadd.f32 %v1269, %v1341
      %v1414 = vadd.f32 %v1270, %v1342
      %v1415 = vadd.f32 %v1271, %v1343
      %v1416 = vadd.f32 %v1272, %v1344
      %v1417 = vadd.f32 %v1273, %v1345
      %v1418 = vadd.f32 %v1274, %v1346
      %v1419 = vadd.f32 %v1275, %v1347
      %v1420 = vadd.f32 %v1276, %v1348
      %v1421 = vadd.f32 %v1277, %v1349
      %v1422 = vpack.c.bf16 %v1351, %v1350
      %v1423 = vpack.c.bf16 %v1353, %v1352
      %v1424 = vpack.c.bf16 %v1355, %v1354
      %v1425 = vpack.c.bf16 %v1357, %v1356
      %v1426 = vpack.c.bf16 %v1359, %v1358
      %v1427 = vpack.c.bf16 %v1361, %v1360
      %v1428 = vpack.c.bf16 %v1363, %v1362
      %v1429 = vpack.c.bf16 %v1365, %v1364
      %v1430 = vpack.c.bf16 %v1367, %v1366
      %v1431 = vpack.c.bf16 %v1369, %v1368
      %v1432 = vpack.c.bf16 %v1371, %v1370
      %v1433 = vpack.c.bf16 %v1373, %v1372
      %v1434 = vpack.c.bf16 %v1375, %v1374
      %v1435 = vpack.c.bf16 %v1377, %v1376
      %v1436 = vpack.c.bf16 %v1379, %v1378
      %v1437 = vpack.c.bf16 %v1381, %v1380
      %v1438 = vpack.c.bf16 %v1383, %v1382
      %v1439 = vpack.c.bf16 %v1385, %v1384
      %v1440 = vpack.c.bf16 %v1387, %v1386
      %v1441 = vpack.c.bf16 %v1389, %v1388
      %v1442 = vpack.c.bf16 %v1391, %v1390
      %v1443 = vpack.c.bf16 %v1393, %v1392
      %v1444 = vpack.c.bf16 %v1395, %v1394
      %v1445 = vpack.c.bf16 %v1397, %v1396
      %v1446 = vpack.c.bf16 %v1399, %v1398
      %v1447 = vpack.c.bf16 %v1401, %v1400
      %v1448 = vpack.c.bf16 %v1403, %v1402
      %v1449 = vpack.c.bf16 %v1405, %v1404
      %v1450 = vpack.c.bf16 %v1407, %v1406
      %v1451 = vpack.c.bf16 %v1409, %v1408
      %v1452 = vpack.c.bf16 %v1411, %v1410
      %v1453 = vpack.c.bf16 %v1413, %v1412
      %v1454 = vpack.c.bf16 %v1415, %v1414
      %v1455 = vpack.c.bf16 %v1417, %v1416
      %v1456 = vpack.c.bf16 %v1419, %v1418
      %v1457 = vpack.c.bf16 %v1421, %v1420
      %s1458 = scalar_lea.vmem [#allocation10], 864
      %v1459 = vld [vmem:[%s1458] sm:$0xff]
      %v1460 = vld [vmem:[%s1458 + $0x8] sm:$0xff]
      %v1461 = vld [vmem:[%s1458 + $0x10] sm:$0xff]
      %v1462 = vld [vmem:[%s1458 + $0x18] sm:$0xff]
      %v1463 = vld [vmem:[%s1458 + $0x20] sm:$0xff]
      %v1464 = vld [vmem:[%s1458 + $0x28] sm:$0xff]
      %v1465 = vld [vmem:[%s1458 + $0x30] sm:$0xff]
      %v1466 = vld [vmem:[%s1458 + $0x38] sm:$0xff]
      %v1467 = vld [vmem:[%s1458 + $0x40] sm:$0xff]
      %v1468 = vld [vmem:[%s1458 + $0x48] sm:$0xff]
      %v1469 = vld [vmem:[%s1458 + $0x50] sm:$0xff]
      %v1470 = vld [vmem:[%s1458 + $0x58] sm:$0xff]
      %v1471 = vld [vmem:[%s1458 + $0x60] sm:$0xff]
      %v1472 = vld [vmem:[%s1458 + $0x68] sm:$0xff]
      %v1473 = vld [vmem:[%s1458 + $0x70] sm:$0xff]
      %v1474 = vld [vmem:[%s1458 + $0x78] sm:$0xff]
      %v1475 = vld [vmem:[%s1458 + $0x80] sm:$0xff]
      %v1476 = vld [vmem:[%s1458 + $0x88] sm:$0xff]
      %v1477 = vld [vmem:[%s1458 + $0x90] sm:$0xff]
      %v1478 = vld [vmem:[%s1458 + $0x98] sm:$0xff]
      %v1479 = vld [vmem:[%s1458 + $0xa0] sm:$0xff]
      %v1480 = vld [vmem:[%s1458 + $0xa8] sm:$0xff]
      %v1481 = vld [vmem:[%s1458 + $0xb0] sm:$0xff]
      %v1482 = vld [vmem:[%s1458 + $0xb8] sm:$0xff]
      %v1483 = vld [vmem:[%s1458 + $0xc0] sm:$0xff]
      %v1484 = vld [vmem:[%s1458 + $0xc8] sm:$0xff]
      %v1485 = vld [vmem:[%s1458 + $0xd0] sm:$0xff]
      %v1486 = vld [vmem:[%s1458 + $0xd8] sm:$0xff]
      %v1487 = vld [vmem:[%s1458 + $0xe0] sm:$0xff]
      %v1488 = vld [vmem:[%s1458 + $0xe8] sm:$0xff]
      %v1489 = vld [vmem:[%s1458 + $0xf0] sm:$0xff]
      %v1490 = vld [vmem:[%s1458 + $0xf8] sm:$0xff]
      %v1491 = vld [vmem:[%s1458 + $0x100] sm:$0xff]
      %v1492 = vld [vmem:[%s1458 + $0x108] sm:$0xff]
      %v1493 = vld [vmem:[%s1458 + $0x110] sm:$0xff]
      %v1494 = vld [vmem:[%s1458 + $0x118] sm:$0xff]
      %1495 = vrot.lane.b32.xlu0 %v540, 125
      %v1496 = vpop.permute.xlu0 %1495
      %s1498 = vtos %v1496
      %v1499 = vstv %s1498
      %v1500 = vpack.i.b16 %v1499, %v1499
      %v1502 = vunpack.c.l.bf16 %v1459
      %v1503 = vunpack.c.h.bf16 %v1459
      %v1504 = vunpack.c.l.bf16 %v1460
      %v1505 = vunpack.c.h.bf16 %v1460
      %v1506 = vunpack.c.l.bf16 %v1461
      %v1507 = vunpack.c.h.bf16 %v1461
      %v1508 = vunpack.c.l.bf16 %v1462
      %v1509 = vunpack.c.h.bf16 %v1462
      %v1510 = vunpack.c.l.bf16 %v1463
      %v1511 = vunpack.c.h.bf16 %v1463
      %v1512 = vunpack.c.l.bf16 %v1464
      %v1513 = vunpack.c.h.bf16 %v1464
      %v1514 = vunpack.c.l.bf16 %v1465
      %v1515 = vunpack.c.h.bf16 %v1465
      %v1516 = vunpack.c.l.bf16 %v1466
      %v1517 = vunpack.c.h.bf16 %v1466
      %v1518 = vunpack.c.l.bf16 %v1467
      %v1519 = vunpack.c.h.bf16 %v1467
      %v1520 = vunpack.c.l.bf16 %v1468
      %v1521 = vunpack.c.h.bf16 %v1468
      %v1522 = vunpack.c.l.bf16 %v1469
      %v1523 = vunpack.c.h.bf16 %v1469
      %v1524 = vunpack.c.l.bf16 %v1470
      %v1525 = vunpack.c.h.bf16 %v1470
      %v1526 = vunpack.c.l.bf16 %v1471
      %v1527 = vunpack.c.h.bf16 %v1471
      %v1528 = vunpack.c.l.bf16 %v1472
      %v1529 = vunpack.c.h.bf16 %v1472
      %v1530 = vunpack.c.l.bf16 %v1473
      %v1531 = vunpack.c.h.bf16 %v1473
      %v1532 = vunpack.c.l.bf16 %v1474
      %v1533 = vunpack.c.h.bf16 %v1474
      %v1534 = vunpack.c.l.bf16 %v1475
      %v1535 = vunpack.c.h.bf16 %v1475
      %v1536 = vunpack.c.l.bf16 %v1476
      %v1537 = vunpack.c.h.bf16 %v1476
      %v1538 = vunpack.c.l.bf16 %v1477
      %v1539 = vunpack.c.h.bf16 %v1477
      %v1540 = vunpack.c.l.bf16 %v1478
      %v1541 = vunpack.c.h.bf16 %v1478
      %v1542 = vunpack.c.l.bf16 %v1479
      %v1543 = vunpack.c.h.bf16 %v1479
      %v1544 = vunpack.c.l.bf16 %v1480
      %v1545 = vunpack.c.h.bf16 %v1480
      %v1546 = vunpack.c.l.bf16 %v1481
      %v1547 = vunpack.c.h.bf16 %v1481
      %v1548 = vunpack.c.l.bf16 %v1482
      %v1549 = vunpack.c.h.bf16 %v1482
      %v1550 = vunpack.c.l.bf16 %v1483
      %v1551 = vunpack.c.h.bf16 %v1483
      %v1552 = vunpack.c.l.bf16 %v1484
      %v1553 = vunpack.c.h.bf16 %v1484
      %v1554 = vunpack.c.l.bf16 %v1485
      %v1555 = vunpack.c.h.bf16 %v1485
      %v1556 = vunpack.c.l.bf16 %v1486
      %v1557 = vunpack.c.h.bf16 %v1486
      %v1558 = vunpack.c.l.bf16 %v1487
      %v1559 = vunpack.c.h.bf16 %v1487
      %v1560 = vunpack.c.l.bf16 %v1488
      %v1561 = vunpack.c.h.bf16 %v1488
      %v1562 = vunpack.c.l.bf16 %v1489
      %v1563 = vunpack.c.h.bf16 %v1489
      %v1564 = vunpack.c.l.bf16 %v1490
      %v1565 = vunpack.c.h.bf16 %v1490
      %v1566 = vunpack.c.l.bf16 %v1491
      %v1567 = vunpack.c.h.bf16 %v1491
      %v1568 = vunpack.c.l.bf16 %v1492
      %v1569 = vunpack.c.h.bf16 %v1492
      %v1570 = vunpack.c.l.bf16 %v1493
      %v1571 = vunpack.c.h.bf16 %v1493
      %v1572 = vunpack.c.l.bf16 %v1494
      %v1573 = vunpack.c.h.bf16 %v1494
      %v1574 = vunpack.c.l.bf16 %v1500
      %v1575 = vmul.f32 %v1502, %v1574
      %v1576 = vmul.f32 %v1503, %v1574
      %v1577 = vmul.f32 %v1504, %v1574
      %v1578 = vmul.f32 %v1505, %v1574
      %v1579 = vmul.f32 %v1506, %v1574
      %v1580 = vmul.f32 %v1507, %v1574
      %v1581 = vmul.f32 %v1508, %v1574
      %v1582 = vmul.f32 %v1509, %v1574
      %v1583 = vmul.f32 %v1510, %v1574
      %v1584 = vmul.f32 %v1511, %v1574
      %v1585 = vmul.f32 %v1512, %v1574
      %v1586 = vmul.f32 %v1513, %v1574
      %v1587 = vmul.f32 %v1514, %v1574
      %v1588 = vmul.f32 %v1515, %v1574
      %v1589 = vmul.f32 %v1516, %v1574
      %v1590 = vmul.f32 %v1517, %v1574
      %v1591 = vmul.f32 %v1518, %v1574
      %v1592 = vmul.f32 %v1519, %v1574
      %v1593 = vmul.f32 %v1520, %v1574
      %v1594 = vmul.f32 %v1521, %v1574
      %v1595 = vmul.f32 %v1522, %v1574
      %v1596 = vmul.f32 %v1523, %v1574
      %v1597 = vmul.f32 %v1524, %v1574
      %v1598 = vmul.f32 %v1525, %v1574
      %v1599 = vmul.f32 %v1526, %v1574
      %v1600 = vmul.f32 %v1527, %v1574
      %v1601 = vmul.f32 %v1528, %v1574
      %v1602 = vmul.f32 %v1529, %v1574
      %v1603 = vmul.f32 %v1530, %v1574
      %v1604 = vmul.f32 %v1531, %v1574
      %v1605 = vmul.f32 %v1532, %v1574
      %v1606 = vmul.f32 %v1533, %v1574
      %v1607 = vmul.f32 %v1534, %v1574
      %v1608 = vmul.f32 %v1535, %v1574
      %v1609 = vmul.f32 %v1536, %v1574
      %v1610 = vmul.f32 %v1537, %v1574
      %v1611 = vmul.f32 %v1538, %v1574
      %v1612 = vmul.f32 %v1539, %v1574
      %v1613 = vmul.f32 %v1540, %v1574
      %v1614 = vmul.f32 %v1541, %v1574
      %v1615 = vmul.f32 %v1542, %v1574
      %v1616 = vmul.f32 %v1543, %v1574
      %v1617 = vmul.f32 %v1544, %v1574
      %v1618 = vmul.f32 %v1545, %v1574
      %v1619 = vmul.f32 %v1546, %v1574
      %v1620 = vmul.f32 %v1547, %v1574
      %v1621 = vmul.f32 %v1548, %v1574
      %v1622 = vmul.f32 %v1549, %v1574
      %v1623 = vmul.f32 %v1550, %v1574
      %v1624 = vmul.f32 %v1551, %v1574
      %v1625 = vmul.f32 %v1552, %v1574
      %v1626 = vmul.f32 %v1553, %v1574
      %v1627 = vmul.f32 %v1554, %v1574
      %v1628 = vmul.f32 %v1555, %v1574
      %v1629 = vmul.f32 %v1556, %v1574
      %v1630 = vmul.f32 %v1557, %v1574
      %v1631 = vmul.f32 %v1558, %v1574
      %v1632 = vmul.f32 %v1559, %v1574
      %v1633 = vmul.f32 %v1560, %v1574
      %v1634 = vmul.f32 %v1561, %v1574
      %v1635 = vmul.f32 %v1562, %v1574
      %v1636 = vmul.f32 %v1563, %v1574
      %v1637 = vmul.f32 %v1564, %v1574
      %v1638 = vmul.f32 %v1565, %v1574
      %v1639 = vmul.f32 %v1566, %v1574
      %v1640 = vmul.f32 %v1567, %v1574
      %v1641 = vmul.f32 %v1568, %v1574
      %v1642 = vmul.f32 %v1569, %v1574
      %v1643 = vmul.f32 %v1570, %v1574
      %v1644 = vmul.f32 %v1571, %v1574
      %v1645 = vmul.f32 %v1572, %v1574
      %v1646 = vmul.f32 %v1573, %v1574
      %v1647 = vpack.c.bf16 %v1576, %v1575
      %v1648 = vpack.c.bf16 %v1578, %v1577
      %v1649 = vpack.c.bf16 %v1580, %v1579
      %v1650 = vpack.c.bf16 %v1582, %v1581
      %v1651 = vpack.c.bf16 %v1584, %v1583
      %v1652 = vpack.c.bf16 %v1586, %v1585
      %v1653 = vpack.c.bf16 %v1588, %v1587
      %v1654 = vpack.c.bf16 %v1590, %v1589
      %v1655 = vpack.c.bf16 %v1592, %v1591
      %v1656 = vpack.c.bf16 %v1594, %v1593
      %v1657 = vpack.c.bf16 %v1596, %v1595
      %v1658 = vpack.c.bf16 %v1598, %v1597
      %v1659 = vpack.c.bf16 %v1600, %v1599
      %v1660 = vpack.c.bf16 %v1602, %v1601
      %v1661 = vpack.c.bf16 %v1604, %v1603
      %v1662 = vpack.c.bf16 %v1606, %v1605
      %v1663 = vpack.c.bf16 %v1608, %v1607
      %v1664 = vpack.c.bf16 %v1610, %v1609
      %v1665 = vpack.c.bf16 %v1612, %v1611
      %v1666 = vpack.c.bf16 %v1614, %v1613
      %v1667 = vpack.c.bf16 %v1616, %v1615
      %v1668 = vpack.c.bf16 %v1618, %v1617
      %v1669 = vpack.c.bf16 %v1620, %v1619
      %v1670 = vpack.c.bf16 %v1622, %v1621
      %v1671 = vpack.c.bf16 %v1624, %v1623
      %v1672 = vpack.c.bf16 %v1626, %v1625
      %v1673 = vpack.c.bf16 %v1628, %v1627
      %v1674 = vpack.c.bf16 %v1630, %v1629
      %v1675 = vpack.c.bf16 %v1632, %v1631
      %v1676 = vpack.c.bf16 %v1634, %v1633
      %v1677 = vpack.c.bf16 %v1636, %v1635
      %v1678 = vpack.c.bf16 %v1638, %v1637
      %v1679 = vpack.c.bf16 %v1640, %v1639
      %v1680 = vpack.c.bf16 %v1642, %v1641
      %v1681 = vpack.c.bf16 %v1644, %v1643
      %v1682 = vpack.c.bf16 %v1646, %v1645
      %v1683 = vunpack.c.l.bf16 %v1422
      %v1684 = vunpack.c.h.bf16 %v1422
      %v1685 = vunpack.c.l.bf16 %v1423
      %v1686 = vunpack.c.h.bf16 %v1423
      %v1687 = vunpack.c.l.bf16 %v1424
      %v1688 = vunpack.c.h.bf16 %v1424
      %v1689 = vunpack.c.l.bf16 %v1425
      %v1690 = vunpack.c.h.bf16 %v1425
      %v1691 = vunpack.c.l.bf16 %v1426
      %v1692 = vunpack.c.h.bf16 %v1426
      %v1693 = vunpack.c.l.bf16 %v1427
      %v1694 = vunpack.c.h.bf16 %v1427
      %v1695 = vunpack.c.l.bf16 %v1428
      %v1696 = vunpack.c.h.bf16 %v1428
      %v1697 = vunpack.c.l.bf16 %v1429
      %v1698 = vunpack.c.h.bf16 %v1429
      %v1699 = vunpack.c.l.bf16 %v1430
      %v1700 = vunpack.c.h.bf16 %v1430
      %v1701 = vunpack.c.l.bf16 %v1431
      %v1702 = vunpack.c.h.bf16 %v1431
      %v1703 = vunpack.c.l.bf16 %v1432
      %v1704 = vunpack.c.h.bf16 %v1432
      %v1705 = vunpack.c.l.bf16 %v1433
      %v1706 = vunpack.c.h.bf16 %v1433
      %v1707 = vunpack.c.l.bf16 %v1434
      %v1708 = vunpack.c.h.bf16 %v1434
      %v1709 = vunpack.c.l.bf16 %v1435
      %v1710 = vunpack.c.h.bf16 %v1435
      %v1711 = vunpack.c.l.bf16 %v1436
      %v1712 = vunpack.c.h.bf16 %v1436
      %v1713 = vunpack.c.l.bf16 %v1437
      %v1714 = vunpack.c.h.bf16 %v1437
      %v1715 = vunpack.c.l.bf16 %v1438
      %v1716 = vunpack.c.h.bf16 %v1438
      %v1717 = vunpack.c.l.bf16 %v1439
      %v1718 = vunpack.c.h.bf16 %v1439
      %v1719 = vunpack.c.l.bf16 %v1440
      %v1720 = vunpack.c.h.bf16 %v1440
      %v1721 = vunpack.c.l.bf16 %v1441
      %v1722 = vunpack.c.h.bf16 %v1441
      %v1723 = vunpack.c.l.bf16 %v1442
      %v1724 = vunpack.c.h.bf16 %v1442
      %v1725 = vunpack.c.l.bf16 %v1443
      %v1726 = vunpack.c.h.bf16 %v1443
      %v1727 = vunpack.c.l.bf16 %v1444
      %v1728 = vunpack.c.h.bf16 %v1444
      %v1729 = vunpack.c.l.bf16 %v1445
      %v1730 = vunpack.c.h.bf16 %v1445
      %v1731 = vunpack.c.l.bf16 %v1446
      %v1732 = vunpack.c.h.bf16 %v1446
      %v1733 = vunpack.c.l.bf16 %v1447
      %v1734 = vunpack.c.h.bf16 %v1447
      %v1735 = vunpack.c.l.bf16 %v1448
      %v1736 = vunpack.c.h.bf16 %v1448
      %v1737 = vunpack.c.l.bf16 %v1449
      %v1738 = vunpack.c.h.bf16 %v1449
      %v1739 = vunpack.c.l.bf16 %v1450
      %v1740 = vunpack.c.h.bf16 %v1450
      %v1741 = vunpack.c.l.bf16 %v1451
      %v1742 = vunpack.c.h.bf16 %v1451
      %v1743 = vunpack.c.l.bf16 %v1452
      %v1744 = vunpack.c.h.bf16 %v1452
      %v1745 = vunpack.c.l.bf16 %v1453
      %v1746 = vunpack.c.h.bf16 %v1453
      %v1747 = vunpack.c.l.bf16 %v1454
      %v1748 = vunpack.c.h.bf16 %v1454
      %v1749 = vunpack.c.l.bf16 %v1455
      %v1750 = vunpack.c.h.bf16 %v1455
      %v1751 = vunpack.c.l.bf16 %v1456
      %v1752 = vunpack.c.h.bf16 %v1456
      %v1753 = vunpack.c.l.bf16 %v1457
      %v1754 = vunpack.c.h.bf16 %v1457
      %v1755 = vunpack.c.l.bf16 %v1647
      %v1756 = vunpack.c.h.bf16 %v1647
      %v1757 = vunpack.c.l.bf16 %v1648
      %v1758 = vunpack.c.h.bf16 %v1648
      %v1759 = vunpack.c.l.bf16 %v1649
      %v1760 = vunpack.c.h.bf16 %v1649
      %v1761 = vunpack.c.l.bf16 %v1650
      %v1762 = vunpack.c.h.bf16 %v1650
      %v1763 = vunpack.c.l.bf16 %v1651
      %v1764 = vunpack.c.h.bf16 %v1651
      %v1765 = vunpack.c.l.bf16 %v1652
      %v1766 = vunpack.c.h.bf16 %v1652
      %v1767 = vunpack.c.l.bf16 %v1653
      %v1768 = vunpack.c.h.bf16 %v1653
      %v1769 = vunpack.c.l.bf16 %v1654
      %v1770 = vunpack.c.h.bf16 %v1654
      %v1771 = vunpack.c.l.bf16 %v1655
      %v1772 = vunpack.c.h.bf16 %v1655
      %v1773 = vunpack.c.l.bf16 %v1656
      %v1774 = vunpack.c.h.bf16 %v1656
      %v1775 = vunpack.c.l.bf16 %v1657
      %v1776 = vunpack.c.h.bf16 %v1657
      %v1777 = vunpack.c.l.bf16 %v1658
      %v1778 = vunpack.c.h.bf16 %v1658
      %v1779 = vunpack.c.l.bf16 %v1659
      %v1780 = vunpack.c.h.bf16 %v1659
      %v1781 = vunpack.c.l.bf16 %v1660
      %v1782 = vunpack.c.h.bf16 %v1660
      %v1783 = vunpack.c.l.bf16 %v1661
      %v1784 = vunpack.c.h.bf16 %v1661
      %v1785 = vunpack.c.l.bf16 %v1662
      %v1786 = vunpack.c.h.bf16 %v1662
      %v1787 = vunpack.c.l.bf16 %v1663
      %v1788 = vunpack.c.h.bf16 %v1663
      %v1789 = vunpack.c.l.bf16 %v1664
      %v1790 = vunpack.c.h.bf16 %v1664
      %v1791 = vunpack.c.l.bf16 %v1665
      %v1792 = vunpack.c.h.bf16 %v1665
      %v1793 = vunpack.c.l.bf16 %v1666
      %v1794 = vunpack.c.h.bf16 %v1666
      %v1795 = vunpack.c.l.bf16 %v1667
      %v1796 = vunpack.c.h.bf16 %v1667
      %v1797 = vunpack.c.l.bf16 %v1668
      %v1798 = vunpack.c.h.bf16 %v1668
      %v1799 = vunpack.c.l.bf16 %v1669
      %v1800 = vunpack.c.h.bf16 %v1669
      %v1801 = vunpack.c.l.bf16 %v1670
      %v1802 = vunpack.c.h.bf16 %v1670
      %v1803 = vunpack.c.l.bf16 %v1671
      %v1804 = vunpack.c.h.bf16 %v1671
      %v1805 = vunpack.c.l.bf16 %v1672
      %v1806 = vunpack.c.h.bf16 %v1672
      %v1807 = vunpack.c.l.bf16 %v1673
      %v1808 = vunpack.c.h.bf16 %v1673
      %v1809 = vunpack.c.l.bf16 %v1674
      %v1810 = vunpack.c.h.bf16 %v1674
      %v1811 = vunpack.c.l.bf16 %v1675
      %v1812 = vunpack.c.h.bf16 %v1675
      %v1813 = vunpack.c.l.bf16 %v1676
      %v1814 = vunpack.c.h.bf16 %v1676
      %v1815 = vunpack.c.l.bf16 %v1677
      %v1816 = vunpack.c.h.bf16 %v1677
      %v1817 = vunpack.c.l.bf16 %v1678
      %v1818 = vunpack.c.h.bf16 %v1678
      %v1819 = vunpack.c.l.bf16 %v1679
      %v1820 = vunpack.c.h.bf16 %v1679
      %v1821 = vunpack.c.l.bf16 %v1680
      %v1822 = vunpack.c.h.bf16 %v1680
      %v1823 = vunpack.c.l.bf16 %v1681
      %v1824 = vunpack.c.h.bf16 %v1681
      %v1825 = vunpack.c.l.bf16 %v1682
      %v1826 = vunpack.c.h.bf16 %v1682
      %v1827 = vadd.f32 %v1683, %v1755
      %v1828 = vadd.f32 %v1684, %v1756
      %v1829 = vadd.f32 %v1685, %v1757
      %v1830 = vadd.f32 %v1686, %v1758
      %v1831 = vadd.f32 %v1687, %v1759
      %v1832 = vadd.f32 %v1688, %v1760
      %v1833 = vadd.f32 %v1689, %v1761
      %v1834 = vadd.f32 %v1690, %v1762
      %v1835 = vadd.f32 %v1691, %v1763
      %v1836 = vadd.f32 %v1692, %v1764
      %v1837 = vadd.f32 %v1693, %v1765
      %v1838 = vadd.f32 %v1694, %v1766
      %v1839 = vadd.f32 %v1695, %v1767
      %v1840 = vadd.f32 %v1696, %v1768
      %v1841 = vadd.f32 %v1697, %v1769
      %v1842 = vadd.f32 %v1698, %v1770
      %v1843 = vadd.f32 %v1699, %v1771
      %v1844 = vadd.f32 %v1700, %v1772
      %v1845 = vadd.f32 %v1701, %v1773
      %v1846 = vadd.f32 %v1702, %v1774
      %v1847 = vadd.f32 %v1703, %v1775
      %v1848 = vadd.f32 %v1704, %v1776
      %v1849 = vadd.f32 %v1705, %v1777
      %v1850 = vadd.f32 %v1706, %v1778
      %v1851 = vadd.f32 %v1707, %v1779
      %v1852 = vadd.f32 %v1708, %v1780
      %v1853 = vadd.f32 %v1709, %v1781
      %v1854 = vadd.f32 %v1710, %v1782
      %v1855 = vadd.f32 %v1711, %v1783
      %v1856 = vadd.f32 %v1712, %v1784
      %v1857 = vadd.f32 %v1713, %v1785
      %v1858 = vadd.f32 %v1714, %v1786
      %v1859 = vadd.f32 %v1715, %v1787
      %v1860 = vadd.f32 %v1716, %v1788
      %v1861 = vadd.f32 %v1717, %v1789
      %v1862 = vadd.f32 %v1718, %v1790
      %v1863 = vadd.f32 %v1719, %v1791
      %v1864 = vadd.f32 %v1720, %v1792
      %v1865 = vadd.f32 %v1721, %v1793
      %v1866 = vadd.f32 %v1722, %v1794
      %v1867 = vadd.f32 %v1723, %v1795
      %v1868 = vadd.f32 %v1724, %v1796
      %v1869 = vadd.f32 %v1725, %v1797
      %v1870 = vadd.f32 %v1726, %v1798
      %v1871 = vadd.f32 %v1727, %v1799
      %v1872 = vadd.f32 %v1728, %v1800
      %v1873 = vadd.f32 %v1729, %v1801
      %v1874 = vadd.f32 %v1730, %v1802
      %v1875 = vadd.f32 %v1731, %v1803
      %v1876 = vadd.f32 %v1732, %v1804
      %v1877 = vadd.f32 %v1733, %v1805
      %v1878 = vadd.f32 %v1734, %v1806
      %v1879 = vadd.f32 %v1735, %v1807
      %v1880 = vadd.f32 %v1736, %v1808
      %v1881 = vadd.f32 %v1737, %v1809
      %v1882 = vadd.f32 %v1738, %v1810
      %v1883 = vadd.f32 %v1739, %v1811
      %v1884 = vadd.f32 %v1740, %v1812
      %v1885 = vadd.f32 %v1741, %v1813
      %v1886 = vadd.f32 %v1742, %v1814
      %v1887 = vadd.f32 %v1743, %v1815
      %v1888 = vadd.f32 %v1744, %v1816
      %v1889 = vadd.f32 %v1745, %v1817
      %v1890 = vadd.f32 %v1746, %v1818
      %v1891 = vadd.f32 %v1747, %v1819
      %v1892 = vadd.f32 %v1748, %v1820
      %v1893 = vadd.f32 %v1749, %v1821
      %v1894 = vadd.f32 %v1750, %v1822
      %v1895 = vadd.f32 %v1751, %v1823
      %v1896 = vadd.f32 %v1752, %v1824
      %v1897 = vadd.f32 %v1753, %v1825
      %v1898 = vadd.f32 %v1754, %v1826
      %v1899 = vpack.c.bf16 %v1831, %v1827
      %v1900 = vpack.c.bf16 %v1832, %v1828
      %v1901 = vpack.c.bf16 %v1833, %v1829
      %v1902 = vpack.c.bf16 %v1834, %v1830
      %v1903 = vpack.c.bf16 %v1839, %v1835
      %v1904 = vpack.c.bf16 %v1840, %v1836
      %v1905 = vpack.c.bf16 %v1841, %v1837
      %v1906 = vpack.c.bf16 %v1842, %v1838
      %v1907 = vpack.c.bf16 %v1847, %v1843
      %v1908 = vpack.c.bf16 %v1848, %v1844
      %v1909 = vpack.c.bf16 %v1849, %v1845
      %v1910 = vpack.c.bf16 %v1850, %v1846
      %v1911 = vpack.c.bf16 %v1855, %v1851
      %v1912 = vpack.c.bf16 %v1856, %v1852
      %v1913 = vpack.c.bf16 %v1857, %v1853
      %v1914 = vpack.c.bf16 %v1858, %v1854
      %v1915 = vpack.c.bf16 %v1863, %v1859
      %v1916 = vpack.c.bf16 %v1864, %v1860
      %v1917 = vpack.c.bf16 %v1865, %v1861
      %v1918 = vpack.c.bf16 %v1866, %v1862
      %v1919 = vpack.c.bf16 %v1871, %v1867
      %v1920 = vpack.c.bf16 %v1872, %v1868
      %v1921 = vpack.c.bf16 %v1873, %v1869
      %v1922 = vpack.c.bf16 %v1874, %v1870
      %v1923 = vpack.c.bf16 %v1879, %v1875
      %v1924 = vpack.c.bf16 %v1880, %v1876
      %v1925 = vpack.c.bf16 %v1881, %v1877
      %v1926 = vpack.c.bf16 %v1882, %v1878
      %v1927 = vpack.c.bf16 %v1887, %v1883
      %v1928 = vpack.c.bf16 %v1888, %v1884
      %v1929 = vpack.c.bf16 %v1889, %v1885
      %v1930 = vpack.c.bf16 %v1890, %v1886
      %v1931 = vpack.c.bf16 %v1895, %v1891
      %v1932 = vpack.c.bf16 %v1896, %v1892
      %v1933 = vpack.c.bf16 %v1897, %v1893
      %v1934 = vpack.c.bf16 %v1898, %v1894
      %v1935 = vld [vmem:[#allocation9] sm:$0xff]
      %v1936 = vld [vmem:[#allocation9 + $0x8] sm:$0xff]
      %v1939 = vunpack.c.l.b16 %v1935
      %v1940 = vunpack.c.h.b16 %v1935
      %v1941 = vunpack.c.l.b16 %v1936
      %v1942 = vunpack.c.h.b16 %v1936
      %v1943 = vpack.c.b16 %v1941, %v1939
      %v1944 = vpack.c.b16 %v1942, %v1940
      %vm1946 = vcmask 130048
      %v1948 = vsel %vm1946, %v1944, 0
      %1950 = vmatpush.bf16.msra.mxu0 %v1927
      %1951 = vmatpush.bf16.msra.mxu0 %v1923
      %1952 = vmatpush.bf16.msra.mxu0 %v1919
      %1953 = vmatpush.bf16.msra.mxu0 %v1915
      %1954 = vmatpush.bf16.msra.mxu0 %v1911
      %1955 = vmatpush.bf16.msra.mxu0 %v1907
      %1956 = vmatpush.bf16.msra.mxu0 %v1903
      %1957 = vmatpush.bf16.msra.mxu0 %v1899
      %1958 = vmatmul.bf16.gmra.mxu0 %v1943
      %v1959 = vpop.f32.mrf.mxu0
      %v1960 = vadd.f32 0.0, %v1959
      %v1961 = vpop.f32.mrf.mxu0
      %v1962 = vadd.f32 0.0, %v1961
      %1963 = vdwg.mxu0
      %1964 = vmatpush.bf16.msra.mxu0 0
      %1965 = vmatpush.bf16.msra.mxu0 0
      %1966 = vmatpush.bf16.msra.mxu0 0
      %1967 = vmatpush.bf16.msra.mxu0 0
      %1968 = vmatpush.bf16.msra.mxu0 0
      %1969 = vmatpush.bf16.msra.mxu0 0
      %1970 = vmatpush.bf16.msra.mxu0 0
      %1971 = vmatpush.bf16.msra.mxu0 %v1931
      %1972 = vmatmul.bf16.gmra.mxu0 %v1948
      %v1973 = vpop.f32.mrf.mxu0
      %v1974 = vadd.f32 %v1960, %v1973
      %v1975 = vpop.f32.mrf.mxu0
      %v1976 = vadd.f32 %v1962, %v1975
      %1977 = vdwg.mxu0
      %1978 = vmatpush.bf16.msra.mxu0 %v1928
      %1979 = vmatpush.bf16.msra.mxu0 %v1924
      %1980 = vmatpush.bf16.msra.mxu0 %v1920
      %1981 = vmatpush.bf16.msra.mxu0 %v1916
      %1982 = vmatpush.bf16.msra.mxu0 %v1912
      %1983 = vmatpush.bf16.msra.mxu0 %v1908
      %1984 = vmatpush.bf16.msra.mxu0 %v1904
      %1985 = vmatpush.bf16.msra.mxu0 %v1900
      %1986 = vmatmul.bf16.gmra.mxu0 %v1943
      %v1987 = vpop.f32.mrf.mxu0
      %v1988 = vadd.f32 0.0, %v1987
      %v1989 = vpop.f32.mrf.mxu0
      %v1990 = vadd.f32 0.0, %v1989
      %1991 = vdwg.mxu0
      %1992 = vmatpush.bf16.msra.mxu0 0
      %1993 = vmatpush.bf16.msra.mxu0 0
      %1994 = vmatpush.bf16.msra.mxu0 0
      %1995 = vmatpush.bf16.msra.mxu0 0
      %1996 = vmatpush.bf16.msra.mxu0 0
      %1997 = vmatpush.bf16.msra.mxu0 0
      %1998 = vmatpush.bf16.msra.mxu0 0
      %1999 = vmatpush.bf16.msra.mxu0 %v1932
      %2000 = vmatmul.bf16.gmra.mxu0 %v1948
      %v2001 = vpop.f32.mrf.mxu0
      %v2002 = vadd.f32 %v1988, %v2001
      %v2003 = vpop.f32.mrf.mxu0
      %v2004 = vadd.f32 %v1990, %v2003
      %2005 = vdwg.mxu0
      %2006 = vmatpush.bf16.msra.mxu0 %v1929
      %2007 = vmatpush.bf16.msra.mxu0 %v1925
      %2008 = vmatpush.bf16.msra.mxu0 %v1921
      %2009 = vmatpush.bf16.msra.mxu0 %v1917
      %2010 = vmatpush.bf16.msra.mxu0 %v1913
      %2011 = vmatpush.bf16.msra.mxu0 %v1909
      %2012 = vmatpush.bf16.msra.mxu0 %v1905
      %2013 = vmatpush.bf16.msra.mxu0 %v1901
      %2014 = vmatmul.bf16.gmra.mxu0 %v1943
      %v2015 = vpop.f32.mrf.mxu0
      %v2016 = vadd.f32 0.0, %v2015
      %v2017 = vpop.f32.mrf.mxu0
      %v2018 = vadd.f32 0.0, %v2017
      %2019 = vdwg.mxu0
      %2020 = vmatpush.bf16.msra.mxu0 0
      %2021 = vmatpush.bf16.msra.mxu0 0
      %2022 = vmatpush.bf16.msra.mxu0 0
      %2023 = vmatpush.bf16.msra.mxu0 0
      %2024 = vmatpush.bf16.msra.mxu0 0
      %2025 = vmatpush.bf16.msra.mxu0 0
      %2026 = vmatpush.bf16.msra.mxu0 0
      %2027 = vmatpush.bf16.msra.mxu0 %v1933
      %2028 = vmatmul.bf16.gmra.mxu0 %v1948
      %v2029 = vpop.f32.mrf.mxu0
      %v2030 = vadd.f32 %v2016, %v2029
      %v2031 = vpop.f32.mrf.mxu0
      %v2032 = vadd.f32 %v2018, %v2031
      %2033 = vdwg.mxu0
      %2034 = vmatpush.bf16.msra.mxu0 %v1930
      %2035 = vmatpush.bf16.msra.mxu0 %v1926
      %2036 = vmatpush.bf16.msra.mxu0 %v1922
      %2037 = vmatpush.bf16.msra.mxu0 %v1918
      %2038 = vmatpush.bf16.msra.mxu0 %v1914
      %2039 = vmatpush.bf16.msra.mxu0 %v1910
      %2040 = vmatpush.bf16.msra.mxu0 %v1906
      %2041 = vmatpush.bf16.msra.mxu0 %v1902
      %2042 = vmatmul.bf16.gmra.mxu0 %v1943
      %v2043 = vpop.f32.mrf.mxu0
      %v2044 = vadd.f32 0.0, %v2043
      %v2045 = vpop.f32.mrf.mxu0
      %v2046 = vadd.f32 0.0, %v2045
      %2047 = vdwg.mxu0
      %2048 = vmatpush.bf16.msra.mxu0 0
      %2049 = vmatpush.bf16.msra.mxu0 0
      %2050 = vmatpush.bf16.msra.mxu0 0
      %2051 = vmatpush.bf16.msra.mxu0 0
      %2052 = vmatpush.bf16.msra.mxu0 0
      %2053 = vmatpush.bf16.msra.mxu0 0
      %2054 = vmatpush.bf16.msra.mxu0 0
      %2055 = vmatpush.bf16.msra.mxu0 %v1934
      %2056 = vmatmul.bf16.gmra.mxu0 %v1948
      %v2057 = vpop.f32.mrf.mxu0
      %v2058 = vadd.f32 %v2044, %v2057
      %v2059 = vpop.f32.mrf.mxu0
      %v2060 = vadd.f32 %v2046, %v2059
      %2061 = vdwg.mxu0
      %v2062 = vmax.f32 %v1974, 0.0
      %v2063 = vmax.f32 %v2002, 0.0
      %v2064 = vmax.f32 %v2030, 0.0
      %v2065 = vmax.f32 %v2058, 0.0
      %v2066 = vmax.f32 %v1976, 0.0
      %v2067 = vmax.f32 %v2004, 0.0
      %v2068 = vmax.f32 %v2032, 0.0
      %v2069 = vmax.f32 %v2060, 0.0
      %v2070 = vadd.f32 %v2062, %v2066
      %v2071 = vrot.slane %v2070, 4
      %v2072 = vadd.f32 %v2070, %v2071
      %v2073 = vrot.slane %v2072, 2
      %v2074 = vadd.f32 %v2072, %v2073
      %v2075 = vrot.slane %v2074, 1
      %v2076 = vadd.f32 %v2074, %v2075
      %v2077 = vadd.f32 %v2063, %v2067
      %v2078 = vrot.slane %v2077, 4
      %v2079 = vadd.f32 %v2077, %v2078
      %v2080 = vrot.slane %v2079, 2
      %v2081 = vadd.f32 %v2079, %v2080
      %v2082 = vrot.slane %v2081, 1
      %v2083 = vadd.f32 %v2081, %v2082
      %v2084 = vadd.f32 %v2064, %v2068
      %v2085 = vrot.slane %v2084, 4
      %v2086 = vadd.f32 %v2084, %v2085
      %v2087 = vrot.slane %v2086, 2
      %v2088 = vadd.f32 %v2086, %v2087
      %v2089 = vrot.slane %v2088, 1
      %v2090 = vadd.f32 %v2088, %v2089
      %v2091 = vadd.f32 %v2065, %v2069
      %v2092 = vrot.slane %v2091, 4
      %v2093 = vadd.f32 %v2091, %v2092
      %v2094 = vrot.slane %v2093, 2
      %v2095 = vadd.f32 %v2093, %v2094
      %v2096 = vrot.slane %v2095, 1
      %v2097 = vadd.f32 %v2095, %v2096
      %v2098 = vrcp.pop 16.0
      %v2099 = vmul.f32 16.0, %v2098
      %v2100 = vsub.f32 1.0, %v2099
      %v2101 = vmul.f32 %v2098, %v2100
      %v2102 = vadd.f32 %v2098, %v2101
      %vm2103 = vweird.f32 %v2098
      %v2104 = vsel %vm2103, %v2098, %v2102
      %v2105 = vmul.f32 %v2076, %v2104
      %v2106 = vmul.f32 %v2083, %v2104
      %v2107 = vmul.f32 %v2090, %v2104
      %v2108 = vmul.f32 %v2097, %v2104
      %v2113 = vrot.slane %v2106, 7
      %v2114 = vrot.slane %v2107, 6
      %v2115 = vrot.slane %v2108, 5
      %vm2116 = vcmask 1040384
      %v2117 = vsel %vm2116, %v2105, %v2113
      %vm2118 = vcmask 1042434
      %v2119 = vsel %vm2118, %v2114, %v2115
      %vm2120 = vcmask 1041408
      %v2121 = vsel %vm2120, %v2117, %v2119
      %v2123 = vlaneseq
      %vm2124 = vcmp.ge.s32.totalorder %v2123, 0
      %vm2125 = vcmp.lt.s32.totalorder %v2123, 512
      %vm2126 = vmand %vm2124, %vm2125
      %2127 = vst.msk [vmem:[#allocation3] ss:$2 sm:$0xf] %vm2126, %v2121
      %v2128 = vld [vmem:[#allocation10] sm:$0xff]
      %v2129 = vld [vmem:[#allocation10 + $0x8] sm:$0xff]
      %v2130 = vld [vmem:[#allocation10 + $0x10] sm:$0xff]
      %v2131 = vld [vmem:[#allocation10 + $0x18] sm:$0xff]
      %v2132 = vld [vmem:[#allocation10 + $0x20] sm:$0xff]
      %v2133 = vld [vmem:[#allocation10 + $0x28] sm:$0xff]
      %v2134 = vld [vmem:[#allocation10 + $0x30] sm:$0xff]
      %v2135 = vld [vmem:[#allocation10 + $0x38] sm:$0xff]
      %v2136 = vld [vmem:[#allocation10 + $0x40] sm:$0xff]
      %v2137 = vld [vmem:[#allocation10 + $0x48] sm:$0xff]
      %v2138 = vld [vmem:[#allocation10 + $0x50] sm:$0xff]
      %v2139 = vld [vmem:[#allocation10 + $0x58] sm:$0xff]
      %v2140 = vld [vmem:[#allocation10 + $0x60] sm:$0xff]
      %v2141 = vld [vmem:[#allocation10 + $0x68] sm:$0xff]
      %v2142 = vld [vmem:[#allocation10 + $0x70] sm:$0xff]
      %v2143 = vld [vmem:[#allocation10 + $0x78] sm:$0xff]
      %v2144 = vld [vmem:[#allocation10 + $0x80] sm:$0xff]
      %v2145 = vld [vmem:[#allocation10 + $0x88] sm:$0xff]
      %v2146 = vld [vmem:[#allocation10 + $0x90] sm:$0xff]
      %v2147 = vld [vmem:[#allocation10 + $0x98] sm:$0xff]
      %v2148 = vld [vmem:[#allocation10 + $0xa0] sm:$0xff]
      %v2149 = vld [vmem:[#allocation10 + $0xa8] sm:$0xff]
      %v2150 = vld [vmem:[#allocation10 + $0xb0] sm:$0xff]
      %v2151 = vld [vmem:[#allocation10 + $0xb8] sm:$0xff]
      %v2152 = vld [vmem:[#allocation10 + $0xc0] sm:$0xff]
      %v2153 = vld [vmem:[#allocation10 + $0xc8] sm:$0xff]
      %v2154 = vld [vmem:[#allocation10 + $0xd0] sm:$0xff]
      %v2155 = vld [vmem:[#allocation10 + $0xd8] sm:$0xff]
      %v2156 = vld [vmem:[#allocation10 + $0xe0] sm:$0xff]
      %v2157 = vld [vmem:[#allocation10 + $0xe8] sm:$0xff]
      %v2158 = vld [vmem:[#allocation10 + $0xf0] sm:$0xff]
      %v2159 = vld [vmem:[#allocation10 + $0xf8] sm:$0xff]
      %v2160 = vld [vmem:[#allocation10 + $0x100] sm:$0xff]
      %v2161 = vld [vmem:[#allocation10 + $0x108] sm:$0xff]
      %v2162 = vld [vmem:[#allocation10 + $0x110] sm:$0xff]
      %v2163 = vld [vmem:[#allocation10 + $0x118] sm:$0xff]
      %v2165 = vshrl.u32 %v540, 16
      %s2168 = vtos %v2165
      %v2169 = vstv %s2168
      %v2170 = vpack.i.b16 %v2169, %v2169
      %v2172 = vunpack.c.l.bf16 %v2128
      %v2173 = vunpack.c.h.bf16 %v2128
      %v2174 = vunpack.c.l.bf16 %v2129
      %v2175 = vunpack.c.h.bf16 %v2129
      %v2176 = vunpack.c.l.bf16 %v2130
      %v2177 = vunpack.c.h.bf16 %v2130
      %v2178 = vunpack.c.l.bf16 %v2131
      %v2179 = vunpack.c.h.bf16 %v2131
      %v2180 = vunpack.c.l.bf16 %v2132
      %v2181 = vunpack.c.h.bf16 %v2132
      %v2182 = vunpack.c.l.bf16 %v2133
      %v2183 = vunpack.c.h.bf16 %v2133
      %v2184 = vunpack.c.l.bf16 %v2134
      %v2185 = vunpack.c.h.bf16 %v2134
      %v2186 = vunpack.c.l.bf16 %v2135
      %v2187 = vunpack.c.h.bf16 %v2135
      %v2188 = vunpack.c.l.bf16 %v2136
      %v2189 = vunpack.c.h.bf16 %v2136
      %v2190 = vunpack.c.l.bf16 %v2137
      %v2191 = vunpack.c.h.bf16 %v2137
      %v2192 = vunpack.c.l.bf16 %v2138
      %v2193 = vunpack.c.h.bf16 %v2138
      %v2194 = vunpack.c.l.bf16 %v2139
      %v2195 = vunpack.c.h.bf16 %v2139
      %v2196 = vunpack.c.l.bf16 %v2140
      %v2197 = vunpack.c.h.bf16 %v2140
      %v2198 = vunpack.c.l.bf16 %v2141
      %v2199 = vunpack.c.h.bf16 %v2141
      %v2200 = vunpack.c.l.bf16 %v2142
      %v2201 = vunpack.c.h.bf16 %v2142
      %v2202 = vunpack.c.l.bf16 %v2143
      %v2203 = vunpack.c.h.bf16 %v2143
      %v2204 = vunpack.c.l.bf16 %v2144
      %v2205 = vunpack.c.h.bf16 %v2144
      %v2206 = vunpack.c.l.bf16 %v2145
      %v2207 = vunpack.c.h.bf16 %v2145
      %v2208 = vunpack.c.l.bf16 %v2146
      %v2209 = vunpack.c.h.bf16 %v2146
      %v2210 = vunpack.c.l.bf16 %v2147
      %v2211 = vunpack.c.h.bf16 %v2147
      %v2212 = vunpack.c.l.bf16 %v2148
      %v2213 = vunpack.c.h.bf16 %v2148
      %v2214 = vunpack.c.l.bf16 %v2149
      %v2215 = vunpack.c.h.bf16 %v2149
      %v2216 = vunpack.c.l.bf16 %v2150
      %v2217 = vunpack.c.h.bf16 %v2150
      %v2218 = vunpack.c.l.bf16 %v2151
      %v2219 = vunpack.c.h.bf16 %v2151
      %v2220 = vunpack.c.l.bf16 %v2152
      %v2221 = vunpack.c.h.bf16 %v2152
      %v2222 = vunpack.c.l.bf16 %v2153
      %v2223 = vunpack.c.h.bf16 %v2153
      %v2224 = vunpack.c.l.bf16 %v2154
      %v2225 = vunpack.c.h.bf16 %v2154
      %v2226 = vunpack.c.l.bf16 %v2155
      %v2227 = vunpack.c.h.bf16 %v2155
      %v2228 = vunpack.c.l.bf16 %v2156
      %v2229 = vunpack.c.h.bf16 %v2156
      %v2230 = vunpack.c.l.bf16 %v2157
      %v2231 = vunpack.c.h.bf16 %v2157
      %v2232 = vunpack.c.l.bf16 %v2158
      %v2233 = vunpack.c.h.bf16 %v2158
      %v2234 = vunpack.c.l.bf16 %v2159
      %v2235 = vunpack.c.h.bf16 %v2159
      %v2236 = vunpack.c.l.bf16 %v2160
      %v2237 = vunpack.c.h.bf16 %v2160
      %v2238 = vunpack.c.l.bf16 %v2161
      %v2239 = vunpack.c.h.bf16 %v2161
      %v2240 = vunpack.c.l.bf16 %v2162
      %v2241 = vunpack.c.h.bf16 %v2162
      %v2242 = vunpack.c.l.bf16 %v2163
      %v2243 = vunpack.c.h.bf16 %v2163
      %v2244 = vunpack.c.l.bf16 %v2170
      %v2245 = vmul.f32 %v2172, %v2244
      %v2246 = vmul.f32 %v2173, %v2244
      %v2247 = vmul.f32 %v2174, %v2244
      %v2248 = vmul.f32 %v2175, %v2244
      %v2249 = vmul.f32 %v2176, %v2244
      %v2250 = vmul.f32 %v2177, %v2244
      %v2251 = vmul.f32 %v2178, %v2244
      %v2252 = vmul.f32 %v2179, %v2244
      %v2253 = vmul.f32 %v2180, %v2244
      %v2254 = vmul.f32 %v2181, %v2244
      %v2255 = vmul.f32 %v2182, %v2244
      %v2256 = vmul.f32 %v2183, %v2244
      %v2257 = vmul.f32 %v2184, %v2244
      %v2258 = vmul.f32 %v2185, %v2244
      %v2259 = vmul.f32 %v2186, %v2244
      %v2260 = vmul.f32 %v2187, %v2244
      %v2261 = vmul.f32 %v2188, %v2244
      %v2262 = vmul.f32 %v2189, %v2244
      %v2263 = vmul.f32 %v2190, %v2244
      %v2264 = vmul.f32 %v2191, %v2244
      %v2265 = vmul.f32 %v2192, %v2244
      %v2266 = vmul.f32 %v2193, %v2244
      %v2267 = vmul.f32 %v2194, %v2244
      %v2268 = vmul.f32 %v2195, %v2244
      %v2269 = vmul.f32 %v2196, %v2244
      %v2270 = vmul.f32 %v2197, %v2244
      %v2271 = vmul.f32 %v2198, %v2244
      %v2272 = vmul.f32 %v2199, %v2244
      %v2273 = vmul.f32 %v2200, %v2244
      %v2274 = vmul.f32 %v2201, %v2244
      %v2275 = vmul.f32 %v2202, %v2244
      %v2276 = vmul.f32 %v2203, %v2244
      %v2277 = vmul.f32 %v2204, %v2244
      %v2278 = vmul.f32 %v2205, %v2244
      %v2279 = vmul.f32 %v2206, %v2244
      %v2280 = vmul.f32 %v2207, %v2244
      %v2281 = vmul.f32 %v2208, %v2244
      %v2282 = vmul.f32 %v2209, %v2244
      %v2283 = vmul.f32 %v2210, %v2244
      %v2284 = vmul.f32 %v2211, %v2244
      %v2285 = vmul.f32 %v2212, %v2244
      %v2286 = vmul.f32 %v2213, %v2244
      %v2287 = vmul.f32 %v2214, %v2244
      %v2288 = vmul.f32 %v2215, %v2244
      %v2289 = vmul.f32 %v2216, %v2244
      %v2290 = vmul.f32 %v2217, %v2244
      %v2291 = vmul.f32 %v2218, %v2244
      %v2292 = vmul.f32 %v2219, %v2244
      %v2293 = vmul.f32 %v2220, %v2244
      %v2294 = vmul.f32 %v2221, %v2244
      %v2295 = vmul.f32 %v2222, %v2244
      %v2296 = vmul.f32 %v2223, %v2244
      %v2297 = vmul.f32 %v2224, %v2244
      %v2298 = vmul.f32 %v2225, %v2244
      %v2299 = vmul.f32 %v2226, %v2244
      %v2300 = vmul.f32 %v2227, %v2244
      %v2301 = vmul.f32 %v2228, %v2244
      %v2302 = vmul.f32 %v2229, %v2244
      %v2303 = vmul.f32 %v2230, %v2244
      %v2304 = vmul.f32 %v2231, %v2244
      %v2305 = vmul.f32 %v2232, %v2244
      %v2306 = vmul.f32 %v2233, %v2244
      %v2307 = vmul.f32 %v2234, %v2244
      %v2308 = vmul.f32 %v2235, %v2244
      %v2309 = vmul.f32 %v2236, %v2244
      %v2310 = vmul.f32 %v2237, %v2244
      %v2311 = vmul.f32 %v2238, %v2244
      %v2312 = vmul.f32 %v2239, %v2244
      %v2313 = vmul.f32 %v2240, %v2244
      %v2314 = vmul.f32 %v2241, %v2244
      %v2315 = vmul.f32 %v2242, %v2244
      %v2316 = vmul.f32 %v2243, %v2244
      %v2317 = vpack.c.bf16 %v2246, %v2245
      %v2318 = vpack.c.bf16 %v2248, %v2247
      %v2319 = vpack.c.bf16 %v2250, %v2249
      %v2320 = vpack.c.bf16 %v2252, %v2251
      %v2321 = vpack.c.bf16 %v2254, %v2253
      %v2322 = vpack.c.bf16 %v2256, %v2255
      %v2323 = vpack.c.bf16 %v2258, %v2257
      %v2324 = vpack.c.bf16 %v2260, %v2259
      %v2325 = vpack.c.bf16 %v2262, %v2261
      %v2326 = vpack.c.bf16 %v2264, %v2263
      %v2327 = vpack.c.bf16 %v2266, %v2265
      %v2328 = vpack.c.bf16 %v2268, %v2267
      %v2329 = vpack.c.bf16 %v2270, %v2269
      %v2330 = vpack.c.bf16 %v2272, %v2271
      %v2331 = vpack.c.bf16 %v2274, %v2273
      %v2332 = vpack.c.bf16 %v2276, %v2275
      %v2333 = vpack.c.bf16 %v2278, %v2277
      %v2334 = vpack.c.bf16 %v2280, %v2279
      %v2335 = vpack.c.bf16 %v2282, %v2281
      %v2336 = vpack.c.bf16 %v2284, %v2283
      %v2337 = vpack.c.bf16 %v2286, %v2285
      %v2338 = vpack.c.bf16 %v2288, %v2287
      %v2339 = vpack.c.bf16 %v2290, %v2289
      %v2340 = vpack.c.bf16 %v2292, %v2291
      %v2341 = vpack.c.bf16 %v2294, %v2293
      %v2342 = vpack.c.bf16 %v2296, %v2295
      %v2343 = vpack.c.bf16 %v2298, %v2297
      %v2344 = vpack.c.bf16 %v2300, %v2299
      %v2345 = vpack.c.bf16 %v2302, %v2301
      %v2346 = vpack.c.bf16 %v2304, %v2303
      %v2347 = vpack.c.bf16 %v2306, %v2305
      %v2348 = vpack.c.bf16 %v2308, %v2307
      %v2349 = vpack.c.bf16 %v2310, %v2309
      %v2350 = vpack.c.bf16 %v2312, %v2311
      %v2351 = vpack.c.bf16 %v2314, %v2313
      %v2352 = vpack.c.bf16 %v2316, %v2315
      %v2353 = vld [vmem:[%s501] sm:$0xff]
      %v2354 = vld [vmem:[%s501 + $0x8] sm:$0xff]
      %v2355 = vld [vmem:[%s501 + $0x10] sm:$0xff]
      %v2356 = vld [vmem:[%s501 + $0x18] sm:$0xff]
      %v2357 = vld [vmem:[%s501 + $0x20] sm:$0xff]
      %v2358 = vld [vmem:[%s501 + $0x28] sm:$0xff]
      %v2359 = vld [vmem:[%s501 + $0x30] sm:$0xff]
      %v2360 = vld [vmem:[%s501 + $0x38] sm:$0xff]
      %v2361 = vld [vmem:[%s501 + $0x40] sm:$0xff]
      %v2362 = vld [vmem:[%s501 + $0x48] sm:$0xff]
      %v2363 = vld [vmem:[%s501 + $0x50] sm:$0xff]
      %v2364 = vld [vmem:[%s501 + $0x58] sm:$0xff]
      %v2365 = vld [vmem:[%s501 + $0x60] sm:$0xff]
      %v2366 = vld [vmem:[%s501 + $0x68] sm:$0xff]
      %v2367 = vld [vmem:[%s501 + $0x70] sm:$0xff]
      %v2368 = vld [vmem:[%s501 + $0x78] sm:$0xff]
      %v2369 = vld [vmem:[%s501 + $0x80] sm:$0xff]
      %v2370 = vld [vmem:[%s501 + $0x88] sm:$0xff]
      %v2371 = vld [vmem:[%s501 + $0x90] sm:$0xff]
      %v2372 = vld [vmem:[%s501 + $0x98] sm:$0xff]
      %v2373 = vld [vmem:[%s501 + $0xa0] sm:$0xff]
      %v2374 = vld [vmem:[%s501 + $0xa8] sm:$0xff]
      %v2375 = vld [vmem:[%s501 + $0xb0] sm:$0xff]
      %v2376 = vld [vmem:[%s501 + $0xb8] sm:$0xff]
      %v2377 = vld [vmem:[%s501 + $0xc0] sm:$0xff]
      %v2378 = vld [vmem:[%s501 + $0xc8] sm:$0xff]
      %v2379 = vld [vmem:[%s501 + $0xd0] sm:$0xff]
      %v2380 = vld [vmem:[%s501 + $0xd8] sm:$0xff]
      %v2381 = vld [vmem:[%s501 + $0xe0] sm:$0xff]
      %v2382 = vld [vmem:[%s501 + $0xe8] sm:$0xff]
      %v2383 = vld [vmem:[%s501 + $0xf0] sm:$0xff]
      %v2384 = vld [vmem:[%s501 + $0xf8] sm:$0xff]
      %v2385 = vld [vmem:[%s501 + $0x100] sm:$0xff]
      %v2386 = vld [vmem:[%s501 + $0x108] sm:$0xff]
      %v2387 = vld [vmem:[%s501 + $0x110] sm:$0xff]
      %v2388 = vld [vmem:[%s501 + $0x118] sm:$0xff]
      %2389 = vrot.lane.b32.xlu0 %v2165, 127
      %v2390 = vpop.permute.xlu0 %2389
      %s2392 = vtos %v2390
      %v2393 = vstv %s2392
      %v2394 = vpack.i.b16 %v2393, %v2393
      %v2396 = vunpack.c.l.bf16 %v2353
      %v2397 = vunpack.c.h.bf16 %v2353
      %v2398 = vunpack.c.l.bf16 %v2354
      %v2399 = vunpack.c.h.bf16 %v2354
      %v2400 = vunpack.c.l.bf16 %v2355
      %v2401 = vunpack.c.h.bf16 %v2355
      %v2402 = vunpack.c.l.bf16 %v2356
      %v2403 = vunpack.c.h.bf16 %v2356
      %v2404 = vunpack.c.l.bf16 %v2357
      %v2405 = vunpack.c.h.bf16 %v2357
      %v2406 = vunpack.c.l.bf16 %v2358
      %v2407 = vunpack.c.h.bf16 %v2358
      %v2408 = vunpack.c.l.bf16 %v2359
      %v2409 = vunpack.c.h.bf16 %v2359
      %v2410 = vunpack.c.l.bf16 %v2360
      %v2411 = vunpack.c.h.bf16 %v2360
      %v2412 = vunpack.c.l.bf16 %v2361
      %v2413 = vunpack.c.h.bf16 %v2361
      %v2414 = vunpack.c.l.bf16 %v2362
      %v2415 = vunpack.c.h.bf16 %v2362
      %v2416 = vunpack.c.l.bf16 %v2363
      %v2417 = vunpack.c.h.bf16 %v2363
      %v2418 = vunpack.c.l.bf16 %v2364
      %v2419 = vunpack.c.h.bf16 %v2364
      %v2420 = vunpack.c.l.bf16 %v2365
      %v2421 = vunpack.c.h.bf16 %v2365
      %v2422 = vunpack.c.l.bf16 %v2366
      %v2423 = vunpack.c.h.bf16 %v2366
      %v2424 = vunpack.c.l.bf16 %v2367
      %v2425 = vunpack.c.h.bf16 %v2367
      %v2426 = vunpack.c.l.bf16 %v2368
      %v2427 = vunpack.c.h.bf16 %v2368
      %v2428 = vunpack.c.l.bf16 %v2369
      %v2429 = vunpack.c.h.bf16 %v2369
      %v2430 = vunpack.c.l.bf16 %v2370
      %v2431 = vunpack.c.h.bf16 %v2370
      %v2432 = vunpack.c.l.bf16 %v2371
      %v2433 = vunpack.c.h.bf16 %v2371
      %v2434 = vunpack.c.l.bf16 %v2372
      %v2435 = vunpack.c.h.bf16 %v2372
      %v2436 = vunpack.c.l.bf16 %v2373
      %v2437 = vunpack.c.h.bf16 %v2373
      %v2438 = vunpack.c.l.bf16 %v2374
      %v2439 = vunpack.c.h.bf16 %v2374
      %v2440 = vunpack.c.l.bf16 %v2375
      %v2441 = vunpack.c.h.bf16 %v2375
      %v2442 = vunpack.c.l.bf16 %v2376
      %v2443 = vunpack.c.h.bf16 %v2376
      %v2444 = vunpack.c.l.bf16 %v2377
      %v2445 = vunpack.c.h.bf16 %v2377
      %v2446 = vunpack.c.l.bf16 %v2378
      %v2447 = vunpack.c.h.bf16 %v2378
      %v2448 = vunpack.c.l.bf16 %v2379
      %v2449 = vunpack.c.h.bf16 %v2379
      %v2450 = vunpack.c.l.bf16 %v2380
      %v2451 = vunpack.c.h.bf16 %v2380
      %v2452 = vunpack.c.l.bf16 %v2381
      %v2453 = vunpack.c.h.bf16 %v2381
      %v2454 = vunpack.c.l.bf16 %v2382
      %v2455 = vunpack.c.h.bf16 %v2382
      %v2456 = vunpack.c.l.bf16 %v2383
      %v2457 = vunpack.c.h.bf16 %v2383
      %v2458 = vunpack.c.l.bf16 %v2384
      %v2459 = vunpack.c.h.bf16 %v2384
      %v2460 = vunpack.c.l.bf16 %v2385
      %v2461 = vunpack.c.h.bf16 %v2385
      %v2462 = vunpack.c.l.bf16 %v2386
      %v2463 = vunpack.c.h.bf16 %v2386
      %v2464 = vunpack.c.l.bf16 %v2387
      %v2465 = vunpack.c.h.bf16 %v2387
      %v2466 = vunpack.c.l.bf16 %v2388
      %v2467 = vunpack.c.h.bf16 %v2388
      %v2468 = vunpack.c.l.bf16 %v2394
      %v2469 = vmul.f32 %v2396, %v2468
      %v2470 = vmul.f32 %v2397, %v2468
      %v2471 = vmul.f32 %v2398, %v2468
      %v2472 = vmul.f32 %v2399, %v2468
      %v2473 = vmul.f32 %v2400, %v2468
      %v2474 = vmul.f32 %v2401, %v2468
      %v2475 = vmul.f32 %v2402, %v2468
      %v2476 = vmul.f32 %v2403, %v2468
      %v2477 = vmul.f32 %v2404, %v2468
      %v2478 = vmul.f32 %v2405, %v2468
      %v2479 = vmul.f32 %v2406, %v2468
      %v2480 = vmul.f32 %v2407, %v2468
      %v2481 = vmul.f32 %v2408, %v2468
      %v2482 = vmul.f32 %v2409, %v2468
      %v2483 = vmul.f32 %v2410, %v2468
      %v2484 = vmul.f32 %v2411, %v2468
      %v2485 = vmul.f32 %v2412, %v2468
      %v2486 = vmul.f32 %v2413, %v2468
      %v2487 = vmul.f32 %v2414, %v2468
      %v2488 = vmul.f32 %v2415, %v2468
      %v2489 = vmul.f32 %v2416, %v2468
      %v2490 = vmul.f32 %v2417, %v2468
      %v2491 = vmul.f32 %v2418, %v2468
      %v2492 = vmul.f32 %v2419, %v2468
      %v2493 = vmul.f32 %v2420, %v2468
      %v2494 = vmul.f32 %v2421, %v2468
      %v2495 = vmul.f32 %v2422, %v2468
      %v2496 = vmul.f32 %v2423, %v2468
      %v2497 = vmul.f32 %v2424, %v2468
      %v2498 = vmul.f32 %v2425, %v2468
      %v2499 = vmul.f32 %v2426, %v2468
      %v2500 = vmul.f32 %v2427, %v2468
      %v2501 = vmul.f32 %v2428, %v2468
      %v2502 = vmul.f32 %v2429, %v2468
      %v2503 = vmul.f32 %v2430, %v2468
      %v2504 = vmul.f32 %v2431, %v2468
      %v2505 = vmul.f32 %v2432, %v2468
      %v2506 = vmul.f32 %v2433, %v2468
      %v2507 = vmul.f32 %v2434, %v2468
      %v2508 = vmul.f32 %v2435, %v2468
      %v2509 = vmul.f32 %v2436, %v2468
      %v2510 = vmul.f32 %v2437, %v2468
      %v2511 = vmul.f32 %v2438, %v2468
      %v2512 = vmul.f32 %v2439, %v2468
      %v2513 = vmul.f32 %v2440, %v2468
      %v2514 = vmul.f32 %v2441, %v2468
      %v2515 = vmul.f32 %v2442, %v2468
      %v2516 = vmul.f32 %v2443, %v2468
      %v2517 = vmul.f32 %v2444, %v2468
      %v2518 = vmul.f32 %v2445, %v2468
      %v2519 = vmul.f32 %v2446, %v2468
      %v2520 = vmul.f32 %v2447, %v2468
      %v2521 = vmul.f32 %v2448, %v2468
      %v2522 = vmul.f32 %v2449, %v2468
      %v2523 = vmul.f32 %v2450, %v2468
      %v2524 = vmul.f32 %v2451, %v2468
      %v2525 = vmul.f32 %v2452, %v2468
      %v2526 = vmul.f32 %v2453, %v2468
      %v2527 = vmul.f32 %v2454, %v2468
      %v2528 = vmul.f32 %v2455, %v2468
      %v2529 = vmul.f32 %v2456, %v2468
      %v2530 = vmul.f32 %v2457, %v2468
      %v2531 = vmul.f32 %v2458, %v2468
      %v2532 = vmul.f32 %v2459, %v2468
      %v2533 = vmul.f32 %v2460, %v2468
      %v2534 = vmul.f32 %v2461, %v2468
      %v2535 = vmul.f32 %v2462, %v2468
      %v2536 = vmul.f32 %v2463, %v2468
      %v2537 = vmul.f32 %v2464, %v2468
      %v2538 = vmul.f32 %v2465, %v2468
      %v2539 = vmul.f32 %v2466, %v2468
      %v2540 = vmul.f32 %v2467, %v2468
      %v2541 = vpack.c.bf16 %v2470, %v2469
      %v2542 = vpack.c.bf16 %v2472, %v2471
      %v2543 = vpack.c.bf16 %v2474, %v2473
      %v2544 = vpack.c.bf16 %v2476, %v2475
      %v2545 = vpack.c.bf16 %v2478, %v2477
      %v2546 = vpack.c.bf16 %v2480, %v2479
      %v2547 = vpack.c.bf16 %v2482, %v2481
      %v2548 = vpack.c.bf16 %v2484, %v2483
      %v2549 = vpack.c.bf16 %v2486, %v2485
      %v2550 = vpack.c.bf16 %v2488, %v2487
      %v2551 = vpack.c.bf16 %v2490, %v2489
      %v2552 = vpack.c.bf16 %v2492, %v2491
      %v2553 = vpack.c.bf16 %v2494, %v2493
      %v2554 = vpack.c.bf16 %v2496, %v2495
      %v2555 = vpack.c.bf16 %v2498, %v2497
      %v2556 = vpack.c.bf16 %v2500, %v2499
      %v2557 = vpack.c.bf16 %v2502, %v2501
      %v2558 = vpack.c.bf16 %v2504, %v2503
      %v2559 = vpack.c.bf16 %v2506, %v2505
      %v2560 = vpack.c.bf16 %v2508, %v2507
      %v2561 = vpack.c.bf16 %v2510, %v2509
      %v2562 = vpack.c.bf16 %v2512, %v2511
      %v2563 = vpack.c.bf16 %v2514, %v2513
      %v2564 = vpack.c.bf16 %v2516, %v2515
      %v2565 = vpack.c.bf16 %v2518, %v2517
      %v2566 = vpack.c.bf16 %v2520, %v2519
      %v2567 = vpack.c.bf16 %v2522, %v2521
      %v2568 = vpack.c.bf16 %v2524, %v2523
      %v2569 = vpack.c.bf16 %v2526, %v2525
      %v2570 = vpack.c.bf16 %v2528, %v2527
      %v2571 = vpack.c.bf16 %v2530, %v2529
      %v2572 = vpack.c.bf16 %v2532, %v2531
      %v2573 = vpack.c.bf16 %v2534, %v2533
      %v2574 = vpack.c.bf16 %v2536, %v2535
      %v2575 = vpack.c.bf16 %v2538, %v2537
      %v2576 = vpack.c.bf16 %v2540, %v2539
      %v2577 = vunpack.c.l.bf16 %v2317
      %v2578 = vunpack.c.h.bf16 %v2317
      %v2579 = vunpack.c.l.bf16 %v2318
      %v2580 = vunpack.c.h.bf16 %v2318
      %v2581 = vunpack.c.l.bf16 %v2319
      %v2582 = vunpack.c.h.bf16 %v2319
      %v2583 = vunpack.c.l.bf16 %v2320
      %v2584 = vunpack.c.h.bf16 %v2320
      %v2585 = vunpack.c.l.bf16 %v2321
      %v2586 = vunpack.c.h.bf16 %v2321
      %v2587 = vunpack.c.l.bf16 %v2322
      %v2588 = vunpack.c.h.bf16 %v2322
      %v2589 = vunpack.c.l.bf16 %v2323
      %v2590 = vunpack.c.h.bf16 %v2323
      %v2591 = vunpack.c.l.bf16 %v2324
      %v2592 = vunpack.c.h.bf16 %v2324
      %v2593 = vunpack.c.l.bf16 %v2325
      %v2594 = vunpack.c.h.bf16 %v2325
      %v2595 = vunpack.c.l.bf16 %v2326
      %v2596 = vunpack.c.h.bf16 %v2326
      %v2597 = vunpack.c.l.bf16 %v2327
      %v2598 = vunpack.c.h.bf16 %v2327
      %v2599 = vunpack.c.l.bf16 %v2328
      %v2600 = vunpack.c.h.bf16 %v2328
      %v2601 = vunpack.c.l.bf16 %v2329
      %v2602 = vunpack.c.h.bf16 %v2329
      %v2603 = vunpack.c.l.bf16 %v2330
      %v2604 = vunpack.c.h.bf16 %v2330
      %v2605 = vunpack.c.l.bf16 %v2331
      %v2606 = vunpack.c.h.bf16 %v2331
      %v2607 = vunpack.c.l.bf16 %v2332
      %v2608 = vunpack.c.h.bf16 %v2332
      %v2609 = vunpack.c.l.bf16 %v2333
      %v2610 = vunpack.c.h.bf16 %v2333
      %v2611 = vunpack.c.l.bf16 %v2334
      %v2612 = vunpack.c.h.bf16 %v2334
      %v2613 = vunpack.c.l.bf16 %v2335
      %v2614 = vunpack.c.h.bf16 %v2335
      %v2615 = vunpack.c.l.bf16 %v2336
      %v2616 = vunpack.c.h.bf16 %v2336
      %v2617 = vunpack.c.l.bf16 %v2337
      %v2618 = vunpack.c.h.bf16 %v2337
      %v2619 = vunpack.c.l.bf16 %v2338
      %v2620 = vunpack.c.h.bf16 %v2338
      %v2621 = vunpack.c.l.bf16 %v2339
      %v2622 = vunpack.c.h.bf16 %v2339
      %v2623 = vunpack.c.l.bf16 %v2340
      %v2624 = vunpack.c.h.bf16 %v2340
      %v2625 = vunpack.c.l.bf16 %v2341
      %v2626 = vunpack.c.h.bf16 %v2341
      %v2627 = vunpack.c.l.bf16 %v2342
      %v2628 = vunpack.c.h.bf16 %v2342
      %v2629 = vunpack.c.l.bf16 %v2343
      %v2630 = vunpack.c.h.bf16 %v2343
      %v2631 = vunpack.c.l.bf16 %v2344
      %v2632 = vunpack.c.h.bf16 %v2344
      %v2633 = vunpack.c.l.bf16 %v2345
      %v2634 = vunpack.c.h.bf16 %v2345
      %v2635 = vunpack.c.l.bf16 %v2346
      %v2636 = vunpack.c.h.bf16 %v2346
      %v2637 = vunpack.c.l.bf16 %v2347
      %v2638 = vunpack.c.h.bf16 %v2347
      %v2639 = vunpack.c.l.bf16 %v2348
      %v2640 = vunpack.c.h.bf16 %v2348
      %v2641 = vunpack.c.l.bf16 %v2349
      %v2642 = vunpack.c.h.bf16 %v2349
      %v2643 = vunpack.c.l.bf16 %v2350
      %v2644 = vunpack.c.h.bf16 %v2350
      %v2645 = vunpack.c.l.bf16 %v2351
      %v2646 = vunpack.c.h.bf16 %v2351
      %v2647 = vunpack.c.l.bf16 %v2352
      %v2648 = vunpack.c.h.bf16 %v2352
      %v2649 = vunpack.c.l.bf16 %v2541
      %v2650 = vunpack.c.h.bf16 %v2541
      %v2651 = vunpack.c.l.bf16 %v2542
      %v2652 = vunpack.c.h.bf16 %v2542
      %v2653 = vunpack.c.l.bf16 %v2543
      %v2654 = vunpack.c.h.bf16 %v2543
      %v2655 = vunpack.c.l.bf16 %v2544
      %v2656 = vunpack.c.h.bf16 %v2544
      %v2657 = vunpack.c.l.bf16 %v2545
      %v2658 = vunpack.c.h.bf16 %v2545
      %v2659 = vunpack.c.l.bf16 %v2546
      %v2660 = vunpack.c.h.bf16 %v2546
      %v2661 = vunpack.c.l.bf16 %v2547
      %v2662 = vunpack.c.h.bf16 %v2547
      %v2663 = vunpack.c.l.bf16 %v2548
      %v2664 = vunpack.c.h.bf16 %v2548
      %v2665 = vunpack.c.l.bf16 %v2549
      %v2666 = vunpack.c.h.bf16 %v2549
      %v2667 = vunpack.c.l.bf16 %v2550
      %v2668 = vunpack.c.h.bf16 %v2550
      %v2669 = vunpack.c.l.bf16 %v2551
      %v2670 = vunpack.c.h.bf16 %v2551
      %v2671 = vunpack.c.l.bf16 %v2552
      %v2672 = vunpack.c.h.bf16 %v2552
      %v2673 = vunpack.c.l.bf16 %v2553
      %v2674 = vunpack.c.h.bf16 %v2553
      %v2675 = vunpack.c.l.bf16 %v2554
      %v2676 = vunpack.c.h.bf16 %v2554
      %v2677 = vunpack.c.l.bf16 %v2555
      %v2678 = vunpack.c.h.bf16 %v2555
      %v2679 = vunpack.c.l.bf16 %v2556
      %v2680 = vunpack.c.h.bf16 %v2556
      %v2681 = vunpack.c.l.bf16 %v2557
      %v2682 = vunpack.c.h.bf16 %v2557
      %v2683 = vunpack.c.l.bf16 %v2558
      %v2684 = vunpack.c.h.bf16 %v2558
      %v2685 = vunpack.c.l.bf16 %v2559
      %v2686 = vunpack.c.h.bf16 %v2559
      %v2687 = vunpack.c.l.bf16 %v2560
      %v2688 = vunpack.c.h.bf16 %v2560
      %v2689 = vunpack.c.l.bf16 %v2561
      %v2690 = vunpack.c.h.bf16 %v2561
      %v2691 = vunpack.c.l.bf16 %v2562
      %v2692 = vunpack.c.h.bf16 %v2562
      %v2693 = vunpack.c.l.bf16 %v2563
      %v2694 = vunpack.c.h.bf16 %v2563
      %v2695 = vunpack.c.l.bf16 %v2564
      %v2696 = vunpack.c.h.bf16 %v2564
      %v2697 = vunpack.c.l.bf16 %v2565
      %v2698 = vunpack.c.h.bf16 %v2565
      %v2699 = vunpack.c.l.bf16 %v2566
      %v2700 = vunpack.c.h.bf16 %v2566
      %v2701 = vunpack.c.l.bf16 %v2567
      %v2702 = vunpack.c.h.bf16 %v2567
      %v2703 = vunpack.c.l.bf16 %v2568
      %v2704 = vunpack.c.h.bf16 %v2568
      %v2705 = vunpack.c.l.bf16 %v2569
      %v2706 = vunpack.c.h.bf16 %v2569
      %v2707 = vunpack.c.l.bf16 %v2570
      %v2708 = vunpack.c.h.bf16 %v2570
      %v2709 = vunpack.c.l.bf16 %v2571
      %v2710 = vunpack.c.h.bf16 %v2571
      %v2711 = vunpack.c.l.bf16 %v2572
      %v2712 = vunpack.c.h.bf16 %v2572
      %v2713 = vunpack.c.l.bf16 %v2573
      %v2714 = vunpack.c.h.bf16 %v2573
      %v2715 = vunpack.c.l.bf16 %v2574
      %v2716 = vunpack.c.h.bf16 %v2574
      %v2717 = vunpack.c.l.bf16 %v2575
      %v2718 = vunpack.c.h.bf16 %v2575
      %v2719 = vunpack.c.l.bf16 %v2576
      %v2720 = vunpack.c.h.bf16 %v2576
      %v2721 = vadd.f32 %v2577, %v2649
      %v2722 = vadd.f32 %v2578, %v2650
      %v2723 = vadd.f32 %v2579, %v2651
      %v2724 = vadd.f32 %v2580, %v2652
      %v2725 = vadd.f32 %v2581, %v2653
      %v2726 = vadd.f32 %v2582, %v2654
      %v2727 = vadd.f32 %v2583, %v2655
      %v2728 = vadd.f32 %v2584, %v2656
      %v2729 = vadd.f32 %v2585, %v2657
      %v2730 = vadd.f32 %v2586, %v2658
      %v2731 = vadd.f32 %v2587, %v2659
      %v2732 = vadd.f32 %v2588, %v2660
      %v2733 = vadd.f32 %v2589, %v2661
      %v2734 = vadd.f32 %v2590, %v2662
      %v2735 = vadd.f32 %v2591, %v2663
      %v2736 = vadd.f32 %v2592, %v2664
      %v2737 = vadd.f32 %v2593, %v2665
      %v2738 = vadd.f32 %v2594, %v2666
      %v2739 = vadd.f32 %v2595, %v2667
      %v2740 = vadd.f32 %v2596, %v2668
      %v2741 = vadd.f32 %v2597, %v2669
      %v2742 = vadd.f32 %v2598, %v2670
      %v2743 = vadd.f32 %v2599, %v2671
      %v2744 = vadd.f32 %v2600, %v2672
      %v2745 = vadd.f32 %v2601, %v2673
      %v2746 = vadd.f32 %v2602, %v2674
      %v2747 = vadd.f32 %v2603, %v2675
      %v2748 = vadd.f32 %v2604, %v2676
      %v2749 = vadd.f32 %v2605, %v2677
      %v2750 = vadd.f32 %v2606, %v2678
      %v2751 = vadd.f32 %v2607, %v2679
      %v2752 = vadd.f32 %v2608, %v2680
      %v2753 = vadd.f32 %v2609, %v2681
      %v2754 = vadd.f32 %v2610, %v2682
      %v2755 = vadd.f32 %v2611, %v2683
      %v2756 = vadd.f32 %v2612, %v2684
      %v2757 = vadd.f32 %v2613, %v2685
      %v2758 = vadd.f32 %v2614, %v2686
      %v2759 = vadd.f32 %v2615, %v2687
      %v2760 = vadd.f32 %v2616, %v2688
      %v2761 = vadd.f32 %v2617, %v2689
      %v2762 = vadd.f32 %v2618, %v2690
      %v2763 = vadd.f32 %v2619, %v2691
      %v2764 = vadd.f32 %v2620, %v2692
      %v2765 = vadd.f32 %v2621, %v2693
      %v2766 = vadd.f32 %v2622, %v2694
      %v2767 = vadd.f32 %v2623, %v2695
      %v2768 = vadd.f32 %v2624, %v2696
      %v2769 = vadd.f32 %v2625, %v2697
      %v2770 = vadd.f32 %v2626, %v2698
      %v2771 = vadd.f32 %v2627, %v2699
      %v2772 = vadd.f32 %v2628, %v2700
      %v2773 = vadd.f32 %v2629, %v2701
      %v2774 = vadd.f32 %v2630, %v2702
      %v2775 = vadd.f32 %v2631, %v2703
      %v2776 = vadd.f32 %v2632, %v2704
      %v2777 = vadd.f32 %v2633, %v2705
      %v2778 = vadd.f32 %v2634, %v2706
      %v2779 = vadd.f32 %v2635, %v2707
      %v2780 = vadd.f32 %v2636, %v2708
      %v2781 = vadd.f32 %v2637, %v2709
      %v2782 = vadd.f32 %v2638, %v2710
      %v2783 = vadd.f32 %v2639, %v2711
      %v2784 = vadd.f32 %v2640, %v2712
      %v2785 = vadd.f32 %v2641, %v2713
      %v2786 = vadd.f32 %v2642, %v2714
      %v2787 = vadd.f32 %v2643, %v2715
      %v2788 = vadd.f32 %v2644, %v2716
      %v2789 = vadd.f32 %v2645, %v2717
      %v2790 = vadd.f32 %v2646, %v2718
      %v2791 = vadd.f32 %v2647, %v2719
      %v2792 = vadd.f32 %v2648, %v2720
      %v2793 = vpack.c.bf16 %v2722, %v2721
      %v2794 = vpack.c.bf16 %v2724, %v2723
      %v2795 = vpack.c.bf16 %v2726, %v2725
      %v2796 = vpack.c.bf16 %v2728, %v2727
      %v2797 = vpack.c.bf16 %v2730, %v2729
      %v2798 = vpack.c.bf16 %v2732, %v2731
      %v2799 = vpack.c.bf16 %v2734, %v2733
      %v2800 = vpack.c.bf16 %v2736, %v2735
      %v2801 = vpack.c.bf16 %v2738, %v2737
      %v2802 = vpack.c.bf16 %v2740, %v2739
      %v2803 = vpack.c.bf16 %v2742, %v2741
      %v2804 = vpack.c.bf16 %v2744, %v2743
      %v2805 = vpack.c.bf16 %v2746, %v2745
      %v2806 = vpack.c.bf16 %v2748, %v2747
      %v2807 = vpack.c.bf16 %v2750, %v2749
      %v2808 = vpack.c.bf16 %v2752, %v2751
      %v2809 = vpack.c.bf16 %v2754, %v2753
      %v2810 = vpack.c.bf16 %v2756, %v2755
      %v2811 = vpack.c.bf16 %v2758, %v2757
      %v2812 = vpack.c.bf16 %v2760, %v2759
      %v2813 = vpack.c.bf16 %v2762, %v2761
      %v2814 = vpack.c.bf16 %v2764, %v2763
      %v2815 = vpack.c.bf16 %v2766, %v2765
      %v2816 = vpack.c.bf16 %v2768, %v2767
      %v2817 = vpack.c.bf16 %v2770, %v2769
      %v2818 = vpack.c.bf16 %v2772, %v2771
      %v2819 = vpack.c.bf16 %v2774, %v2773
      %v2820 = vpack.c.bf16 %v2776, %v2775
      %v2821 = vpack.c.bf16 %v2778, %v2777
      %v2822 = vpack.c.bf16 %v2780, %v2779
      %v2823 = vpack.c.bf16 %v2782, %v2781
      %v2824 = vpack.c.bf16 %v2784, %v2783
      %v2825 = vpack.c.bf16 %v2786, %v2785
      %v2826 = vpack.c.bf16 %v2788, %v2787
      %v2827 = vpack.c.bf16 %v2790, %v2789
      %v2828 = vpack.c.bf16 %v2792, %v2791
      %v2829 = vld [vmem:[%s981] sm:$0xff]
      %v2830 = vld [vmem:[%s981 + $0x8] sm:$0xff]
      %v2831 = vld [vmem:[%s981 + $0x10] sm:$0xff]
      %v2832 = vld [vmem:[%s981 + $0x18] sm:$0xff]
      %v2833 = vld [vmem:[%s981 + $0x20] sm:$0xff]
      %v2834 = vld [vmem:[%s981 + $0x28] sm:$0xff]
      %v2835 = vld [vmem:[%s981 + $0x30] sm:$0xff]
      %v2836 = vld [vmem:[%s981 + $0x38] sm:$0xff]
      %v2837 = vld [vmem:[%s981 + $0x40] sm:$0xff]
      %v2838 = vld [vmem:[%s981 + $0x48] sm:$0xff]
      %v2839 = vld [vmem:[%s981 + $0x50] sm:$0xff]
      %v2840 = vld [vmem:[%s981 + $0x58] sm:$0xff]
      %v2841 = vld [vmem:[%s981 + $0x60] sm:$0xff]
      %v2842 = vld [vmem:[%s981 + $0x68] sm:$0xff]
      %v2843 = vld [vmem:[%s981 + $0x70] sm:$0xff]
      %v2844 = vld [vmem:[%s981 + $0x78] sm:$0xff]
      %v2845 = vld [vmem:[%s981 + $0x80] sm:$0xff]
      %v2846 = vld [vmem:[%s981 + $0x88] sm:$0xff]
      %v2847 = vld [vmem:[%s981 + $0x90] sm:$0xff]
      %v2848 = vld [vmem:[%s981 + $0x98] sm:$0xff]
      %v2849 = vld [vmem:[%s981 + $0xa0] sm:$0xff]
      %v2850 = vld [vmem:[%s981 + $0xa8] sm:$0xff]
      %v2851 = vld [vmem:[%s981 + $0xb0] sm:$0xff]
      %v2852 = vld [vmem:[%s981 + $0xb8] sm:$0xff]
      %v2853 = vld [vmem:[%s981 + $0xc0] sm:$0xff]
      %v2854 = vld [vmem:[%s981 + $0xc8] sm:$0xff]
      %v2855 = vld [vmem:[%s981 + $0xd0] sm:$0xff]
      %v2856 = vld [vmem:[%s981 + $0xd8] sm:$0xff]
      %v2857 = vld [vmem:[%s981 + $0xe0] sm:$0xff]
      %v2858 = vld [vmem:[%s981 + $0xe8] sm:$0xff]
      %v2859 = vld [vmem:[%s981 + $0xf0] sm:$0xff]
      %v2860 = vld [vmem:[%s981 + $0xf8] sm:$0xff]
      %v2861 = vld [vmem:[%s981 + $0x100] sm:$0xff]
      %v2862 = vld [vmem:[%s981 + $0x108] sm:$0xff]
      %v2863 = vld [vmem:[%s981 + $0x110] sm:$0xff]
      %v2864 = vld [vmem:[%s981 + $0x118] sm:$0xff]
      %2865 = vrot.lane.b32.xlu0 %v2165, 126
      %v2866 = vpop.permute.xlu0 %2865
      %s2868 = vtos %v2866
      %v2869 = vstv %s2868
      %v2870 = vpack.i.b16 %v2869, %v2869
      %v2872 = vunpack.c.l.bf16 %v2829
      %v2873 = vunpack.c.h.bf16 %v2829
      %v2874 = vunpack.c.l.bf16 %v2830
      %v2875 = vunpack.c.h.bf16 %v2830
      %v2876 = vunpack.c.l.bf16 %v2831
      %v2877 = vunpack.c.h.bf16 %v2831
      %v2878 = vunpack.c.l.bf16 %v2832
      %v2879 = vunpack.c.h.bf16 %v2832
      %v2880 = vunpack.c.l.bf16 %v2833
      %v2881 = vunpack.c.h.bf16 %v2833
      %v2882 = vunpack.c.l.bf16 %v2834
      %v2883 = vunpack.c.h.bf16 %v2834
      %v2884 = vunpack.c.l.bf16 %v2835
      %v2885 = vunpack.c.h.bf16 %v2835
      %v2886 = vunpack.c.l.bf16 %v2836
      %v2887 = vunpack.c.h.bf16 %v2836
      %v2888 = vunpack.c.l.bf16 %v2837
      %v2889 = vunpack.c.h.bf16 %v2837
      %v2890 = vunpack.c.l.bf16 %v2838
      %v2891 = vunpack.c.h.bf16 %v2838
      %v2892 = vunpack.c.l.bf16 %v2839
      %v2893 = vunpack.c.h.bf16 %v2839
      %v2894 = vunpack.c.l.bf16 %v2840
      %v2895 = vunpack.c.h.bf16 %v2840
      %v2896 = vunpack.c.l.bf16 %v2841
      %v2897 = vunpack.c.h.bf16 %v2841
      %v2898 = vunpack.c.l.bf16 %v2842
      %v2899 = vunpack.c.h.bf16 %v2842
      %v2900 = vunpack.c.l.bf16 %v2843
      %v2901 = vunpack.c.h.bf16 %v2843
      %v2902 = vunpack.c.l.bf16 %v2844
      %v2903 = vunpack.c.h.bf16 %v2844
      %v2904 = vunpack.c.l.bf16 %v2845
      %v2905 = vunpack.c.h.bf16 %v2845
      %v2906 = vunpack.c.l.bf16 %v2846
      %v2907 = vunpack.c.h.bf16 %v2846
      %v2908 = vunpack.c.l.bf16 %v2847
      %v2909 = vunpack.c.h.bf16 %v2847
      %v2910 = vunpack.c.l.bf16 %v2848
      %v2911 = vunpack.c.h.bf16 %v2848
      %v2912 = vunpack.c.l.bf16 %v2849
      %v2913 = vunpack.c.h.bf16 %v2849
      %v2914 = vunpack.c.l.bf16 %v2850
      %v2915 = vunpack.c.h.bf16 %v2850
      %v2916 = vunpack.c.l.bf16 %v2851
      %v2917 = vunpack.c.h.bf16 %v2851
      %v2918 = vunpack.c.l.bf16 %v2852
      %v2919 = vunpack.c.h.bf16 %v2852
      %v2920 = vunpack.c.l.bf16 %v2853
      %v2921 = vunpack.c.h.bf16 %v2853
      %v2922 = vunpack.c.l.bf16 %v2854
      %v2923 = vunpack.c.h.bf16 %v2854
      %v2924 = vunpack.c.l.bf16 %v2855
      %v2925 = vunpack.c.h.bf16 %v2855
      %v2926 = vunpack.c.l.bf16 %v2856
      %v2927 = vunpack.c.h.bf16 %v2856
      %v2928 = vunpack.c.l.bf16 %v2857
      %v2929 = vunpack.c.h.bf16 %v2857
      %v2930 = vunpack.c.l.bf16 %v2858
      %v2931 = vunpack.c.h.bf16 %v2858
      %v2932 = vunpack.c.l.bf16 %v2859
      %v2933 = vunpack.c.h.bf16 %v2859
      %v2934 = vunpack.c.l.bf16 %v2860
      %v2935 = vunpack.c.h.bf16 %v2860
      %v2936 = vunpack.c.l.bf16 %v2861
      %v2937 = vunpack.c.h.bf16 %v2861
      %v2938 = vunpack.c.l.bf16 %v2862
      %v2939 = vunpack.c.h.bf16 %v2862
      %v2940 = vunpack.c.l.bf16 %v2863
      %v2941 = vunpack.c.h.bf16 %v2863
      %v2942 = vunpack.c.l.bf16 %v2864
      %v2943 = vunpack.c.h.bf16 %v2864
      %v2944 = vunpack.c.l.bf16 %v2870
      %v2945 = vmul.f32 %v2872, %v2944
      %v2946 = vmul.f32 %v2873, %v2944
      %v2947 = vmul.f32 %v2874, %v2944
      %v2948 = vmul.f32 %v2875, %v2944
      %v2949 = vmul.f32 %v2876, %v2944
      %v2950 = vmul.f32 %v2877, %v2944
      %v2951 = vmul.f32 %v2878, %v2944
      %v2952 = vmul.f32 %v2879, %v2944
      %v2953 = vmul.f32 %v2880, %v2944
      %v2954 = vmul.f32 %v2881, %v2944
      %v2955 = vmul.f32 %v2882, %v2944
      %v2956 = vmul.f32 %v2883, %v2944
      %v2957 = vmul.f32 %v2884, %v2944
      %v2958 = vmul.f32 %v2885, %v2944
      %v2959 = vmul.f32 %v2886, %v2944
      %v2960 = vmul.f32 %v2887, %v2944
      %v2961 = vmul.f32 %v2888, %v2944
      %v2962 = vmul.f32 %v2889, %v2944
      %v2963 = vmul.f32 %v2890, %v2944
      %v2964 = vmul.f32 %v2891, %v2944
      %v2965 = vmul.f32 %v2892, %v2944
      %v2966 = vmul.f32 %v2893, %v2944
      %v2967 = vmul.f32 %v2894, %v2944
      %v2968 = vmul.f32 %v2895, %v2944
      %v2969 = vmul.f32 %v2896, %v2944
      %v2970 = vmul.f32 %v2897, %v2944
      %v2971 = vmul.f32 %v2898, %v2944
      %v2972 = vmul.f32 %v2899, %v2944
      %v2973 = vmul.f32 %v2900, %v2944
      %v2974 = vmul.f32 %v2901, %v2944
      %v2975 = vmul.f32 %v2902, %v2944
      %v2976 = vmul.f32 %v2903, %v2944
      %v2977 = vmul.f32 %v2904, %v2944
      %v2978 = vmul.f32 %v2905, %v2944
      %v2979 = vmul.f32 %v2906, %v2944
      %v2980 = vmul.f32 %v2907, %v2944
      %v2981 = vmul.f32 %v2908, %v2944
      %v2982 = vmul.f32 %v2909, %v2944
      %v2983 = vmul.f32 %v2910, %v2944
      %v2984 = vmul.f32 %v2911, %v2944
      %v2985 = vmul.f32 %v2912, %v2944
      %v2986 = vmul.f32 %v2913, %v2944
      %v2987 = vmul.f32 %v2914, %v2944
      %v2988 = vmul.f32 %v2915, %v2944
      %v2989 = vmul.f32 %v2916, %v2944
      %v2990 = vmul.f32 %v2917, %v2944
      %v2991 = vmul.f32 %v2918, %v2944
      %v2992 = vmul.f32 %v2919, %v2944
      %v2993 = vmul.f32 %v2920, %v2944
      %v2994 = vmul.f32 %v2921, %v2944
      %v2995 = vmul.f32 %v2922, %v2944
      %v2996 = vmul.f32 %v2923, %v2944
      %v2997 = vmul.f32 %v2924, %v2944
      %v2998 = vmul.f32 %v2925, %v2944
      %v2999 = vmul.f32 %v2926, %v2944
      %v3000 = vmul.f32 %v2927, %v2944
      %v3001 = vmul.f32 %v2928, %v2944
      %v3002 = vmul.f32 %v2929, %v2944
      %v3003 = vmul.f32 %v2930, %v2944
      %v3004 = vmul.f32 %v2931, %v2944
      %v3005 = vmul.f32 %v2932, %v2944
      %v3006 = vmul.f32 %v2933, %v2944
      %v3007 = vmul.f32 %v2934, %v2944
      %v3008 = vmul.f32 %v2935, %v2944
      %v3009 = vmul.f32 %v2936, %v2944
      %v3010 = vmul.f32 %v2937, %v2944
      %v3011 = vmul.f32 %v2938, %v2944
      %v3012 = vmul.f32 %v2939, %v2944
      %v3013 = vmul.f32 %v2940, %v2944
      %v3014 = vmul.f32 %v2941, %v2944
      %v3015 = vmul.f32 %v2942, %v2944
      %v3016 = vmul.f32 %v2943, %v2944
      %v3017 = vpack.c.bf16 %v2946, %v2945
      %v3018 = vpack.c.bf16 %v2948, %v2947
      %v3019 = vpack.c.bf16 %v2950, %v2949
      %v3020 = vpack.c.bf16 %v2952, %v2951
      %v3021 = vpack.c.bf16 %v2954, %v2953
      %v3022 = vpack.c.bf16 %v2956, %v2955
      %v3023 = vpack.c.bf16 %v2958, %v2957
      %v3024 = vpack.c.bf16 %v2960, %v2959
      %v3025 = vpack.c.bf16 %v2962, %v2961
      %v3026 = vpack.c.bf16 %v2964, %v2963
      %v3027 = vpack.c.bf16 %v2966, %v2965
      %v3028 = vpack.c.bf16 %v2968, %v2967
      %v3029 = vpack.c.bf16 %v2970, %v2969
      %v3030 = vpack.c.bf16 %v2972, %v2971
      %v3031 = vpack.c.bf16 %v2974, %v2973
      %v3032 = vpack.c.bf16 %v2976, %v2975
      %v3033 = vpack.c.bf16 %v2978, %v2977
      %v3034 = vpack.c.bf16 %v2980, %v2979
      %v3035 = vpack.c.bf16 %v2982, %v2981
      %v3036 = vpack.c.bf16 %v2984, %v2983
      %v3037 = vpack.c.bf16 %v2986, %v2985
      %v3038 = vpack.c.bf16 %v2988, %v2987
      %v3039 = vpack.c.bf16 %v2990, %v2989
      %v3040 = vpack.c.bf16 %v2992, %v2991
      %v3041 = vpack.c.bf16 %v2994, %v2993
      %v3042 = vpack.c.bf16 %v2996, %v2995
      %v3043 = vpack.c.bf16 %v2998, %v2997
      %v3044 = vpack.c.bf16 %v3000, %v2999
      %v3045 = vpack.c.bf16 %v3002, %v3001
      %v3046 = vpack.c.bf16 %v3004, %v3003
      %v3047 = vpack.c.bf16 %v3006, %v3005
      %v3048 = vpack.c.bf16 %v3008, %v3007
      %v3049 = vpack.c.bf16 %v3010, %v3009
      %v3050 = vpack.c.bf16 %v3012, %v3011
      %v3051 = vpack.c.bf16 %v3014, %v3013
      %v3052 = vpack.c.bf16 %v3016, %v3015
      %v3053 = vunpack.c.l.bf16 %v2793
      %v3054 = vunpack.c.h.bf16 %v2793
      %v3055 = vunpack.c.l.bf16 %v2794
      %v3056 = vunpack.c.h.bf16 %v2794
      %v3057 = vunpack.c.l.bf16 %v2795
      %v3058 = vunpack.c.h.bf16 %v2795
      %v3059 = vunpack.c.l.bf16 %v2796
      %v3060 = vunpack.c.h.bf16 %v2796
      %v3061 = vunpack.c.l.bf16 %v2797
      %v3062 = vunpack.c.h.bf16 %v2797
      %v3063 = vunpack.c.l.bf16 %v2798
      %v3064 = vunpack.c.h.bf16 %v2798
      %v3065 = vunpack.c.l.bf16 %v2799
      %v3066 = vunpack.c.h.bf16 %v2799
      %v3067 = vunpack.c.l.bf16 %v2800
      %v3068 = vunpack.c.h.bf16 %v2800
      %v3069 = vunpack.c.l.bf16 %v2801
      %v3070 = vunpack.c.h.bf16 %v2801
      %v3071 = vunpack.c.l.bf16 %v2802
      %v3072 = vunpack.c.h.bf16 %v2802
      %v3073 = vunpack.c.l.bf16 %v2803
      %v3074 = vunpack.c.h.bf16 %v2803
      %v3075 = vunpack.c.l.bf16 %v2804
      %v3076 = vunpack.c.h.bf16 %v2804
      %v3077 = vunpack.c.l.bf16 %v2805
      %v3078 = vunpack.c.h.bf16 %v2805
      %v3079 = vunpack.c.l.bf16 %v2806
      %v3080 = vunpack.c.h.bf16 %v2806
      %v3081 = vunpack.c.l.bf16 %v2807
      %v3082 = vunpack.c.h.bf16 %v2807
      %v3083 = vunpack.c.l.bf16 %v2808
      %v3084 = vunpack.c.h.bf16 %v2808
      %v3085 = vunpack.c.l.bf16 %v2809
      %v3086 = vunpack.c.h.bf16 %v2809
      %v3087 = vunpack.c.l.bf16 %v2810
      %v3088 = vunpack.c.h.bf16 %v2810
      %v3089 = vunpack.c.l.bf16 %v2811
      %v3090 = vunpack.c.h.bf16 %v2811
      %v3091 = vunpack.c.l.bf16 %v2812
      %v3092 = vunpack.c.h.bf16 %v2812
      %v3093 = vunpack.c.l.bf16 %v2813
      %v3094 = vunpack.c.h.bf16 %v2813
      %v3095 = vunpack.c.l.bf16 %v2814
      %v3096 = vunpack.c.h.bf16 %v2814
      %v3097 = vunpack.c.l.bf16 %v2815
      %v3098 = vunpack.c.h.bf16 %v2815
      %v3099 = vunpack.c.l.bf16 %v2816
      %v3100 = vunpack.c.h.bf16 %v2816
      %v3101 = vunpack.c.l.bf16 %v2817
      %v3102 = vunpack.c.h.bf16 %v2817
      %v3103 = vunpack.c.l.bf16 %v2818
      %v3104 = vunpack.c.h.bf16 %v2818
      %v3105 = vunpack.c.l.bf16 %v2819
      %v3106 = vunpack.c.h.bf16 %v2819
      %v3107 = vunpack.c.l.bf16 %v2820
      %v3108 = vunpack.c.h.bf16 %v2820
      %v3109 = vunpack.c.l.bf16 %v2821
      %v3110 = vunpack.c.h.bf16 %v2821
      %v3111 = vunpack.c.l.bf16 %v2822
      %v3112 = vunpack.c.h.bf16 %v2822
      %v3113 = vunpack.c.l.bf16 %v2823
      %v3114 = vunpack.c.h.bf16 %v2823
      %v3115 = vunpack.c.l.bf16 %v2824
      %v3116 = vunpack.c.h.bf16 %v2824
      %v3117 = vunpack.c.l.bf16 %v2825
      %v3118 = vunpack.c.h.bf16 %v2825
      %v3119 = vunpack.c.l.bf16 %v2826
      %v3120 = vunpack.c.h.bf16 %v2826
      %v3121 = vunpack.c.l.bf16 %v2827
      %v3122 = vunpack.c.h.bf16 %v2827
      %v3123 = vunpack.c.l.bf16 %v2828
      %v3124 = vunpack.c.h.bf16 %v2828
      %v3125 = vunpack.c.l.bf16 %v3017
      %v3126 = vunpack.c.h.bf16 %v3017
      %v3127 = vunpack.c.l.bf16 %v3018
      %v3128 = vunpack.c.h.bf16 %v3018
      %v3129 = vunpack.c.l.bf16 %v3019
      %v3130 = vunpack.c.h.bf16 %v3019
      %v3131 = vunpack.c.l.bf16 %v3020
      %v3132 = vunpack.c.h.bf16 %v3020
      %v3133 = vunpack.c.l.bf16 %v3021
      %v3134 = vunpack.c.h.bf16 %v3021
      %v3135 = vunpack.c.l.bf16 %v3022
      %v3136 = vunpack.c.h.bf16 %v3022
      %v3137 = vunpack.c.l.bf16 %v3023
      %v3138 = vunpack.c.h.bf16 %v3023
      %v3139 = vunpack.c.l.bf16 %v3024
      %v3140 = vunpack.c.h.bf16 %v3024
      %v3141 = vunpack.c.l.bf16 %v3025
      %v3142 = vunpack.c.h.bf16 %v3025
      %v3143 = vunpack.c.l.bf16 %v3026
      %v3144 = vunpack.c.h.bf16 %v3026
      %v3145 = vunpack.c.l.bf16 %v3027
      %v3146 = vunpack.c.h.bf16 %v3027
      %v3147 = vunpack.c.l.bf16 %v3028
      %v3148 = vunpack.c.h.bf16 %v3028
      %v3149 = vunpack.c.l.bf16 %v3029
      %v3150 = vunpack.c.h.bf16 %v3029
      %v3151 = vunpack.c.l.bf16 %v3030
      %v3152 = vunpack.c.h.bf16 %v3030
      %v3153 = vunpack.c.l.bf16 %v3031
      %v3154 = vunpack.c.h.bf16 %v3031
      %v3155 = vunpack.c.l.bf16 %v3032
      %v3156 = vunpack.c.h.bf16 %v3032
      %v3157 = vunpack.c.l.bf16 %v3033
      %v3158 = vunpack.c.h.bf16 %v3033
      %v3159 = vunpack.c.l.bf16 %v3034
      %v3160 = vunpack.c.h.bf16 %v3034
      %v3161 = vunpack.c.l.bf16 %v3035
      %v3162 = vunpack.c.h.bf16 %v3035
      %v3163 = vunpack.c.l.bf16 %v3036
      %v3164 = vunpack.c.h.bf16 %v3036
      %v3165 = vunpack.c.l.bf16 %v3037
      %v3166 = vunpack.c.h.bf16 %v3037
      %v3167 = vunpack.c.l.bf16 %v3038
      %v3168 = vunpack.c.h.bf16 %v3038
      %v3169 = vunpack.c.l.bf16 %v3039
      %v3170 = vunpack.c.h.bf16 %v3039
      %v3171 = vunpack.c.l.bf16 %v3040
      %v3172 = vunpack.c.h.bf16 %v3040
      %v3173 = vunpack.c.l.bf16 %v3041
      %v3174 = vunpack.c.h.bf16 %v3041
      %v3175 = vunpack.c.l.bf16 %v3042
      %v3176 = vunpack.c.h.bf16 %v3042
      %v3177 = vunpack.c.l.bf16 %v3043
      %v3178 = vunpack.c.h.bf16 %v3043
      %v3179 = vunpack.c.l.bf16 %v3044
      %v3180 = vunpack.c.h.bf16 %v3044
      %v3181 = vunpack.c.l.bf16 %v3045
      %v3182 = vunpack.c.h.bf16 %v3045
      %v3183 = vunpack.c.l.bf16 %v3046
      %v3184 = vunpack.c.h.bf16 %v3046
      %v3185 = vunpack.c.l.bf16 %v3047
      %v3186 = vunpack.c.h.bf16 %v3047
      %v3187 = vunpack.c.l.bf16 %v3048
      %v3188 = vunpack.c.h.bf16 %v3048
      %v3189 = vunpack.c.l.bf16 %v3049
      %v3190 = vunpack.c.h.bf16 %v3049
      %v3191 = vunpack.c.l.bf16 %v3050
      %v3192 = vunpack.c.h.bf16 %v3050
      %v3193 = vunpack.c.l.bf16 %v3051
      %v3194 = vunpack.c.h.bf16 %v3051
      %v3195 = vunpack.c.l.bf16 %v3052
      %v3196 = vunpack.c.h.bf16 %v3052
      %v3197 = vadd.f32 %v3053, %v3125
      %v3198 = vadd.f32 %v3054, %v3126
      %v3199 = vadd.f32 %v3055, %v3127
      %v3200 = vadd.f32 %v3056, %v3128
      %v3201 = vadd.f32 %v3057, %v3129
      %v3202 = vadd.f32 %v3058, %v3130
      %v3203 = vadd.f32 %v3059, %v3131
      %v3204 = vadd.f32 %v3060, %v3132
      %v3205 = vadd.f32 %v3061, %v3133
      %v3206 = vadd.f32 %v3062, %v3134
      %v3207 = vadd.f32 %v3063, %v3135
      %v3208 = vadd.f32 %v3064, %v3136
      %v3209 = vadd.f32 %v3065, %v3137
      %v3210 = vadd.f32 %v3066, %v3138
      %v3211 = vadd.f32 %v3067, %v3139
      %v3212 = vadd.f32 %v3068, %v3140
      %v3213 = vadd.f32 %v3069, %v3141
      %v3214 = vadd.f32 %v3070, %v3142
      %v3215 = vadd.f32 %v3071, %v3143
      %v3216 = vadd.f32 %v3072, %v3144
      %v3217 = vadd.f32 %v3073, %v3145
      %v3218 = vadd.f32 %v3074, %v3146
      %v3219 = vadd.f32 %v3075, %v3147
      %v3220 = vadd.f32 %v3076, %v3148
      %v3221 = vadd.f32 %v3077, %v3149
      %v3222 = vadd.f32 %v3078, %v3150
      %v3223 = vadd.f32 %v3079, %v3151
      %v3224 = vadd.f32 %v3080, %v3152
      %v3225 = vadd.f32 %v3081, %v3153
      %v3226 = vadd.f32 %v3082, %v3154
      %v3227 = vadd.f32 %v3083, %v3155
      %v3228 = vadd.f32 %v3084, %v3156
      %v3229 = vadd.f32 %v3085, %v3157
      %v3230 = vadd.f32 %v3086, %v3158
      %v3231 = vadd.f32 %v3087, %v3159
      %v3232 = vadd.f32 %v3088, %v3160
      %v3233 = vadd.f32 %v3089, %v3161
      %v3234 = vadd.f32 %v3090, %v3162
      %v3235 = vadd.f32 %v3091, %v3163
      %v3236 = vadd.f32 %v3092, %v3164
      %v3237 = vadd.f32 %v3093, %v3165
      %v3238 = vadd.f32 %v3094, %v3166
      %v3239 = vadd.f32 %v3095, %v3167
      %v3240 = vadd.f32 %v3096, %v3168
      %v3241 = vadd.f32 %v3097, %v3169
      %v3242 = vadd.f32 %v3098, %v3170
      %v3243 = vadd.f32 %v3099, %v3171
      %v3244 = vadd.f32 %v3100, %v3172
      %v3245 = vadd.f32 %v3101, %v3173
      %v3246 = vadd.f32 %v3102, %v3174
      %v3247 = vadd.f32 %v3103, %v3175
      %v3248 = vadd.f32 %v3104, %v3176
      %v3249 = vadd.f32 %v3105, %v3177
      %v3250 = vadd.f32 %v3106, %v3178
      %v3251 = vadd.f32 %v3107, %v3179
      %v3252 = vadd.f32 %v3108, %v3180
      %v3253 = vadd.f32 %v3109, %v3181
      %v3254 = vadd.f32 %v3110, %v3182
      %v3255 = vadd.f32 %v3111, %v3183
      %v3256 = vadd.f32 %v3112, %v3184
      %v3257 = vadd.f32 %v3113, %v3185
      %v3258 = vadd.f32 %v3114, %v3186
      %v3259 = vadd.f32 %v3115, %v3187
      %v3260 = vadd.f32 %v3116, %v3188
      %v3261 = vadd.f32 %v3117, %v3189
      %v3262 = vadd.f32 %v3118, %v3190
      %v3263 = vadd.f32 %v3119, %v3191
      %v3264 = vadd.f32 %v3120, %v3192
      %v3265 = vadd.f32 %v3121, %v3193
      %v3266 = vadd.f32 %v3122, %v3194
      %v3267 = vadd.f32 %v3123, %v3195
      %v3268 = vadd.f32 %v3124, %v3196
      %v3269 = vpack.c.bf16 %v3198, %v3197
      %v3270 = vpack.c.bf16 %v3200, %v3199
      %v3271 = vpack.c.bf16 %v3202, %v3201
      %v3272 = vpack.c.bf16 %v3204, %v3203
      %v3273 = vpack.c.bf16 %v3206, %v3205
      %v3274 = vpack.c.bf16 %v3208, %v3207
      %v3275 = vpack.c.bf16 %v3210, %v3209
      %v3276 = vpack.c.bf16 %v3212, %v3211
      %v3277 = vpack.c.bf16 %v3214, %v3213
      %v3278 = vpack.c.bf16 %v3216, %v3215
      %v3279 = vpack.c.bf16 %v3218, %v3217
      %v3280 = vpack.c.bf16 %v3220, %v3219
      %v3281 = vpack.c.bf16 %v3222, %v3221
      %v3282 = vpack.c.bf16 %v3224, %v3223
      %v3283 = vpack.c.bf16 %v3226, %v3225
      %v3284 = vpack.c.bf16 %v3228, %v3227
      %v3285 = vpack.c.bf16 %v3230, %v3229
      %v3286 = vpack.c.bf16 %v3232, %v3231
      %v3287 = vpack.c.bf16 %v3234, %v3233
      %v3288 = vpack.c.bf16 %v3236, %v3235
      %v3289 = vpack.c.bf16 %v3238, %v3237
      %v3290 = vpack.c.bf16 %v3240, %v3239
      %v3291 = vpack.c.bf16 %v3242, %v3241
      %v3292 = vpack.c.bf16 %v3244, %v3243
      %v3293 = vpack.c.bf16 %v3246, %v3245
      %v3294 = vpack.c.bf16 %v3248, %v3247
      %v3295 = vpack.c.bf16 %v3250, %v3249
      %v3296 = vpack.c.bf16 %v3252, %v3251
      %v3297 = vpack.c.bf16 %v3254, %v3253
      %v3298 = vpack.c.bf16 %v3256, %v3255
      %v3299 = vpack.c.bf16 %v3258, %v3257
      %v3300 = vpack.c.bf16 %v3260, %v3259
      %v3301 = vpack.c.bf16 %v3262, %v3261
      %v3302 = vpack.c.bf16 %v3264, %v3263
      %v3303 = vpack.c.bf16 %v3266, %v3265
      %v3304 = vpack.c.bf16 %v3268, %v3267
      %v3305 = vld [vmem:[%s1458] sm:$0xff]
      %v3306 = vld [vmem:[%s1458 + $0x8] sm:$0xff]
      %v3307 = vld [vmem:[%s1458 + $0x10] sm:$0xff]
      %v3308 = vld [vmem:[%s1458 + $0x18] sm:$0xff]
      %v3309 = vld [vmem:[%s1458 + $0x20] sm:$0xff]
      %v3310 = vld [vmem:[%s1458 + $0x28] sm:$0xff]
      %v3311 = vld [vmem:[%s1458 + $0x30] sm:$0xff]
      %v3312 = vld [vmem:[%s1458 + $0x38] sm:$0xff]
      %v3313 = vld [vmem:[%s1458 + $0x40] sm:$0xff]
      %v3314 = vld [vmem:[%s1458 + $0x48] sm:$0xff]
      %v3315 = vld [vmem:[%s1458 + $0x50] sm:$0xff]
      %v3316 = vld [vmem:[%s1458 + $0x58] sm:$0xff]
      %v3317 = vld [vmem:[%s1458 + $0x60] sm:$0xff]
      %v3318 = vld [vmem:[%s1458 + $0x68] sm:$0xff]
      %v3319 = vld [vmem:[%s1458 + $0x70] sm:$0xff]
      %v3320 = vld [vmem:[%s1458 + $0x78] sm:$0xff]
      %v3321 = vld [vmem:[%s1458 + $0x80] sm:$0xff]
      %v3322 = vld [vmem:[%s1458 + $0x88] sm:$0xff]
      %v3323 = vld [vmem:[%s1458 + $0x90] sm:$0xff]
      %v3324 = vld [vmem:[%s1458 + $0x98] sm:$0xff]
      %v3325 = vld [vmem:[%s1458 + $0xa0] sm:$0xff]
      %v3326 = vld [vmem:[%s1458 + $0xa8] sm:$0xff]
      %v3327 = vld [vmem:[%s1458 + $0xb0] sm:$0xff]
      %v3328 = vld [vmem:[%s1458 + $0xb8] sm:$0xff]
      %v3329 = vld [vmem:[%s1458 + $0xc0] sm:$0xff]
      %v3330 = vld [vmem:[%s1458 + $0xc8] sm:$0xff]
      %v3331 = vld [vmem:[%s1458 + $0xd0] sm:$0xff]
      %v3332 = vld [vmem:[%s1458 + $0xd8] sm:$0xff]
      %v3333 = vld [vmem:[%s1458 + $0xe0] sm:$0xff]
      %v3334 = vld [vmem:[%s1458 + $0xe8] sm:$0xff]
      %v3335 = vld [vmem:[%s1458 + $0xf0] sm:$0xff]
      %v3336 = vld [vmem:[%s1458 + $0xf8] sm:$0xff]
      %v3337 = vld [vmem:[%s1458 + $0x100] sm:$0xff]
      %v3338 = vld [vmem:[%s1458 + $0x108] sm:$0xff]
      %v3339 = vld [vmem:[%s1458 + $0x110] sm:$0xff]
      %v3340 = vld [vmem:[%s1458 + $0x118] sm:$0xff]
      %3341 = vrot.lane.b32.xlu0 %v2165, 125
      %v3342 = vpop.permute.xlu0 %3341
      %s3344 = vtos %v3342
      %v3345 = vstv %s3344
      %v3346 = vpack.i.b16 %v3345, %v3345
      %v3348 = vunpack.c.l.bf16 %v3305
      %v3349 = vunpack.c.h.bf16 %v3305
      %v3350 = vunpack.c.l.bf16 %v3306
      %v3351 = vunpack.c.h.bf16 %v3306
      %v3352 = vunpack.c.l.bf16 %v3307
      %v3353 = vunpack.c.h.bf16 %v3307
      %v3354 = vunpack.c.l.bf16 %v3308
      %v3355 = vunpack.c.h.bf16 %v3308
      %v3356 = vunpack.c.l.bf16 %v3309
      %v3357 = vunpack.c.h.bf16 %v3309
      %v3358 = vunpack.c.l.bf16 %v3310
      %v3359 = vunpack.c.h.bf16 %v3310
      %v3360 = vunpack.c.l.bf16 %v3311
      %v3361 = vunpack.c.h.bf16 %v3311
      %v3362 = vunpack.c.l.bf16 %v3312
      %v3363 = vunpack.c.h.bf16 %v3312
      %v3364 = vunpack.c.l.bf16 %v3313
      %v3365 = vunpack.c.h.bf16 %v3313
      %v3366 = vunpack.c.l.bf16 %v3314
      %v3367 = vunpack.c.h.bf16 %v3314
      %v3368 = vunpack.c.l.bf16 %v3315
      %v3369 = vunpack.c.h.bf16 %v3315
      %v3370 = vunpack.c.l.bf16 %v3316
      %v3371 = vunpack.c.h.bf16 %v3316
      %v3372 = vunpack.c.l.bf16 %v3317
      %v3373 = vunpack.c.h.bf16 %v3317
      %v3374 = vunpack.c.l.bf16 %v3318
      %v3375 = vunpack.c.h.bf16 %v3318
      %v3376 = vunpack.c.l.bf16 %v3319
      %v3377 = vunpack.c.h.bf16 %v3319
      %v3378 = vunpack.c.l.bf16 %v3320
      %v3379 = vunpack.c.h.bf16 %v3320
      %v3380 = vunpack.c.l.bf16 %v3321
      %v3381 = vunpack.c.h.bf16 %v3321
      %v3382 = vunpack.c.l.bf16 %v3322
      %v3383 = vunpack.c.h.bf16 %v3322
      %v3384 = vunpack.c.l.bf16 %v3323
      %v3385 = vunpack.c.h.bf16 %v3323
      %v3386 = vunpack.c.l.bf16 %v3324
      %v3387 = vunpack.c.h.bf16 %v3324
      %v3388 = vunpack.c.l.bf16 %v3325
      %v3389 = vunpack.c.h.bf16 %v3325
      %v3390 = vunpack.c.l.bf16 %v3326
      %v3391 = vunpack.c.h.bf16 %v3326
      %v3392 = vunpack.c.l.bf16 %v3327
      %v3393 = vunpack.c.h.bf16 %v3327
      %v3394 = vunpack.c.l.bf16 %v3328
      %v3395 = vunpack.c.h.bf16 %v3328
      %v3396 = vunpack.c.l.bf16 %v3329
      %v3397 = vunpack.c.h.bf16 %v3329
      %v3398 = vunpack.c.l.bf16 %v3330
      %v3399 = vunpack.c.h.bf16 %v3330
      %v3400 = vunpack.c.l.bf16 %v3331
      %v3401 = vunpack.c.h.bf16 %v3331
      %v3402 = vunpack.c.l.bf16 %v3332
      %v3403 = vunpack.c.h.bf16 %v3332
      %v3404 = vunpack.c.l.bf16 %v3333
      %v3405 = vunpack.c.h.bf16 %v3333
      %v3406 = vunpack.c.l.bf16 %v3334
      %v3407 = vunpack.c.h.bf16 %v3334
      %v3408 = vunpack.c.l.bf16 %v3335
      %v3409 = vunpack.c.h.bf16 %v3335
      %v3410 = vunpack.c.l.bf16 %v3336
      %v3411 = vunpack.c.h.bf16 %v3336
      %v3412 = vunpack.c.l.bf16 %v3337
      %v3413 = vunpack.c.h.bf16 %v3337
      %v3414 = vunpack.c.l.bf16 %v3338
      %v3415 = vunpack.c.h.bf16 %v3338
      %v3416 = vunpack.c.l.bf16 %v3339
      %v3417 = vunpack.c.h.bf16 %v3339
      %v3418 = vunpack.c.l.bf16 %v3340
      %v3419 = vunpack.c.h.bf16 %v3340
      %v3420 = vunpack.c.l.bf16 %v3346
      %v3421 = vmul.f32 %v3348, %v3420
      %v3422 = vmul.f32 %v3349, %v3420
      %v3423 = vmul.f32 %v3350, %v3420
      %v3424 = vmul.f32 %v3351, %v3420
      %v3425 = vmul.f32 %v3352, %v3420
      %v3426 = vmul.f32 %v3353, %v3420
      %v3427 = vmul.f32 %v3354, %v3420
      %v3428 = vmul.f32 %v3355, %v3420
      %v3429 = vmul.f32 %v3356, %v3420
      %v3430 = vmul.f32 %v3357, %v3420
      %v3431 = vmul.f32 %v3358, %v3420
      %v3432 = vmul.f32 %v3359, %v3420
      %v3433 = vmul.f32 %v3360, %v3420
      %v3434 = vmul.f32 %v3361, %v3420
      %v3435 = vmul.f32 %v3362, %v3420
      %v3436 = vmul.f32 %v3363, %v3420
      %v3437 = vmul.f32 %v3364, %v3420
      %v3438 = vmul.f32 %v3365, %v3420
      %v3439 = vmul.f32 %v3366, %v3420
      %v3440 = vmul.f32 %v3367, %v3420
      %v3441 = vmul.f32 %v3368, %v3420
      %v3442 = vmul.f32 %v3369, %v3420
      %v3443 = vmul.f32 %v3370, %v3420
      %v3444 = vmul.f32 %v3371, %v3420
      %v3445 = vmul.f32 %v3372, %v3420
      %v3446 = vmul.f32 %v3373, %v3420
      %v3447 = vmul.f32 %v3374, %v3420
      %v3448 = vmul.f32 %v3375, %v3420
      %v3449 = vmul.f32 %v3376, %v3420
      %v3450 = vmul.f32 %v3377, %v3420
      %v3451 = vmul.f32 %v3378, %v3420
      %v3452 = vmul.f32 %v3379, %v3420
      %v3453 = vmul.f32 %v3380, %v3420
      %v3454 = vmul.f32 %v3381, %v3420
      %v3455 = vmul.f32 %v3382, %v3420
      %v3456 = vmul.f32 %v3383, %v3420
      %v3457 = vmul.f32 %v3384, %v3420
      %v3458 = vmul.f32 %v3385, %v3420
      %v3459 = vmul.f32 %v3386, %v3420
      %v3460 = vmul.f32 %v3387, %v3420
      %v3461 = vmul.f32 %v3388, %v3420
      %v3462 = vmul.f32 %v3389, %v3420
      %v3463 = vmul.f32 %v3390, %v3420
      %v3464 = vmul.f32 %v3391, %v3420
      %v3465 = vmul.f32 %v3392, %v3420
      %v3466 = vmul.f32 %v3393, %v3420
      %v3467 = vmul.f32 %v3394, %v3420
      %v3468 = vmul.f32 %v3395, %v3420
      %v3469 = vmul.f32 %v3396, %v3420
      %v3470 = vmul.f32 %v3397, %v3420
      %v3471 = vmul.f32 %v3398, %v3420
      %v3472 = vmul.f32 %v3399, %v3420
      %v3473 = vmul.f32 %v3400, %v3420
      %v3474 = vmul.f32 %v3401, %v3420
      %v3475 = vmul.f32 %v3402, %v3420
      %v3476 = vmul.f32 %v3403, %v3420
      %v3477 = vmul.f32 %v3404, %v3420
      %v3478 = vmul.f32 %v3405, %v3420
      %v3479 = vmul.f32 %v3406, %v3420
      %v3480 = vmul.f32 %v3407, %v3420
      %v3481 = vmul.f32 %v3408, %v3420
      %v3482 = vmul.f32 %v3409, %v3420
      %v3483 = vmul.f32 %v3410, %v3420
      %v3484 = vmul.f32 %v3411, %v3420
      %v3485 = vmul.f32 %v3412, %v3420
      %v3486 = vmul.f32 %v3413, %v3420
      %v3487 = vmul.f32 %v3414, %v3420
      %v3488 = vmul.f32 %v3415, %v3420
      %v3489 = vmul.f32 %v3416, %v3420
      %v3490 = vmul.f32 %v3417, %v3420
      %v3491 = vmul.f32 %v3418, %v3420
      %v3492 = vmul.f32 %v3419, %v3420
      %v3493 = vpack.c.bf16 %v3422, %v3421
      %v3494 = vpack.c.bf16 %v3424, %v3423
      %v3495 = vpack.c.bf16 %v3426, %v3425
      %v3496 = vpack.c.bf16 %v3428, %v3427
      %v3497 = vpack.c.bf16 %v3430, %v3429
      %v3498 = vpack.c.bf16 %v3432, %v3431
      %v3499 = vpack.c.bf16 %v3434, %v3433
      %v3500 = vpack.c.bf16 %v3436, %v3435
      %v3501 = vpack.c.bf16 %v3438, %v3437
      %v3502 = vpack.c.bf16 %v3440, %v3439
      %v3503 = vpack.c.bf16 %v3442, %v3441
      %v3504 = vpack.c.bf16 %v3444, %v3443
      %v3505 = vpack.c.bf16 %v3446, %v3445
      %v3506 = vpack.c.bf16 %v3448, %v3447
      %v3507 = vpack.c.bf16 %v3450, %v3449
      %v3508 = vpack.c.bf16 %v3452, %v3451
      %v3509 = vpack.c.bf16 %v3454, %v3453
      %v3510 = vpack.c.bf16 %v3456, %v3455
      %v3511 = vpack.c.bf16 %v3458, %v3457
      %v3512 = vpack.c.bf16 %v3460, %v3459
      %v3513 = vpack.c.bf16 %v3462, %v3461
      %v3514 = vpack.c.bf16 %v3464, %v3463
      %v3515 = vpack.c.bf16 %v3466, %v3465
      %v3516 = vpack.c.bf16 %v3468, %v3467
      %v3517 = vpack.c.bf16 %v3470, %v3469
      %v3518 = vpack.c.bf16 %v3472, %v3471
      %v3519 = vpack.c.bf16 %v3474, %v3473
      %v3520 = vpack.c.bf16 %v3476, %v3475
      %v3521 = vpack.c.bf16 %v3478, %v3477
      %v3522 = vpack.c.bf16 %v3480, %v3479
      %v3523 = vpack.c.bf16 %v3482, %v3481
      %v3524 = vpack.c.bf16 %v3484, %v3483
      %v3525 = vpack.c.bf16 %v3486, %v3485
      %v3526 = vpack.c.bf16 %v3488, %v3487
      %v3527 = vpack.c.bf16 %v3490, %v3489
      %v3528 = vpack.c.bf16 %v3492, %v3491
      %v3529 = vunpack.c.l.bf16 %v3269
      %v3530 = vunpack.c.h.bf16 %v3269
      %v3531 = vunpack.c.l.bf16 %v3270
      %v3532 = vunpack.c.h.bf16 %v3270
      %v3533 = vunpack.c.l.bf16 %v3271
      %v3534 = vunpack.c.h.bf16 %v3271
      %v3535 = vunpack.c.l.bf16 %v3272
      %v3536 = vunpack.c.h.bf16 %v3272
      %v3537 = vunpack.c.l.bf16 %v3273
      %v3538 = vunpack.c.h.bf16 %v3273
      %v3539 = vunpack.c.l.bf16 %v3274
      %v3540 = vunpack.c.h.bf16 %v3274
      %v3541 = vunpack.c.l.bf16 %v3275
      %v3542 = vunpack.c.h.bf16 %v3275
      %v3543 = vunpack.c.l.bf16 %v3276
      %v3544 = vunpack.c.h.bf16 %v3276
      %v3545 = vunpack.c.l.bf16 %v3277
      %v3546 = vunpack.c.h.bf16 %v3277
      %v3547 = vunpack.c.l.bf16 %v3278
      %v3548 = vunpack.c.h.bf16 %v3278
      %v3549 = vunpack.c.l.bf16 %v3279
      %v3550 = vunpack.c.h.bf16 %v3279
      %v3551 = vunpack.c.l.bf16 %v3280
      %v3552 = vunpack.c.h.bf16 %v3280
      %v3553 = vunpack.c.l.bf16 %v3281
      %v3554 = vunpack.c.h.bf16 %v3281
      %v3555 = vunpack.c.l.bf16 %v3282
      %v3556 = vunpack.c.h.bf16 %v3282
      %v3557 = vunpack.c.l.bf16 %v3283
      %v3558 = vunpack.c.h.bf16 %v3283
      %v3559 = vunpack.c.l.bf16 %v3284
      %v3560 = vunpack.c.h.bf16 %v3284
      %v3561 = vunpack.c.l.bf16 %v3285
      %v3562 = vunpack.c.h.bf16 %v3285
      %v3563 = vunpack.c.l.bf16 %v3286
      %v3564 = vunpack.c.h.bf16 %v3286
      %v3565 = vunpack.c.l.bf16 %v3287
      %v3566 = vunpack.c.h.bf16 %v3287
      %v3567 = vunpack.c.l.bf16 %v3288
      %v3568 = vunpack.c.h.bf16 %v3288
      %v3569 = vunpack.c.l.bf16 %v3289
      %v3570 = vunpack.c.h.bf16 %v3289
      %v3571 = vunpack.c.l.bf16 %v3290
      %v3572 = vunpack.c.h.bf16 %v3290
      %v3573 = vunpack.c.l.bf16 %v3291
      %v3574 = vunpack.c.h.bf16 %v3291
      %v3575 = vunpack.c.l.bf16 %v3292
      %v3576 = vunpack.c.h.bf16 %v3292
      %v3577 = vunpack.c.l.bf16 %v3293
      %v3578 = vunpack.c.h.bf16 %v3293
      %v3579 = vunpack.c.l.bf16 %v3294
      %v3580 = vunpack.c.h.bf16 %v3294
      %v3581 = vunpack.c.l.bf16 %v3295
      %v3582 = vunpack.c.h.bf16 %v3295
      %v3583 = vunpack.c.l.bf16 %v3296
      %v3584 = vunpack.c.h.bf16 %v3296
      %v3585 = vunpack.c.l.bf16 %v3297
      %v3586 = vunpack.c.h.bf16 %v3297
      %v3587 = vunpack.c.l.bf16 %v3298
      %v3588 = vunpack.c.h.bf16 %v3298
      %v3589 = vunpack.c.l.bf16 %v3299
      %v3590 = vunpack.c.h.bf16 %v3299
      %v3591 = vunpack.c.l.bf16 %v3300
      %v3592 = vunpack.c.h.bf16 %v3300
      %v3593 = vunpack.c.l.bf16 %v3301
      %v3594 = vunpack.c.h.bf16 %v3301
      %v3595 = vunpack.c.l.bf16 %v3302
      %v3596 = vunpack.c.h.bf16 %v3302
      %v3597 = vunpack.c.l.bf16 %v3303
      %v3598 = vunpack.c.h.bf16 %v3303
      %v3599 = vunpack.c.l.bf16 %v3304
      %v3600 = vunpack.c.h.bf16 %v3304
      %v3601 = vunpack.c.l.bf16 %v3493
      %v3602 = vunpack.c.h.bf16 %v3493
      %v3603 = vunpack.c.l.bf16 %v3494
      %v3604 = vunpack.c.h.bf16 %v3494
      %v3605 = vunpack.c.l.bf16 %v3495
      %v3606 = vunpack.c.h.bf16 %v3495
      %v3607 = vunpack.c.l.bf16 %v3496
      %v3608 = vunpack.c.h.bf16 %v3496
      %v3609 = vunpack.c.l.bf16 %v3497
      %v3610 = vunpack.c.h.bf16 %v3497
      %v3611 = vunpack.c.l.bf16 %v3498
      %v3612 = vunpack.c.h.bf16 %v3498
      %v3613 = vunpack.c.l.bf16 %v3499
      %v3614 = vunpack.c.h.bf16 %v3499
      %v3615 = vunpack.c.l.bf16 %v3500
      %v3616 = vunpack.c.h.bf16 %v3500
      %v3617 = vunpack.c.l.bf16 %v3501
      %v3618 = vunpack.c.h.bf16 %v3501
      %v3619 = vunpack.c.l.bf16 %v3502
      %v3620 = vunpack.c.h.bf16 %v3502
      %v3621 = vunpack.c.l.bf16 %v3503
      %v3622 = vunpack.c.h.bf16 %v3503
      %v3623 = vunpack.c.l.bf16 %v3504
      %v3624 = vunpack.c.h.bf16 %v3504
      %v3625 = vunpack.c.l.bf16 %v3505
      %v3626 = vunpack.c.h.bf16 %v3505
      %v3627 = vunpack.c.l.bf16 %v3506
      %v3628 = vunpack.c.h.bf16 %v3506
      %v3629 = vunpack.c.l.bf16 %v3507
      %v3630 = vunpack.c.h.bf16 %v3507
      %v3631 = vunpack.c.l.bf16 %v3508
      %v3632 = vunpack.c.h.bf16 %v3508
      %v3633 = vunpack.c.l.bf16 %v3509
      %v3634 = vunpack.c.h.bf16 %v3509
      %v3635 = vunpack.c.l.bf16 %v3510
      %v3636 = vunpack.c.h.bf16 %v3510
      %v3637 = vunpack.c.l.bf16 %v3511
      %v3638 = vunpack.c.h.bf16 %v3511
      %v3639 = vunpack.c.l.bf16 %v3512
      %v3640 = vunpack.c.h.bf16 %v3512
      %v3641 = vunpack.c.l.bf16 %v3513
      %v3642 = vunpack.c.h.bf16 %v3513
      %v3643 = vunpack.c.l.bf16 %v3514
      %v3644 = vunpack.c.h.bf16 %v3514
      %v3645 = vunpack.c.l.bf16 %v3515
      %v3646 = vunpack.c.h.bf16 %v3515
      %v3647 = vunpack.c.l.bf16 %v3516
      %v3648 = vunpack.c.h.bf16 %v3516
      %v3649 = vunpack.c.l.bf16 %v3517
      %v3650 = vunpack.c.h.bf16 %v3517
      %v3651 = vunpack.c.l.bf16 %v3518
      %v3652 = vunpack.c.h.bf16 %v3518
      %v3653 = vunpack.c.l.bf16 %v3519
      %v3654 = vunpack.c.h.bf16 %v3519
      %v3655 = vunpack.c.l.bf16 %v3520
      %v3656 = vunpack.c.h.bf16 %v3520
      %v3657 = vunpack.c.l.bf16 %v3521
      %v3658 = vunpack.c.h.bf16 %v3521
      %v3659 = vunpack.c.l.bf16 %v3522
      %v3660 = vunpack.c.h.bf16 %v3522
      %v3661 = vunpack.c.l.bf16 %v3523
      %v3662 = vunpack.c.h.bf16 %v3523
      %v3663 = vunpack.c.l.bf16 %v3524
      %v3664 = vunpack.c.h.bf16 %v3524
      %v3665 = vunpack.c.l.bf16 %v3525
      %v3666 = vunpack.c.h.bf16 %v3525
      %v3667 = vunpack.c.l.bf16 %v3526
      %v3668 = vunpack.c.h.bf16 %v3526
      %v3669 = vunpack.c.l.bf16 %v3527
      %v3670 = vunpack.c.h.bf16 %v3527
      %v3671 = vunpack.c.l.bf16 %v3528
      %v3672 = vunpack.c.h.bf16 %v3528
      %v3673 = vadd.f32 %v3529, %v3601
      %v3674 = vadd.f32 %v3530, %v3602
      %v3675 = vadd.f32 %v3531, %v3603
      %v3676 = vadd.f32 %v3532, %v3604
      %v3677 = vadd.f32 %v3533, %v3605
      %v3678 = vadd.f32 %v3534, %v3606
      %v3679 = vadd.f32 %v3535, %v3607
      %v3680 = vadd.f32 %v3536, %v3608
      %v3681 = vadd.f32 %v3537, %v3609
      %v3682 = vadd.f32 %v3538, %v3610
      %v3683 = vadd.f32 %v3539, %v3611
      %v3684 = vadd.f32 %v3540, %v3612
      %v3685 = vadd.f32 %v3541, %v3613
      %v3686 = vadd.f32 %v3542, %v3614
      %v3687 = vadd.f32 %v3543, %v3615
      %v3688 = vadd.f32 %v3544, %v3616
      %v3689 = vadd.f32 %v3545, %v3617
      %v3690 = vadd.f32 %v3546, %v3618
      %v3691 = vadd.f32 %v3547, %v3619
      %v3692 = vadd.f32 %v3548, %v3620
      %v3693 = vadd.f32 %v3549, %v3621
      %v3694 = vadd.f32 %v3550, %v3622
      %v3695 = vadd.f32 %v3551, %v3623
      %v3696 = vadd.f32 %v3552, %v3624
      %v3697 = vadd.f32 %v3553, %v3625
      %v3698 = vadd.f32 %v3554, %v3626
      %v3699 = vadd.f32 %v3555, %v3627
      %v3700 = vadd.f32 %v3556, %v3628
      %v3701 = vadd.f32 %v3557, %v3629
      %v3702 = vadd.f32 %v3558, %v3630
      %v3703 = vadd.f32 %v3559, %v3631
      %v3704 = vadd.f32 %v3560, %v3632
      %v3705 = vadd.f32 %v3561, %v3633
      %v3706 = vadd.f32 %v3562, %v3634
      %v3707 = vadd.f32 %v3563, %v3635
      %v3708 = vadd.f32 %v3564, %v3636
      %v3709 = vadd.f32 %v3565, %v3637
      %v3710 = vadd.f32 %v3566, %v3638
      %v3711 = vadd.f32 %v3567, %v3639
      %v3712 = vadd.f32 %v3568, %v3640
      %v3713 = vadd.f32 %v3569, %v3641
      %v3714 = vadd.f32 %v3570, %v3642
      %v3715 = vadd.f32 %v3571, %v3643
      %v3716 = vadd.f32 %v3572, %v3644
      %v3717 = vadd.f32 %v3573, %v3645
      %v3718 = vadd.f32 %v3574, %v3646
      %v3719 = vadd.f32 %v3575, %v3647
      %v3720 = vadd.f32 %v3576, %v3648
      %v3721 = vadd.f32 %v3577, %v3649
      %v3722 = vadd.f32 %v3578, %v3650
      %v3723 = vadd.f32 %v3579, %v3651
      %v3724 = vadd.f32 %v3580, %v3652
      %v3725 = vadd.f32 %v3581, %v3653
      %v3726 = vadd.f32 %v3582, %v3654
      %v3727 = vadd.f32 %v3583, %v3655
      %v3728 = vadd.f32 %v3584, %v3656
      %v3729 = vadd.f32 %v3585, %v3657
      %v3730 = vadd.f32 %v3586, %v3658
      %v3731 = vadd.f32 %v3587, %v3659
      %v3732 = vadd.f32 %v3588, %v3660
      %v3733 = vadd.f32 %v3589, %v3661
      %v3734 = vadd.f32 %v3590, %v3662
      %v3735 = vadd.f32 %v3591, %v3663
      %v3736 = vadd.f32 %v3592, %v3664
      %v3737 = vadd.f32 %v3593, %v3665
      %v3738 = vadd.f32 %v3594, %v3666
      %v3739 = vadd.f32 %v3595, %v3667
      %v3740 = vadd.f32 %v3596, %v3668
      %v3741 = vadd.f32 %v3597, %v3669
      %v3742 = vadd.f32 %v3598, %v3670
      %v3743 = vadd.f32 %v3599, %v3671
      %v3744 = vadd.f32 %v3600, %v3672
      %v3745 = vpack.c.bf16 %v3677, %v3673
      %v3746 = vpack.c.bf16 %v3678, %v3674
      %v3747 = vpack.c.bf16 %v3679, %v3675
      %v3748 = vpack.c.bf16 %v3680, %v3676
      %v3749 = vpack.c.bf16 %v3685, %v3681
      %v3750 = vpack.c.bf16 %v3686, %v3682
      %v3751 = vpack.c.bf16 %v3687, %v3683
      %v3752 = vpack.c.bf16 %v3688, %v3684
      %v3753 = vpack.c.bf16 %v3693, %v3689
      %v3754 = vpack.c.bf16 %v3694, %v3690
      %v3755 = vpack.c.bf16 %v3695, %v3691
      %v3756 = vpack.c.bf16 %v3696, %v3692
      %v3757 = vpack.c.bf16 %v3701, %v3697
      %v3758 = vpack.c.bf16 %v3702, %v3698
      %v3759 = vpack.c.bf16 %v3703, %v3699
      %v3760 = vpack.c.bf16 %v3704, %v3700
      %v3761 = vpack.c.bf16 %v3709, %v3705
      %v3762 = vpack.c.bf16 %v3710, %v3706
      %v3763 = vpack.c.bf16 %v3711, %v3707
      %v3764 = vpack.c.bf16 %v3712, %v3708
      %v3765 = vpack.c.bf16 %v3717, %v3713
      %v3766 = vpack.c.bf16 %v3718, %v3714
      %v3767 = vpack.c.bf16 %v3719, %v3715
      %v3768 = vpack.c.bf16 %v3720, %v3716
      %v3769 = vpack.c.bf16 %v3725, %v3721
      %v3770 = vpack.c.bf16 %v3726, %v3722
      %v3771 = vpack.c.bf16 %v3727, %v3723
      %v3772 = vpack.c.bf16 %v3728, %v3724
      %v3773 = vpack.c.bf16 %v3733, %v3729
      %v3774 = vpack.c.bf16 %v3734, %v3730
      %v3775 = vpack.c.bf16 %v3735, %v3731
      %v3776 = vpack.c.bf16 %v3736, %v3732
      %v3777 = vpack.c.bf16 %v3741, %v3737
      %v3778 = vpack.c.bf16 %v3742, %v3738
      %v3779 = vpack.c.bf16 %v3743, %v3739
      %v3780 = vpack.c.bf16 %v3744, %v3740
      %s3781 = scalar_lea.vmem [#allocation9], 16
      %v3782 = vld [vmem:[%s3781] sm:$0xff]
      %v3783 = vld [vmem:[%s3781 + $0x8] sm:$0xff]
      %v3786 = vunpack.c.l.b16 %v3782
      %v3787 = vunpack.c.h.b16 %v3782
      %v3788 = vunpack.c.l.b16 %v3783
      %v3789 = vunpack.c.h.b16 %v3783
      %v3790 = vpack.c.b16 %v3788, %v3786
      %v3791 = vpack.c.b16 %v3789, %v3787
      %v3794 = vsel %vm1946, %v3791, 0
      %3796 = vmatpush.bf16.msra.mxu0 %v3773
      %3797 = vmatpush.bf16.msra.mxu0 %v3769
      %3798 = vmatpush.bf16.msra.mxu0 %v3765
      %3799 = vmatpush.bf16.msra.mxu0 %v3761
      %3800 = vmatpush.bf16.msra.mxu0 %v3757
      %3801 = vmatpush.bf16.msra.mxu0 %v3753
      %3802 = vmatpush.bf16.msra.mxu0 %v3749
      %3803 = vmatpush.bf16.msra.mxu0 %v3745
      %3804 = vmatmul.bf16.gmra.mxu0 %v3790
      %v3805 = vpop.f32.mrf.mxu0
      %v3806 = vadd.f32 0.0, %v3805
      %v3807 = vpop.f32.mrf.mxu0
      %v3808 = vadd.f32 0.0, %v3807
      %3809 = vdwg.mxu0
      %3810 = vmatpush.bf16.msra.mxu0 0
      %3811 = vmatpush.bf16.msra.mxu0 0
      %3812 = vmatpush.bf16.msra.mxu0 0
      %3813 = vmatpush.bf16.msra.mxu0 0
      %3814 = vmatpush.bf16.msra.mxu0 0
      %3815 = vmatpush.bf16.msra.mxu0 0
      %3816 = vmatpush.bf16.msra.mxu0 0
      %3817 = vmatpush.bf16.msra.mxu0 %v3777
      %3818 = vmatmul.bf16.gmra.mxu0 %v3794
      %v3819 = vpop.f32.mrf.mxu0
      %v3820 = vadd.f32 %v3806, %v3819
      %v3821 = vpop.f32.mrf.mxu0
      %v3822 = vadd.f32 %v3808, %v3821
      %3823 = vdwg.mxu0
      %3824 = vmatpush.bf16.msra.mxu0 %v3774
      %3825 = vmatpush.bf16.msra.mxu0 %v3770
      %3826 = vmatpush.bf16.msra.mxu0 %v3766
      %3827 = vmatpush.bf16.msra.mxu0 %v3762
      %3828 = vmatpush.bf16.msra.mxu0 %v3758
      %3829 = vmatpush.bf16.msra.mxu0 %v3754
      %3830 = vmatpush.bf16.msra.mxu0 %v3750
      %3831 = vmatpush.bf16.msra.mxu0 %v3746
      %3832 = vmatmul.bf16.gmra.mxu0 %v3790
      %v3833 = vpop.f32.mrf.mxu0
      %v3834 = vadd.f32 0.0, %v3833
      %v3835 = vpop.f32.mrf.mxu0
      %v3836 = vadd.f32 0.0, %v3835
      %3837 = vdwg.mxu0
      %3838 = vmatpush.bf16.msra.mxu0 0
      %3839 = vmatpush.bf16.msra.mxu0 0
      %3840 = vmatpush.bf16.msra.mxu0 0
      %3841 = vmatpush.bf16.msra.mxu0 0
      %3842 = vmatpush.bf16.msra.mxu0 0
      %3843 = vmatpush.bf16.msra.mxu0 0
      %3844 = vmatpush.bf16.msra.mxu0 0
      %3845 = vmatpush.bf16.msra.mxu0 %v3778
      %3846 = vmatmul.bf16.gmra.mxu0 %v3794
      %v3847 = vpop.f32.mrf.mxu0
      %v3848 = vadd.f32 %v3834, %v3847
      %v3849 = vpop.f32.mrf.mxu0
      %v3850 = vadd.f32 %v3836, %v3849
      %3851 = vdwg.mxu0
      %3852 = vmatpush.bf16.msra.mxu0 %v3775
      %3853 = vmatpush.bf16.msra.mxu0 %v3771
      %3854 = vmatpush.bf16.msra.mxu0 %v3767
      %3855 = vmatpush.bf16.msra.mxu0 %v3763
      %3856 = vmatpush.bf16.msra.mxu0 %v3759
      %3857 = vmatpush.bf16.msra.mxu0 %v3755
      %3858 = vmatpush.bf16.msra.mxu0 %v3751
      %3859 = vmatpush.bf16.msra.mxu0 %v3747
      %3860 = vmatmul.bf16.gmra.mxu0 %v3790
      %v3861 = vpop.f32.mrf.mxu0
      %v3862 = vadd.f32 0.0, %v3861
      %v3863 = vpop.f32.mrf.mxu0
      %v3864 = vadd.f32 0.0, %v3863
      %3865 = vdwg.mxu0
      %3866 = vmatpush.bf16.msra.mxu0 0
      %3867 = vmatpush.bf16.msra.mxu0 0
      %3868 = vmatpush.bf16.msra.mxu0 0
      %3869 = vmatpush.bf16.msra.mxu0 0
      %3870 = vmatpush.bf16.msra.mxu0 0
      %3871 = vmatpush.bf16.msra.mxu0 0
      %3872 = vmatpush.bf16.msra.mxu0 0
      %3873 = vmatpush.bf16.msra.mxu0 %v3779
      %3874 = vmatmul.bf16.gmra.mxu0 %v3794
      %v3875 = vpop.f32.mrf.mxu0
      %v3876 = vadd.f32 %v3862, %v3875
      %v3877 = vpop.f32.mrf.mxu0
      %v3878 = vadd.f32 %v3864, %v3877
      %3879 = vdwg.mxu0
      %3880 = vmatpush.bf16.msra.mxu0 %v3776
      %3881 = vmatpush.bf16.msra.mxu0 %v3772
      %3882 = vmatpush.bf16.msra.mxu0 %v3768
      %3883 = vmatpush.bf16.msra.mxu0 %v3764
      %3884 = vmatpush.bf16.msra.mxu0 %v3760
      %3885 = vmatpush.bf16.msra.mxu0 %v3756
      %3886 = vmatpush.bf16.msra.mxu0 %v3752
      %3887 = vmatpush.bf16.msra.mxu0 %v3748
      %3888 = vmatmul.bf16.gmra.mxu0 %v3790
      %v3889 = vpop.f32.mrf.mxu0
      %v3890 = vadd.f32 0.0, %v3889
      %v3891 = vpop.f32.mrf.mxu0
      %v3892 = vadd.f32 0.0, %v3891
      %3893 = vdwg.mxu0
      %3894 = vmatpush.bf16.msra.mxu0 0
      %3895 = vmatpush.bf16.msra.mxu0 0
      %3896 = vmatpush.bf16.msra.mxu0 0
      %3897 = vmatpush.bf16.msra.mxu0 0
      %3898 = vmatpush.bf16.msra.mxu0 0
      %3899 = vmatpush.bf16.msra.mxu0 0
      %3900 = vmatpush.bf16.msra.mxu0 0
      %3901 = vmatpush.bf16.msra.mxu0 %v3780
      %3902 = vmatmul.bf16.gmra.mxu0 %v3794
      %v3903 = vpop.f32.mrf.mxu0
      %v3904 = vadd.f32 %v3890, %v3903
      %v3905 = vpop.f32.mrf.mxu0
      %v3906 = vadd.f32 %v3892, %v3905
      %3907 = vdwg.mxu0
      %v3908 = vmax.f32 %v3820, 0.0
      %v3909 = vmax.f32 %v3848, 0.0
      %v3910 = vmax.f32 %v3876, 0.0
      %v3911 = vmax.f32 %v3904, 0.0
      %v3912 = vmax.f32 %v3822, 0.0
      %v3913 = vmax.f32 %v3850, 0.0
      %v3914 = vmax.f32 %v3878, 0.0
      %v3915 = vmax.f32 %v3906, 0.0
      %v3916 = vadd.f32 %v3908, %v3912
      %v3917 = vrot.slane %v3916, 4
      %v3918 = vadd.f32 %v3916, %v3917
      %v3919 = vrot.slane %v3918, 2
      %v3920 = vadd.f32 %v3918, %v3919
      %v3921 = vrot.slane %v3920, 1
      %v3922 = vadd.f32 %v3920, %v3921
      %v3923 = vadd.f32 %v3909, %v3913
      %v3924 = vrot.slane %v3923, 4
      %v3925 = vadd.f32 %v3923, %v3924
      %v3926 = vrot.slane %v3925, 2
      %v3927 = vadd.f32 %v3925, %v3926
      %v3928 = vrot.slane %v3927, 1
      %v3929 = vadd.f32 %v3927, %v3928
      %v3930 = vadd.f32 %v3910, %v3914
      %v3931 = vrot.slane %v3930, 4
      %v3932 = vadd.f32 %v3930, %v3931
      %v3933 = vrot.slane %v3932, 2
      %v3934 = vadd.f32 %v3932, %v3933
      %v3935 = vrot.slane %v3934, 1
      %v3936 = vadd.f32 %v3934, %v3935
      %v3937 = vadd.f32 %v3911, %v3915
      %v3938 = vrot.slane %v3937, 4
      %v3939 = vadd.f32 %v3937, %v3938
      %v3940 = vrot.slane %v3939, 2
      %v3941 = vadd.f32 %v3939, %v3940
      %v3942 = vrot.slane %v3941, 1
      %v3943 = vadd.f32 %v3941, %v3942
      %v3944 = vmul.f32 %v3922, %v2104
      %v3945 = vmul.f32 %v3929, %v2104
      %v3946 = vmul.f32 %v3936, %v2104
      %v3947 = vmul.f32 %v3943, %v2104
      %v3952 = vrot.slane %v3945, 7
      %v3953 = vrot.slane %v3946, 6
      %v3954 = vrot.slane %v3947, 5
      %v3955 = vsel %vm2116, %v3944, %v3952
      %v3956 = vsel %vm2118, %v3953, %v3954
      %v3957 = vsel %vm2120, %v3955, %v3956
      %s3959 = scalar_lea.vmem [#allocation3], 1
      %3960 = vst.msk [vmem:[%s3959] ss:$2 sm:$0xf] %vm2126, %v3957
      %v3961 = vld [vmem:[#allocation3] sm:$0xff]
      %3963 = vst [vmem:[#allocation1] ss:$4 sm:$0xff] %v3961
      %v3964 = vld.sshfl [vmem:[#allocation1] sm:$0xff pattern:$0x73625140]
      %v3965 = vld.sshfl [vmem:[#allocation1 + $0x8] sm:$0xff pattern:$0x73625140]
      %v3966 = vld.sshfl [vmem:[#allocation1 + $0x10] sm:$0xff pattern:$0x73625140]
      %v3967 = vld.sshfl [vmem:[#allocation1 + $0x18] sm:$0xff pattern:$0x73625140]
      %v3972 = vpack.c.bf16 %v3964, %v3964
      %v3973 = vpack.c.bf16 %v3965, %v3965
      %v3974 = vpack.c.bf16 %v3966, %v3966
      %v3975 = vpack.c.bf16 %v3967, %v3967
      %v3976 = vld [vmem:[#allocation12] sm:$0x77]
      %v3977 = vld [vmem:[#allocation12 + $0x8] sm:$0x77]
      %v3978 = vld [vmem:[%s6] sm:$0x1]
      %v3980 = vperm.slane %v3978, 0
      %v3984 = vunpack.c.l.b16 %v3976
      %v3985 = vunpack.c.h.b16 %v3976
      %v3986 = vunpack.c.l.b16 %v3977
      %v3987 = vunpack.c.h.b16 %v3977
      %v3988 = vpack.c.b16 %v3984, %v3984
      %v3989 = vpack.c.b16 %v3985, %v3985
      %v3990 = vpack.c.b16 %v3986, %v3986
      %v3991 = vpack.c.b16 %v3987, %v3987
      %3996 = vmatpush.bf16.xpose.msra.mxu0 0
      %3997 = vmatpush.bf16.xpose.msra.mxu0 0
      %3998 = vmatpush.bf16.xpose.msra.mxu0 0
      %3999 = vmatpush.bf16.xpose.msra.mxu0 0
      %4000 = vmatpush.bf16.xpose.msra.mxu0 0
      %4001 = vmatpush.bf16.xpose.msra.mxu0 0
      %4002 = vmatpush.bf16.xpose.msra.mxu0 0
      %4003 = vmatpush.bf16.xpose.msra.mxu0 %v3988
      %4004 = vmatmul.bf16.gmra.mxu0 %v3972
      %v4005 = vpop.f32.mrf.mxu0
      %v4006 = vadd.f32 %v3980, %v4005
      %v4007 = vpop.f32.mrf.mxu0
      %4008 = vdwg.mxu0
      %4009 = vmatpush.bf16.xpose.msra.mxu0 0
      %4010 = vmatpush.bf16.xpose.msra.mxu0 0
      %4011 = vmatpush.bf16.xpose.msra.mxu0 0
      %4012 = vmatpush.bf16.xpose.msra.mxu0 0
      %4013 = vmatpush.bf16.xpose.msra.mxu0 0
      %4014 = vmatpush.bf16.xpose.msra.mxu0 0
      %4015 = vmatpush.bf16.xpose.msra.mxu0 0
      %4016 = vmatpush.bf16.xpose.msra.mxu0 %v3989
      %4017 = vmatmul.bf16.gmra.mxu0 %v3973
      %v4018 = vpop.f32.mrf.mxu0
      %v4019 = vadd.f32 %v4006, %v4018
      %v4020 = vpop.f32.mrf.mxu0
      %4021 = vdwg.mxu0
      %4022 = vmatpush.bf16.xpose.msra.mxu0 0
      %4023 = vmatpush.bf16.xpose.msra.mxu0 0
      %4024 = vmatpush.bf16.xpose.msra.mxu0 0
      %4025 = vmatpush.bf16.xpose.msra.mxu0 0
      %4026 = vmatpush.bf16.xpose.msra.mxu0 0
      %4027 = vmatpush.bf16.xpose.msra.mxu0 0
      %4028 = vmatpush.bf16.xpose.msra.mxu0 0
      %4029 = vmatpush.bf16.xpose.msra.mxu0 %v3990
      %4030 = vmatmul.bf16.gmra.mxu0 %v3974
      %v4031 = vpop.f32.mrf.mxu0
      %v4032 = vadd.f32 %v4019, %v4031
      %v4033 = vpop.f32.mrf.mxu0
      %4034 = vdwg.mxu0
      %4035 = vmatpush.bf16.xpose.msra.mxu0 0
      %4036 = vmatpush.bf16.xpose.msra.mxu0 0
      %4037 = vmatpush.bf16.xpose.msra.mxu0 0
      %4038 = vmatpush.bf16.xpose.msra.mxu0 0
      %4039 = vmatpush.bf16.xpose.msra.mxu0 0
      %4040 = vmatpush.bf16.xpose.msra.mxu0 0
      %4041 = vmatpush.bf16.xpose.msra.mxu0 0
      %4042 = vmatpush.bf16.xpose.msra.mxu0 %v3991
      %4043 = vmatmul.bf16.gmra.mxu0 %v3975
      %v4044 = vpop.f32.mrf.mxu0
      %v4045 = vadd.f32 %v4032, %v4044
      %v4046 = vpop.f32.mrf.mxu0
      %4047 = vdwg.mxu0
      %vm4048 = vcmask 33792
      %4049 = vst.msk [vmem:[#allocation13] sm:$0x3] %vm4048, %v4045
    $region57: #{tpu_custom_call.1} parent=1 // pred_fallthru
      _
    // Predicated region
    $region58: #{tpu_custom_call.1} parent=1 // pred_check
      _
    $region59: #{tpu_custom_call.1} parent=1 // pred_check_branch
      %4051 = sbr.rel (0) target = $region61
    $region60: #{tpu_custom_call.1} parent=1 // pred_region
      %4053 = vsyncadd [#allocation6], 0
      %s4055 = sshll.u32 [#allocation13], 4
      %s4056 = int_to_ptr.vmem [resolvable:$true] %s4055
      %s4057 = sshll.u32 %s7, 4
      %s4058 = int_to_ptr.hbm [resolvable:$true] %s4057
      %4060 = dma.vmem_to_hbm [thread:$0]  %s4056, 32, %s4058, [#allocation6]
    $region61: #{tpu_custom_call.1} parent=1 // pred_fallthru
      _
    // Predicated region
    $region62: #{tpu_custom_call.1} parent=1 // pred_check
      _
    $region63: #{tpu_custom_call.1} parent=1 // pred_check_branch
      %4062 = sbr.rel (0) target = $region65
    $region64: #{tpu_custom_call.1} parent=1 // pred_region
      %4064 = dma.done [#allocation6], 32
    $region65: #{tpu_custom_call.1} parent=1 // pred_fallthru
      _
    %4065 = vsyncpa [#allocation5], 1
    %4066 = vsyncpa [#allocation8], 1
    %4067 = vsyncpa [#allocation11], 1
    %4068 = vsyncpa [#allocation6], 1

</llo_original>
